<compile_context>
chip_gen: v6e
topology: v6e:2x2x1
jax: 0.10.0
libtpu: 0.0.40
codegen_flags: <defaults>
</compile_context>

<pallas_src>
import functools

import jax
import jax.numpy as jnp
from jax.experimental import pallas as pl
from jax.experimental.pallas import tpu as pltpu

# Conservative for v7x (64 MiB physical per TC); v5e/v6e can go higher.
_VMEM_LIMIT = 48 * 1024 * 1024


# ------------------------------ tiling helpers ------------------------------ #

def _choose_channel_block(C, bytes_per_channel, budget=8 << 20):
    """Largest channel block that is C or a multiple of 8 and fits the budget."""
    if C * bytes_per_channel <= budget:
        return C
    best = None
    c = 8
    while c <= C:
        if C % c == 0 and c * bytes_per_channel <= budget:
            best = c
        c += 8
    if best is not None:
        return best
    return 8 if C % 8 == 0 else C


def _choose_batch_block(B):
    """Batch several images per grid step (bigger MXU M) but keep >=2 steps
    when possible so v7x's two TensorCores both get work."""
    if B <= 1:
        return 1
    for bb in range(B // 2, 0, -1):
        if B % bb == 0:
            return bb
    return 1


# ----------------------------- Pallas kernels ------------------------------ #

def _time_mean_kernel(x_ref, o_ref, *, inv_t):
    # x_ref: (B, Cblk, T, HW) f32 -- lane-dense, whole T resident per step.
    # o_ref: (B, Cblk, HW) f32.  Pure streaming mean; no accumulator RMW.
    o_ref[...] = jnp.sum(x_ref[...], axis=2) * inv_t


def _store_with_halo(o_ref, y4):
    # Fused pad for the next layer: zero only the 4 halo strips, then store
    # the interior once (no full-block zero-fill pass).
    Bb, Ho, Wo, Cout = y4.shape
    Hop, Wop = Ho + 2, Wo + 2
    dt = o_ref.dtype
    o_ref[:, 0:1, :, :] = jnp.zeros((Bb, 1, Wop, Cout), dt)
    o_ref[:, Hop - 1:Hop, :, :] = jnp.zeros((Bb, 1, Wop, Cout), dt)
    o_ref[:, 1:Ho + 1, 0:1, :] = jnp.zeros((Bb, Ho, 1, Cout), dt)
    o_ref[:, 1:Ho + 1, Wop - 1:Wop, :] = jnp.zeros((Bb, Ho, 1, Cout), dt)
    o_ref[:, 1:Ho + 1, 1:Wo + 1, :] = y4.astype(dt)


def _conv_s2_kernel(x00_ref, x01_ref, x10_ref, x11_ref, w_ref, b_ref, o_ref):
    # Native stride-2 3x3 conv + folded-BN bias + ReLU over a batch block.
    # x{ph}{pw}_ref: (Bb, Ho+1, Wo+1, Cin) bf16 row/col parity phases of the
    #   zero-padded NHWC input: padded index (2i+kh, 2j+kw) lives in phase
    #   (kh%2, kw%2) at offset (i+kh//2, j+kw//2) -> only contiguous slices.
    # w_ref: (9, Cin, Cout) bf16 (BN scale folded).  b_ref: (1, Cout) f32.
    # o_ref: (Bb, Ho+2, Wo+2, Cout) bf16 -- zero halo = fused pad for conv2.
    Bb = x00_ref.shape[0]
    Cin = x00_ref.shape[-1]
    _, Hop, Wop, Cout = o_ref.shape
    Ho, Wo = Hop - 2, Wop - 2

    phases = ((x00_ref[...], x01_ref[...]), (x10_ref[...], x11_ref[...]))
    acc = jnp.zeros((Bb * Ho * Wo, Cout), jnp.float32)
    for kh in range(3):
        for kw in range(3):
            src = phases[kh % 2][kw % 2]
            r0, c0 = kh // 2, kw // 2
            patch = src[:, r0:r0 + Ho, c0:c0 + Wo, :].reshape(Bb * Ho * Wo, Cin)
            acc = acc + jnp.dot(patch, w_ref[kh * 3 + kw],
                                preferred_element_type=jnp.float32)
    y = jnp.maximum(acc + b_ref[...], 0.0)                  # BN bias + ReLU (f32)
    _store_with_halo(o_ref, y.reshape(Bb, Ho, Wo, Cout))


def _conv_s1_kernel(x_ref, w_ref, b_ref, o_ref):
    # Stride-1 3x3 conv + folded-BN bias + ReLU over a batch block.
    # x_ref: (Bb, Hp, Wp, Cin) bf16, already zero-padded by its producer.
    # o_ref: (Bb, Ho+2, Wo+2, Cout) bf16 with a zero halo (fused pad for conv3).
    Bb, Hp, Wp, Cin = x_ref.shape
    _, Hop, Wop, Cout = o_ref.shape
    Ho, Wo = Hop - 2, Wop - 2

    xp = x_ref[...]                                         # bf16, cast-free taps
    acc = jnp.zeros((Bb * Ho * Wo, Cout), jnp.float32)
    for kh in range(3):
        for kw in range(3):
            patch = xp[:, kh:kh + Ho, kw:kw + Wo, :].reshape(Bb * Ho * Wo, Cin)
            acc = acc + jnp.dot(patch, w_ref[kh * 3 + kw],
                                preferred_element_type=jnp.float32)
    y = jnp.maximum(acc + b_ref[...], 0.0)
    _store_with_halo(o_ref, y.reshape(Bb, Ho, Wo, Cout))


def _conv_gap_fc_kernel(x_ref, w_ref, b_ref, fcw_ref, fcb_ref, o_ref):
    # Fused: stride-1 3x3 conv + BN + ReLU -> adaptive_avg_pool2d(1) -> fc.
    # The layer-3 activation never leaves VMEM.  One batch block per grid step.
    # x_ref: (Bb, Hp, Wp, Cin) bf16 padded; w_ref: (9, Cin, Cout) bf16;
    # fcw_ref: (Cout, 3) f32; fcb_ref: (1, 3) f32; o_ref: (Bb, 1, 3) f32.
    Bb, Hp, Wp, Cin = x_ref.shape
    Cout = w_ref.shape[-1]
    Ho, Wo = Hp - 2, Wp - 2

    xp = x_ref[...]
    acc = jnp.zeros((Bb * Ho * Wo, Cout), jnp.float32)
    for kh in range(3):
        for kw in range(3):
            patch = xp[:, kh:kh + Ho, kw:kw + Wo, :].reshape(Bb * Ho * Wo, Cin)
            acc = acc + jnp.dot(patch, w_ref[kh * 3 + kw],
                                preferred_element_type=jnp.float32)
    y = jnp.maximum(acc + b_ref[...], 0.0)                   # (Bb*Ho*Wo, Cout) f32
    feat = jnp.mean(y.reshape(Bb, Ho * Wo, Cout), axis=1)    # GAP -> (Bb, Cout)
    out = (jnp.dot(feat, fcw_ref[...], preferred_element_type=jnp.float32)
           + fcb_ref[...])                                   # (Bb, 3)
    o_ref[...] = out.reshape(Bb, 1, -1)


# ------------------------------ pallas_call glue ---------------------------- #

def _time_mean(x):
    B, C, T, H, W = x.shape
    HW = H * W
    xr = x.reshape(B, C, T, HW)                  # free metadata reshape (lane-dense)
    cblk = _choose_channel_block(C, B * T * HW * 4)
    out = pl.pallas_call(
        functools.partial(_time_mean_kernel, inv_t=1.0 / T),
        out_shape=jax.ShapeDtypeStruct((B, C, HW), jnp.float32),
        grid=(C // cblk,),
        in_specs=[pl.BlockSpec((B, cblk, T, HW), lambda c: (0, c, 0, 0))],
        out_specs=pl.BlockSpec((B, cblk, HW), lambda c: (0, c, 0)),
        compiler_params=pltpu.CompilerParams(
            dimension_semantics=("parallel",), vmem_limit_bytes=_VMEM_LIMIT),
    )(xr)
    return out.reshape(B, C, H, W)


def _conv_s2(phases, w9, bias):
    x00, x01, x10, x11 = phases                   # (B, Ho+1, Wo+1, Cin) bf16 each
    B, Hph, Wph, Cin = x00.shape
    Cout = w9.shape[-1]
    Ho, Wo = Hph - 1, Wph - 1
    bblk = _choose_batch_block(B)
    xspec = pl.BlockSpec((bblk, Hph, Wph, Cin), lambda b: (b, 0, 0, 0))
    return pl.pallas_call(
        _conv_s2_kernel,
        out_shape=jax.ShapeDtypeStruct((B, Ho + 2, Wo + 2, Cout), jnp.bfloat16),
        grid=(B // bblk,),
        in_specs=[xspec, xspec, xspec, xspec,
                  pl.BlockSpec((9, Cin, Cout), lambda b: (0, 0, 0)),
                  pl.BlockSpec((1, Cout), lambda b: (0, 0))],
        out_specs=pl.BlockSpec((bblk, Ho + 2, Wo + 2, Cout),
                               lambda b: (b, 0, 0, 0)),
        compiler_params=pltpu.CompilerParams(
            dimension_semantics=("parallel",), vmem_limit_bytes=_VMEM_LIMIT),
    )(x00, x01, x10, x11, w9, bias)


def _conv_s1(x_pad, w9, bias):
    B, Hp, Wp, Cin = x_pad.shape
    Cout = w9.shape[-1]
    Ho, Wo = Hp - 2, Wp - 2
    bblk = _choose_batch_block(B)
    return pl.pallas_call(
        _conv_s1_kernel,
        out_shape=jax.ShapeDtypeStruct((B, Ho + 2, Wo + 2, Cout), jnp.bfloat16),
        grid=(B // bblk,),
        in_specs=[pl.BlockSpec((bblk, Hp, Wp, Cin), lambda b: (b, 0, 0, 0)),
                  pl.BlockSpec((9, Cin, Cout), lambda b: (0, 0, 0)),
                  pl.BlockSpec((1, Cout), lambda b: (0, 0))],
        out_specs=pl.BlockSpec((bblk, Ho + 2, Wo + 2, Cout),
                               lambda b: (b, 0, 0, 0)),
        compiler_params=pltpu.CompilerParams(
            dimension_semantics=("parallel",), vmem_limit_bytes=_VMEM_LIMIT),
    )(x_pad, w9, bias)


def _conv_gap_fc(x_pad, w9, bias, fc_w, fc_b):
    B, Hp, Wp, Cin = x_pad.shape
    Cout = w9.shape[-1]
    nclass = fc_w.shape[-1]
    bblk = _choose_batch_block(B)
    out = pl.pallas_call(
        _conv_gap_fc_kernel,
        out_shape=jax.ShapeDtypeStruct((B, 1, nclass), jnp.float32),
        grid=(B // bblk,),
        in_specs=[pl.BlockSpec((bblk, Hp, Wp, Cin), lambda b: (b, 0, 0, 0)),
                  pl.BlockSpec((9, Cin, Cout), lambda b: (0, 0, 0)),
                  pl.BlockSpec((1, Cout), lambda b: (0, 0)),
                  pl.BlockSpec((Cout, nclass), lambda b: (0, 0)),
                  pl.BlockSpec((1, nclass), lambda b: (0, 0))],
        out_specs=pl.BlockSpec((bblk, 1, nclass), lambda b: (b, 0, 0)),
        compiler_params=pltpu.CompilerParams(
            dimension_semantics=("parallel",), vmem_limit_bytes=_VMEM_LIMIT),
    )(x_pad, w9, bias, fc_w, fc_b)
    return out.reshape(B, nclass)


def discriminator_forward(x, params):
    # x: (B, C, T, H, W) float32
    B, C, T, H, W = x.shape
    assert H % 2 == 0 and W % 2 == 0, "stride-2 conv path assumes even H, W"

    tm = _time_mean(x)                                   # (B, C, H, W) f32, Pallas

    # Small fused XLA pre-pass over the T-reduced tensor (T x smaller than the
    # input): NCHW->NHWC relayout, pad=1 halo for conv1, single bf16 cast, and
    # the 2x2 row/col parity split that lets conv1 run stride 2 natively with
    # only contiguous slices inside the kernel.  The 4 phases partition the
    # padded tensor exactly, so total HBM bytes == one padded bf16 NHWC copy.
    t1 = jnp.pad(jnp.transpose(tm, (0, 2, 3, 1)),
                 ((0, 0), (1, 1), (1, 1), (0, 0))).astype(jnp.bfloat16)
    phases = (t1[:, 0::2, 0::2, :], t1[:, 0::2, 1::2, :],
              t1[:, 1::2, 0::2, :], t1[:, 1::2, 1::2, :])

    y1 = _conv_s2(phases, params["w1"], params["b1"])    # (B, H/2+2, W/2+2, 2C) bf16
    y2 = _conv_s1(y1, params["w2"], params["b2"])        # (B, H/2+2, W/2+2, 2C) bf16
    out = _conv_gap_fc(y2, params["w3"], params["b3"],
                       params["fc_w"], params["fc_b"])   # (B, 3) f32
    return out


# ------------------------- deterministic parameters ------------------------ #

def init_params(key, channel):
    def conv_block(k, cin, cout):
        kw_, kg, kb, km, kv = jax.random.split(k, 5)
        w = 0.1 * jax.random.normal(kw_, (cout, cin, 3, 3), jnp.float32)   # torch OIHW
        w9 = jnp.transpose(w, (2, 3, 1, 0)).reshape(9, cin, cout)          # (9, Cin, Cout)
        # Inference-mode BatchNorm folded into the conv: scale -> weights, shift -> bias.
        gamma = 1.0 + 0.1 * jax.random.normal(kg, (cout,), jnp.float32)
        beta = 0.1 * jax.random.normal(kb, (cout,), jnp.float32)
        rmean = 0.1 * jax.random.normal(km, (cout,), jnp.float32)
        rvar = 1.0 + 0.1 * jnp.abs(jax.random.normal(kv, (cout,), jnp.float32))
        scale = gamma * jax.lax.rsqrt(rvar + 1e-5)
        bias = beta - rmean * scale
        w_folded = (w9 * scale[None, None, :]).astype(jnp.bfloat16)        # bf16 MXU operand
        return w_folded, bias.reshape(1, cout)

    c = channel
    k1, k2, k3, k4, k5 = jax.random.split(key, 5)
    p = {}
    p["w1"], p["b1"] = conv_block(k1, c, 2 * c)
    p["w2"], p["b2"] = conv_block(k2, 2 * c, 2 * c)
    p["w3"], p["b3"] = conv_block(k3, 2 * c, c)
    # fc == nn.Linear(in_features, 3); the original module hard-codes
    # Linear(2048, 3) (channel == 2048).  Small test: in_features == channel.
    fc_w = 0.1 * jax.random.normal(k4, (3, c), jnp.float32)                # torch (out, in)
    p["fc_w"] = fc_w.T                                                     # (C, 3)
    p["fc_b"] = 0.1 * jax.random.normal(k5, (1, 3), jnp.float32)
    return p


if __name__ == "__main__":
    key = jax.random.PRNGKey(0)
    kx, kp = jax.random.split(key)
    B, C, T, H, W = 2, 4, 4, 16, 16
    x = jax.random.normal(kx, (B, C, T, H, W), jnp.float32)
    params = init_params(kp, C)

    out = jax.jit(discriminator_forward)(x, params)
    jax.block_until_ready(out)
    assert out.shape == (B, 3) and out.dtype == jnp.float32
    assert bool(jnp.all(jnp.isfinite(out)))
    print("KERNEL_OK")
</pallas_src>

<mosaic_0001>
module attributes {stable_mosaic.version = 11 : i64} {
  func.func @_time_mean_kernel(%arg0: i32, %arg1: memref<2x4x4x256xf32, #tpu.memory_space<vmem>>, %arg2: memref<2x4x256xf32, #tpu.memory_space<vmem>>) attributes {dimension_semantics = [#tpu.dimension_semantics<parallel>], iteration_bounds = array<i64: 1>, scalar_prefetch = 0 : i64, scratch_operands = 0 : i64, tpu.core_type = #tpu.core_type<tc>, window_params = [{transform_indices = @transform_0, window_bounds = array<i64: 2, 4, 4, 256>}, {transform_indices = @transform_1, window_bounds = array<i64: 2, 4, 256>}]} {
    %c0 = arith.constant 0 : index
    %c0_0 = arith.constant 0 : index
    %c0_1 = arith.constant 0 : index
    %c0_2 = arith.constant 0 : index
    %0 = vector.load %arg1[%c0, %c0_0, %c0_1, %c0_2] : memref<2x4x4x256xf32, #tpu.memory_space<vmem>>, vector<2x4x4x256xf32>
    %cst = arith.constant dense<0.000000e+00> : vector<2x4x256xf32>
    %1 = vector.multi_reduction <add>, %0, %cst [2] : vector<2x4x4x256xf32> to vector<2x4x256xf32>
    %cst_3 = arith.constant 2.500000e-01 : f32
    %2 = vector.broadcast %cst_3 : f32 to vector<2x4x256xf32>
    %3 = arith.mulf %1, %2 : vector<2x4x256xf32>
    %c0_4 = arith.constant 0 : index
    %c0_5 = arith.constant 0 : index
    %c0_6 = arith.constant 0 : index
    %4 = vector.load %arg2[%c0_4, %c0_5, %c0_6] : memref<2x4x256xf32, #tpu.memory_space<vmem>>, vector<2x4x256xf32>
    tpu.vector_store %arg2[%c0_4, %c0_5, %c0_6], %3 {strides = array<i32>} : memref<2x4x256xf32, #tpu.memory_space<vmem>>, vector<2x4x256xf32>,
    return
  }
  func.func @transform_0(%arg0: i32) -> (i32, i32, i32, i32) {
    %c0_i32 = arith.constant 0 : i32
    %c0_i32_0 = arith.constant 0 : i32
    %c0_i32_1 = arith.constant 0 : i32
    %c0_i32_2 = arith.constant 0 : i32
    return %c0_i32, %arg0, %c0_i32_0, %c0_i32_1 : i32, i32, i32, i32
  }
  func.func @transform_1(%arg0: i32) -> (i32, i32, i32) {
    %c0_i32 = arith.constant 0 : i32
    %c0_i32_0 = arith.constant 0 : i32
    %c0_i32_1 = arith.constant 0 : i32
    return %c0_i32, %arg0, %c0_i32_0 : i32, i32, i32
  }
}

module attributes {stable_mosaic.version = 11 : i64} {
  func.func @_conv_s1_kernel(%arg0: i32, %arg1: memref<1x10x10x8xbf16, #tpu.memory_space<vmem>>, %arg2: memref<9x8x8xbf16, #tpu.memory_space<vmem>>, %arg3: memref<1x8xf32, #tpu.memory_space<vmem>>, %arg4: memref<1x10x10x8xbf16, #tpu.memory_space<vmem>>) attributes {dimension_semantics = [#tpu.dimension_semantics<parallel>], iteration_bounds = array<i64: 2>, scalar_prefetch = 0 : i64, scratch_operands = 0 : i64, tpu.core_type = #tpu.core_type<tc>, window_params = [{transform_indices = @transform_0, window_bounds = array<i64: 1, 10, 10, 8>}, {pipeline_mode = #tpu.pipeline_mode<synchronous>, transform_indices = @transform_1, window_bounds = array<i64: 9, 8, 8>}, {pipeline_mode = #tpu.pipeline_mode<synchronous>, transform_indices = @transform_2, window_bounds = array<i64: 1, 8>}, {transform_indices = @transform_3, window_bounds = array<i64: 1, 10, 10, 8>}]} {
    %c0 = arith.constant 0 : index
    %c0_0 = arith.constant 0 : index
    %c0_1 = arith.constant 0 : index
    %c0_2 = arith.constant 0 : index
    %0 = vector.load %arg1[%c0, %c0_0, %c0_1, %c0_2] : memref<1x10x10x8xbf16, #tpu.memory_space<vmem>>, vector<1x10x10x8xbf16>
    %cst = arith.constant 0.000000e+00 : f32
    %1 = vector.broadcast %cst : f32 to vector<64x8xf32>
    %2 = vector.extract_strided_slice %0 {offsets = [0, 0, 0, 0], sizes = [1, 8, 8, 8], strides = [1, 1, 1, 1]} : vector<1x10x10x8xbf16> to vector<1x8x8x8xbf16>
    %3 = vector.shape_cast %2 : vector<1x8x8x8xbf16> to vector<64x8xbf16>
    %c0_3 = arith.constant 0 : index
    %c0_4 = arith.constant 0 : index
    %c0_5 = arith.constant 0 : index
    %4 = vector.load %arg2[%c0_3, %c0_4, %c0_5] : memref<9x8x8xbf16, #tpu.memory_space<vmem>>, vector<1x8x8xbf16>
    %5 = vector.shape_cast %4 : vector<1x8x8xbf16> to vector<8x8xbf16>
    %cst_6 = arith.constant dense<0.000000e+00> : vector<64x8xf32>
    %6 = tpu.matmul %3, %5, %cst_6 {dimension_numbers = #tpu.dot_dimension_numbers<[1], [0], [0], [1], [0, 0, 1, 1], [], []>} : vector<64x8xbf16>, vector<8x8xbf16>, vector<64x8xf32> -> vector<64x8xf32>
    %7 = arith.addf %1, %6 : vector<64x8xf32>
    %8 = vector.extract_strided_slice %0 {offsets = [0, 0, 1, 0], sizes = [1, 8, 8, 8], strides = [1, 1, 1, 1]} : vector<1x10x10x8xbf16> to vector<1x8x8x8xbf16>
    %9 = vector.shape_cast %8 : vector<1x8x8x8xbf16> to vector<64x8xbf16>
    %c1 = arith.constant 1 : index
    %c0_7 = arith.constant 0 : index
    %c0_8 = arith.constant 0 : index
    %10 = vector.load %arg2[%c1, %c0_7, %c0_8] : memref<9x8x8xbf16, #tpu.memory_space<vmem>>, vector<1x8x8xbf16>
    %11 = vector.shape_cast %10 : vector<1x8x8xbf16> to vector<8x8xbf16>
    %cst_9 = arith.constant dense<0.000000e+00> : vector<64x8xf32>
    %12 = tpu.matmul %9, %11, %cst_9 {dimension_numbers = #tpu.dot_dimension_numbers<[1], [0], [0], [1], [0, 0, 1, 1], [], []>} : vector<64x8xbf16>, vector<8x8xbf16>, vector<64x8xf32> -> vector<64x8xf32>
    %13 = arith.addf %7, %12 : vector<64x8xf32>
    %14 = vector.extract_strided_slice %0 {offsets = [0, 0, 2, 0], sizes = [1, 8, 8, 8], strides = [1, 1, 1, 1]} : vector<1x10x10x8xbf16> to vector<1x8x8x8xbf16>
    %15 = vector.shape_cast %14 : vector<1x8x8x8xbf16> to vector<64x8xbf16>
    %c2 = arith.constant 2 : index
    %c0_10 = arith.constant 0 : index
    %c0_11 = arith.constant 0 : index
    %16 = vector.load %arg2[%c2, %c0_10, %c0_11] : memref<9x8x8xbf16, #tpu.memory_space<vmem>>, vector<1x8x8xbf16>
    %17 = vector.shape_cast %16 : vector<1x8x8xbf16> to vector<8x8xbf16>
    %cst_12 = arith.constant dense<0.000000e+00> : vector<64x8xf32>
    %18 = tpu.matmul %15, %17, %cst_12 {dimension_numbers = #tpu.dot_dimension_numbers<[1], [0], [0], [1], [0, 0, 1, 1], [], []>} : vector<64x8xbf16>, vector<8x8xbf16>, vector<64x8xf32> -> vector<64x8xf32>
    %19 = arith.addf %13, %18 : vector<64x8xf32>
    %20 = vector.extract_strided_slice %0 {offsets = [0, 1, 0, 0], sizes = [1, 8, 8, 8], strides = [1, 1, 1, 1]} : vector<1x10x10x8xbf16> to vector<1x8x8x8xbf16>
    %21 = vector.shape_cast %20 : vector<1x8x8x8xbf16> to vector<64x8xbf16>
    %c3 = arith.constant 3 : index
    %c0_13 = arith.constant 0 : index
    %c0_14 = arith.constant 0 : index
    %22 = vector.load %arg2[%c3, %c0_13, %c0_14] : memref<9x8x8xbf16, #tpu.memory_space<vmem>>, vector<1x8x8xbf16>
    %23 = vector.shape_cast %22 : vector<1x8x8xbf16> to vector<8x8xbf16>
    %cst_15 = arith.constant dense<0.000000e+00> : vector<64x8xf32>
    %24 = tpu.matmul %21, %23, %cst_15 {dimension_numbers = #tpu.dot_dimension_numbers<[1], [0], [0], [1], [0, 0, 1, 1], [], []>} : vector<64x8xbf16>, vector<8x8xbf16>, vector<64x8xf32> -> vector<64x8xf32>
    %25 = arith.addf %19, %24 : vector<64x8xf32>
    %26 = vector.extract_strided_slice %0 {offsets = [0, 1, 1, 0], sizes = [1, 8, 8, 8], strides = [1, 1, 1, 1]} : vector<1x10x10x8xbf16> to vector<1x8x8x8xbf16>
    %27 = vector.shape_cast %26 : vector<1x8x8x8xbf16> to vector<64x8xbf16>
    %c4 = arith.constant 4 : index
    %c0_16 = arith.constant 0 : index
    %c0_17 = arith.constant 0 : index
    %28 = vector.load %arg2[%c4, %c0_16, %c0_17] : memref<9x8x8xbf16, #tpu.memory_space<vmem>>, vector<1x8x8xbf16>
    %29 = vector.shape_cast %28 : vector<1x8x8xbf16> to vector<8x8xbf16>
    %cst_18 = arith.constant dense<0.000000e+00> : vector<64x8xf32>
    %30 = tpu.matmul %27, %29, %cst_18 {dimension_numbers = #tpu.dot_dimension_numbers<[1], [0], [0], [1], [0, 0, 1, 1], [], []>} : vector<64x8xbf16>, vector<8x8xbf16>, vector<64x8xf32> -> vector<64x8xf32>
    %31 = arith.addf %25, %30 : vector<64x8xf32>
    %32 = vector.extract_strided_slice %0 {offsets = [0, 1, 2, 0], sizes = [1, 8, 8, 8], strides = [1, 1, 1, 1]} : vector<1x10x10x8xbf16> to vector<1x8x8x8xbf16>
    %33 = vector.shape_cast %32 : vector<1x8x8x8xbf16> to vector<64x8xbf16>
    %c5 = arith.constant 5 : index
    %c0_19 = arith.constant 0 : index
    %c0_20 = arith.constant 0 : index
    %34 = vector.load %arg2[%c5, %c0_19, %c0_20] : memref<9x8x8xbf16, #tpu.memory_space<vmem>>, vector<1x8x8xbf16>
    %35 = vector.shape_cast %34 : vector<1x8x8xbf16> to vector<8x8xbf16>
    %cst_21 = arith.constant dense<0.000000e+00> : vector<64x8xf32>
    %36 = tpu.matmul %33, %35, %cst_21 {dimension_numbers = #tpu.dot_dimension_numbers<[1], [0], [0], [1], [0, 0, 1, 1], [], []>} : vector<64x8xbf16>, vector<8x8xbf16>, vector<64x8xf32> -> vector<64x8xf32>
    %37 = arith.addf %31, %36 : vector<64x8xf32>
    %38 = vector.extract_strided_slice %0 {offsets = [0, 2, 0, 0], sizes = [1, 8, 8, 8], strides = [1, 1, 1, 1]} : vector<1x10x10x8xbf16> to vector<1x8x8x8xbf16>
    %39 = vector.shape_cast %38 : vector<1x8x8x8xbf16> to vector<64x8xbf16>
    %c6 = arith.constant 6 : index
    %c0_22 = arith.constant 0 : index
    %c0_23 = arith.constant 0 : index
    %40 = vector.load %arg2[%c6, %c0_22, %c0_23] : memref<9x8x8xbf16, #tpu.memory_space<vmem>>, vector<1x8x8xbf16>
    %41 = vector.shape_cast %40 : vector<1x8x8xbf16> to vector<8x8xbf16>
    %cst_24 = arith.constant dense<0.000000e+00> : vector<64x8xf32>
    %42 = tpu.matmul %39, %41, %cst_24 {dimension_numbers = #tpu.dot_dimension_numbers<[1], [0], [0], [1], [0, 0, 1, 1], [], []>} : vector<64x8xbf16>, vector<8x8xbf16>, vector<64x8xf32> -> vector<64x8xf32>
    %43 = arith.addf %37, %42 : vector<64x8xf32>
    %44 = vector.extract_strided_slice %0 {offsets = [0, 2, 1, 0], sizes = [1, 8, 8, 8], strides = [1, 1, 1, 1]} : vector<1x10x10x8xbf16> to vector<1x8x8x8xbf16>
    %45 = vector.shape_cast %44 : vector<1x8x8x8xbf16> to vector<64x8xbf16>
    %c7 = arith.constant 7 : index
    %c0_25 = arith.constant 0 : index
    %c0_26 = arith.constant 0 : index
    %46 = vector.load %arg2[%c7, %c0_25, %c0_26] : memref<9x8x8xbf16, #tpu.memory_space<vmem>>, vector<1x8x8xbf16>
    %47 = vector.shape_cast %46 : vector<1x8x8xbf16> to vector<8x8xbf16>
    %cst_27 = arith.constant dense<0.000000e+00> : vector<64x8xf32>
    %48 = tpu.matmul %45, %47, %cst_27 {dimension_numbers = #tpu.dot_dimension_numbers<[1], [0], [0], [1], [0, 0, 1, 1], [], []>} : vector<64x8xbf16>, vector<8x8xbf16>, vector<64x8xf32> -> vector<64x8xf32>
    %49 = arith.addf %43, %48 : vector<64x8xf32>
    %50 = vector.extract_strided_slice %0 {offsets = [0, 2, 2, 0], sizes = [1, 8, 8, 8], strides = [1, 1, 1, 1]} : vector<1x10x10x8xbf16> to vector<1x8x8x8xbf16>
    %51 = vector.shape_cast %50 : vector<1x8x8x8xbf16> to vector<64x8xbf16>
    %c8 = arith.constant 8 : index
    %c0_28 = arith.constant 0 : index
    %c0_29 = arith.constant 0 : index
    %52 = vector.load %arg2[%c8, %c0_28, %c0_29] : memref<9x8x8xbf16, #tpu.memory_space<vmem>>, vector<1x8x8xbf16>
    %53 = vector.shape_cast %52 : vector<1x8x8xbf16> to vector<8x8xbf16>
    %cst_30 = arith.constant dense<0.000000e+00> : vector<64x8xf32>
    %54 = tpu.matmul %51, %53, %cst_30 {dimension_numbers = #tpu.dot_dimension_numbers<[1], [0], [0], [1], [0, 0, 1, 1], [], []>} : vector<64x8xbf16>, vector<8x8xbf16>, vector<64x8xf32> -> vector<64x8xf32>
    %55 = arith.addf %49, %54 : vector<64x8xf32>
    %c0_31 = arith.constant 0 : index
    %c0_32 = arith.constant 0 : index
    %56 = vector.load %arg3[%c0_31, %c0_32] : memref<1x8xf32, #tpu.memory_space<vmem>>, vector<1x8xf32>
    %57 = vector.broadcast %56 : vector<1x8xf32> to vector<64x8xf32>
    %58 = arith.addf %55, %57 : vector<64x8xf32>
    %cst_33 = arith.constant 0.000000e+00 : f32
    %59 = vector.broadcast %cst_33 : f32 to vector<64x8xf32>
    %60 = arith.maximumf %58, %59 : vector<64x8xf32>
    %61 = vector.shape_cast %60 : vector<64x8xf32> to vector<1x8x8x8xf32>
    %cst_34 = arith.constant 0.000000e+00 : bf16
    %62 = vector.broadcast %cst_34 : bf16 to vector<1x1x10x8xbf16>
    %c0_35 = arith.constant 0 : index
    %c0_36 = arith.constant 0 : index
    %c0_37 = arith.constant 0 : index
    %c0_38 = arith.constant 0 : index
    %63 = vector.load %arg4[%c0_35, %c0_36, %c0_37, %c0_38] : memref<1x10x10x8xbf16, #tpu.memory_space<vmem>>, vector<1x1x10x8xbf16>
    tpu.vector_store %arg4[%c0_35, %c0_36, %c0_37, %c0_38], %62 {strides = array<i32>} : memref<1x10x10x8xbf16, #tpu.memory_space<vmem>>, vector<1x1x10x8xbf16>,
    %cst_39 = arith.constant 0.000000e+00 : bf16
    %64 = vector.broadcast %cst_39 : bf16 to vector<1x1x10x8xbf16>
    %c0_40 = arith.constant 0 : index
    %c9 = arith.constant 9 : index
    %c0_41 = arith.constant 0 : index
    %c0_42 = arith.constant 0 : index
    %65 = vector.load %arg4[%c0_40, %c9, %c0_41, %c0_42] : memref<1x10x10x8xbf16, #tpu.memory_space<vmem>>, vector<1x1x10x8xbf16>
    tpu.vector_store %arg4[%c0_40, %c9, %c0_41, %c0_42], %64 {strides = array<i32>} : memref<1x10x10x8xbf16, #tpu.memory_space<vmem>>, vector<1x1x10x8xbf16>,
    %cst_43 = arith.constant 0.000000e+00 : bf16
    %66 = vector.broadcast %cst_43 : bf16 to vector<1x8x1x8xbf16>
    %c0_44 = arith.constant 0 : index
    %c1_45 = arith.constant 1 : index
    %c0_46 = arith.constant 0 : index
    %c0_47 = arith.constant 0 : index
    %67 = vector.load %arg4[%c0_44, %c1_45, %c0_46, %c0_47] : memref<1x10x10x8xbf16, #tpu.memory_space<vmem>>, vector<1x8x1x8xbf16>
    tpu.vector_store %arg4[%c0_44, %c1_45, %c0_46, %c0_47], %66 {strides = array<i32>} : memref<1x10x10x8xbf16, #tpu.memory_space<vmem>>, vector<1x8x1x8xbf16>,
    %cst_48 = arith.constant 0.000000e+00 : bf16
    %68 = vector.broadcast %cst_48 : bf16 to vector<1x8x1x8xbf16>
    %c0_49 = arith.constant 0 : index
    %c1_50 = arith.constant 1 : index
    %c9_51 = arith.constant 9 : index
    %c0_52 = arith.constant 0 : index
    %69 = vector.load %arg4[%c0_49, %c1_50, %c9_51, %c0_52] : memref<1x10x10x8xbf16, #tpu.memory_space<vmem>>, vector<1x8x1x8xbf16>
    tpu.vector_store %arg4[%c0_49, %c1_50, %c9_51, %c0_52], %68 {strides = array<i32>} : memref<1x10x10x8xbf16, #tpu.memory_space<vmem>>, vector<1x8x1x8xbf16>,
    %70 = arith.truncf %61 : vector<1x8x8x8xf32> to vector<1x8x8x8xbf16>
    %c0_53 = arith.constant 0 : index
    %c1_54 = arith.constant 1 : index
    %c1_55 = arith.constant 1 : index
    %c0_56 = arith.constant 0 : index
    %71 = vector.load %arg4[%c0_53, %c1_54, %c1_55, %c0_56] : memref<1x10x10x8xbf16, #tpu.memory_space<vmem>>, vector<1x8x8x8xbf16>
    tpu.vector_store %arg4[%c0_53, %c1_54, %c1_55, %c0_56], %70 {strides = array<i32>} : memref<1x10x10x8xbf16, #tpu.memory_space<vmem>>, vector<1x8x8x8xbf16>,
    return
  }
  func.func @transform_0(%arg0: i32) -> (i32, i32, i32, i32) {
    %c0_i32 = arith.constant 0 : i32
    %c0_i32_0 = arith.constant 0 : i32
    %c0_i32_1 = arith.constant 0 : i32
    %c0_i32_2 = arith.constant 0 : i32
    return %arg0, %c0_i32, %c0_i32_0, %c0_i32_1 : i32, i32, i32, i32
  }
  func.func @transform_1(%arg0: i32) -> (i32, i32, i32) {
    %c0_i32 = arith.constant 0 : i32
    %c0_i32_0 = arith.constant 0 : i32
    %c0_i32_1 = arith.constant 0 : i32
    %c0_i32_2 = arith.constant 0 : i32
    return %c0_i32, %c0_i32_0, %c0_i32_1 : i32, i32, i32
  }
  func.func @transform_2(%arg0: i32) -> (i32, i32) {
    %c0_i32 = arith.constant 0 : i32
    %c0_i32_0 = arith.constant 0 : i32
    %c0_i32_1 = arith.constant 0 : i32
    return %c0_i32, %c0_i32_0 : i32, i32
  }
  func.func @transform_3(%arg0: i32) -> (i32, i32, i32, i32) {
    %c0_i32 = arith.constant 0 : i32
    %c0_i32_0 = arith.constant 0 : i32
    %c0_i32_1 = arith.constant 0 : i32
    %c0_i32_2 = arith.constant 0 : i32
    return %arg0, %c0_i32, %c0_i32_0, %c0_i32_1 : i32, i32, i32, i32
  }
}

module attributes {stable_mosaic.version = 11 : i64} {
  func.func @_conv_s2_kernel(%arg0: i32, %arg1: memref<1x9x9x4xbf16, #tpu.memory_space<vmem>>, %arg2: memref<1x9x9x4xbf16, #tpu.memory_space<vmem>>, %arg3: memref<1x9x9x4xbf16, #tpu.memory_space<vmem>>, %arg4: memref<1x9x9x4xbf16, #tpu.memory_space<vmem>>, %arg5: memref<9x4x8xbf16, #tpu.memory_space<vmem>>, %arg6: memref<1x8xf32, #tpu.memory_space<vmem>>, %arg7: memref<1x10x10x8xbf16, #tpu.memory_space<vmem>>) attributes {dimension_semantics = [#tpu.dimension_semantics<parallel>], iteration_bounds = array<i64: 2>, scalar_prefetch = 0 : i64, scratch_operands = 0 : i64, tpu.core_type = #tpu.core_type<tc>, window_params = [{transform_indices = @transform_0, window_bounds = array<i64: 1, 9, 9, 4>}, {transform_indices = @transform_1, window_bounds = array<i64: 1, 9, 9, 4>}, {transform_indices = @transform_2, window_bounds = array<i64: 1, 9, 9, 4>}, {transform_indices = @transform_3, window_bounds = array<i64: 1, 9, 9, 4>}, {pipeline_mode = #tpu.pipeline_mode<synchronous>, transform_indices = @transform_4, window_bounds = array<i64: 9, 4, 8>}, {pipeline_mode = #tpu.pipeline_mode<synchronous>, transform_indices = @transform_5, window_bounds = array<i64: 1, 8>}, {transform_indices = @transform_6, window_bounds = array<i64: 1, 10, 10, 8>}]} {
    %c0 = arith.constant 0 : index
    %c0_0 = arith.constant 0 : index
    %c0_1 = arith.constant 0 : index
    %c0_2 = arith.constant 0 : index
    %0 = vector.load %arg1[%c0, %c0_0, %c0_1, %c0_2] : memref<1x9x9x4xbf16, #tpu.memory_space<vmem>>, vector<1x9x9x4xbf16>
    %c0_3 = arith.constant 0 : index
    %c0_4 = arith.constant 0 : index
    %c0_5 = arith.constant 0 : index
    %c0_6 = arith.constant 0 : index
    %1 = vector.load %arg2[%c0_3, %c0_4, %c0_5, %c0_6] : memref<1x9x9x4xbf16, #tpu.memory_space<vmem>>, vector<1x9x9x4xbf16>
    %c0_7 = arith.constant 0 : index
    %c0_8 = arith.constant 0 : index
    %c0_9 = arith.constant 0 : index
    %c0_10 = arith.constant 0 : index
    %2 = vector.load %arg3[%c0_7, %c0_8, %c0_9, %c0_10] : memref<1x9x9x4xbf16, #tpu.memory_space<vmem>>, vector<1x9x9x4xbf16>
    %c0_11 = arith.constant 0 : index
    %c0_12 = arith.constant 0 : index
    %c0_13 = arith.constant 0 : index
    %c0_14 = arith.constant 0 : index
    %3 = vector.load %arg4[%c0_11, %c0_12, %c0_13, %c0_14] : memref<1x9x9x4xbf16, #tpu.memory_space<vmem>>, vector<1x9x9x4xbf16>
    %cst = arith.constant 0.000000e+00 : f32
    %4 = vector.broadcast %cst : f32 to vector<64x8xf32>
    %5 = vector.extract_strided_slice %0 {offsets = [0, 0, 0, 0], sizes = [1, 8, 8, 4], strides = [1, 1, 1, 1]} : vector<1x9x9x4xbf16> to vector<1x8x8x4xbf16>
    %6 = vector.shape_cast %5 : vector<1x8x8x4xbf16> to vector<64x4xbf16>
    %c0_15 = arith.constant 0 : index
    %c0_16 = arith.constant 0 : index
    %c0_17 = arith.constant 0 : index
    %7 = vector.load %arg5[%c0_15, %c0_16, %c0_17] : memref<9x4x8xbf16, #tpu.memory_space<vmem>>, vector<1x4x8xbf16>
    %8 = vector.shape_cast %7 : vector<1x4x8xbf16> to vector<4x8xbf16>
    %cst_18 = arith.constant dense<0.000000e+00> : vector<64x8xf32>
    %9 = tpu.matmul %6, %8, %cst_18 {dimension_numbers = #tpu.dot_dimension_numbers<[1], [0], [0], [1], [0, 0, 1, 1], [], []>} : vector<64x4xbf16>, vector<4x8xbf16>, vector<64x8xf32> -> vector<64x8xf32>
    %10 = arith.addf %4, %9 : vector<64x8xf32>
    %11 = vector.extract_strided_slice %1 {offsets = [0, 0, 0, 0], sizes = [1, 8, 8, 4], strides = [1, 1, 1, 1]} : vector<1x9x9x4xbf16> to vector<1x8x8x4xbf16>
    %12 = vector.shape_cast %11 : vector<1x8x8x4xbf16> to vector<64x4xbf16>
    %c1 = arith.constant 1 : index
    %c0_19 = arith.constant 0 : index
    %c0_20 = arith.constant 0 : index
    %13 = vector.load %arg5[%c1, %c0_19, %c0_20] : memref<9x4x8xbf16, #tpu.memory_space<vmem>>, vector<1x4x8xbf16>
    %14 = vector.shape_cast %13 : vector<1x4x8xbf16> to vector<4x8xbf16>
    %cst_21 = arith.constant dense<0.000000e+00> : vector<64x8xf32>
    %15 = tpu.matmul %12, %14, %cst_21 {dimension_numbers = #tpu.dot_dimension_numbers<[1], [0], [0], [1], [0, 0, 1, 1], [], []>} : vector<64x4xbf16>, vector<4x8xbf16>, vector<64x8xf32> -> vector<64x8xf32>
    %16 = arith.addf %10, %15 : vector<64x8xf32>
    %17 = vector.extract_strided_slice %0 {offsets = [0, 0, 1, 0], sizes = [1, 8, 8, 4], strides = [1, 1, 1, 1]} : vector<1x9x9x4xbf16> to vector<1x8x8x4xbf16>
    %18 = vector.shape_cast %17 : vector<1x8x8x4xbf16> to vector<64x4xbf16>
    %c2 = arith.constant 2 : index
    %c0_22 = arith.constant 0 : index
    %c0_23 = arith.constant 0 : index
    %19 = vector.load %arg5[%c2, %c0_22, %c0_23] : memref<9x4x8xbf16, #tpu.memory_space<vmem>>, vector<1x4x8xbf16>
    %20 = vector.shape_cast %19 : vector<1x4x8xbf16> to vector<4x8xbf16>
    %cst_24 = arith.constant dense<0.000000e+00> : vector<64x8xf32>
    %21 = tpu.matmul %18, %20, %cst_24 {dimension_numbers = #tpu.dot_dimension_numbers<[1], [0], [0], [1], [0, 0, 1, 1], [], []>} : vector<64x4xbf16>, vector<4x8xbf16>, vector<64x8xf32> -> vector<64x8xf32>
    %22 = arith.addf %16, %21 : vector<64x8xf32>
    %23 = vector.extract_strided_slice %2 {offsets = [0, 0, 0, 0], sizes = [1, 8, 8, 4], strides = [1, 1, 1, 1]} : vector<1x9x9x4xbf16> to vector<1x8x8x4xbf16>
    %24 = vector.shape_cast %23 : vector<1x8x8x4xbf16> to vector<64x4xbf16>
    %c3 = arith.constant 3 : index
    %c0_25 = arith.constant 0 : index
    %c0_26 = arith.constant 0 : index
    %25 = vector.load %arg5[%c3, %c0_25, %c0_26] : memref<9x4x8xbf16, #tpu.memory_space<vmem>>, vector<1x4x8xbf16>
    %26 = vector.shape_cast %25 : vector<1x4x8xbf16> to vector<4x8xbf16>
    %cst_27 = arith.constant dense<0.000000e+00> : vector<64x8xf32>
    %27 = tpu.matmul %24, %26, %cst_27 {dimension_numbers = #tpu.dot_dimension_numbers<[1], [0], [0], [1], [0, 0, 1, 1], [], []>} : vector<64x4xbf16>, vector<4x8xbf16>, vector<64x8xf32> -> vector<64x8xf32>
    %28 = arith.addf %22, %27 : vector<64x8xf32>
    %29 = vector.extract_strided_slice %3 {offsets = [0, 0, 0, 0], sizes = [1, 8, 8, 4], strides = [1, 1, 1, 1]} : vector<1x9x9x4xbf16> to vector<1x8x8x4xbf16>
    %30 = vector.shape_cast %29 : vector<1x8x8x4xbf16> to vector<64x4xbf16>
    %c4 = arith.constant 4 : index
    %c0_28 = arith.constant 0 : index
    %c0_29 = arith.constant 0 : index
    %31 = vector.load %arg5[%c4, %c0_28, %c0_29] : memref<9x4x8xbf16, #tpu.memory_space<vmem>>, vector<1x4x8xbf16>
    %32 = vector.shape_cast %31 : vector<1x4x8xbf16> to vector<4x8xbf16>
    %cst_30 = arith.constant dense<0.000000e+00> : vector<64x8xf32>
    %33 = tpu.matmul %30, %32, %cst_30 {dimension_numbers = #tpu.dot_dimension_numbers<[1], [0], [0], [1], [0, 0, 1, 1], [], []>} : vector<64x4xbf16>, vector<4x8xbf16>, vector<64x8xf32> -> vector<64x8xf32>
    %34 = arith.addf %28, %33 : vector<64x8xf32>
    %35 = vector.extract_strided_slice %2 {offsets = [0, 0, 1, 0], sizes = [1, 8, 8, 4], strides = [1, 1, 1, 1]} : vector<1x9x9x4xbf16> to vector<1x8x8x4xbf16>
    %36 = vector.shape_cast %35 : vector<1x8x8x4xbf16> to vector<64x4xbf16>
    %c5 = arith.constant 5 : index
    %c0_31 = arith.constant 0 : index
    %c0_32 = arith.constant 0 : index
    %37 = vector.load %arg5[%c5, %c0_31, %c0_32] : memref<9x4x8xbf16, #tpu.memory_space<vmem>>, vector<1x4x8xbf16>
    %38 = vector.shape_cast %37 : vector<1x4x8xbf16> to vector<4x8xbf16>
    %cst_33 = arith.constant dense<0.000000e+00> : vector<64x8xf32>
    %39 = tpu.matmul %36, %38, %cst_33 {dimension_numbers = #tpu.dot_dimension_numbers<[1], [0], [0], [1], [0, 0, 1, 1], [], []>} : vector<64x4xbf16>, vector<4x8xbf16>, vector<64x8xf32> -> vector<64x8xf32>
    %40 = arith.addf %34, %39 : vector<64x8xf32>
    %41 = vector.extract_strided_slice %0 {offsets = [0, 1, 0, 0], sizes = [1, 8, 8, 4], strides = [1, 1, 1, 1]} : vector<1x9x9x4xbf16> to vector<1x8x8x4xbf16>
    %42 = vector.shape_cast %41 : vector<1x8x8x4xbf16> to vector<64x4xbf16>
    %c6 = arith.constant 6 : index
    %c0_34 = arith.constant 0 : index
    %c0_35 = arith.constant 0 : index
    %43 = vector.load %arg5[%c6, %c0_34, %c0_35] : memref<9x4x8xbf16, #tpu.memory_space<vmem>>, vector<1x4x8xbf16>
    %44 = vector.shape_cast %43 : vector<1x4x8xbf16> to vector<4x8xbf16>
    %cst_36 = arith.constant dense<0.000000e+00> : vector<64x8xf32>
    %45 = tpu.matmul %42, %44, %cst_36 {dimension_numbers = #tpu.dot_dimension_numbers<[1], [0], [0], [1], [0, 0, 1, 1], [], []>} : vector<64x4xbf16>, vector<4x8xbf16>, vector<64x8xf32> -> vector<64x8xf32>
    %46 = arith.addf %40, %45 : vector<64x8xf32>
    %47 = vector.extract_strided_slice %1 {offsets = [0, 1, 0, 0], sizes = [1, 8, 8, 4], strides = [1, 1, 1, 1]} : vector<1x9x9x4xbf16> to vector<1x8x8x4xbf16>
    %48 = vector.shape_cast %47 : vector<1x8x8x4xbf16> to vector<64x4xbf16>
    %c7 = arith.constant 7 : index
    %c0_37 = arith.constant 0 : index
    %c0_38 = arith.constant 0 : index
    %49 = vector.load %arg5[%c7, %c0_37, %c0_38] : memref<9x4x8xbf16, #tpu.memory_space<vmem>>, vector<1x4x8xbf16>
    %50 = vector.shape_cast %49 : vector<1x4x8xbf16> to vector<4x8xbf16>
    %cst_39 = arith.constant dense<0.000000e+00> : vector<64x8xf32>
    %51 = tpu.matmul %48, %50, %cst_39 {dimension_numbers = #tpu.dot_dimension_numbers<[1], [0], [0], [1], [0, 0, 1, 1], [], []>} : vector<64x4xbf16>, vector<4x8xbf16>, vector<64x8xf32> -> vector<64x8xf32>
    %52 = arith.addf %46, %51 : vector<64x8xf32>
    %53 = vector.extract_strided_slice %0 {offsets = [0, 1, 1, 0], sizes = [1, 8, 8, 4], strides = [1, 1, 1, 1]} : vector<1x9x9x4xbf16> to vector<1x8x8x4xbf16>
    %54 = vector.shape_cast %53 : vector<1x8x8x4xbf16> to vector<64x4xbf16>
    %c8 = arith.constant 8 : index
    %c0_40 = arith.constant 0 : index
    %c0_41 = arith.constant 0 : index
    %55 = vector.load %arg5[%c8, %c0_40, %c0_41] : memref<9x4x8xbf16, #tpu.memory_space<vmem>>, vector<1x4x8xbf16>
    %56 = vector.shape_cast %55 : vector<1x4x8xbf16> to vector<4x8xbf16>
    %cst_42 = arith.constant dense<0.000000e+00> : vector<64x8xf32>
    %57 = tpu.matmul %54, %56, %cst_42 {dimension_numbers = #tpu.dot_dimension_numbers<[1], [0], [0], [1], [0, 0, 1, 1], [], []>} : vector<64x4xbf16>, vector<4x8xbf16>, vector<64x8xf32> -> vector<64x8xf32>
    %58 = arith.addf %52, %57 : vector<64x8xf32>
    %c0_43 = arith.constant 0 : index
    %c0_44 = arith.constant 0 : index
    %59 = vector.load %arg6[%c0_43, %c0_44] : memref<1x8xf32, #tpu.memory_space<vmem>>, vector<1x8xf32>
    %60 = vector.broadcast %59 : vector<1x8xf32> to vector<64x8xf32>
    %61 = arith.addf %58, %60 : vector<64x8xf32>
    %cst_45 = arith.constant 0.000000e+00 : f32
    %62 = vector.broadcast %cst_45 : f32 to vector<64x8xf32>
    %63 = arith.maximumf %61, %62 : vector<64x8xf32>
    %64 = vector.shape_cast %63 : vector<64x8xf32> to vector<1x8x8x8xf32>
    %cst_46 = arith.constant 0.000000e+00 : bf16
    %65 = vector.broadcast %cst_46 : bf16 to vector<1x1x10x8xbf16>
    %c0_47 = arith.constant 0 : index
    %c0_48 = arith.constant 0 : index
    %c0_49 = arith.constant 0 : index
    %c0_50 = arith.constant 0 : index
    %66 = vector.load %arg7[%c0_47, %c0_48, %c0_49, %c0_50] : memref<1x10x10x8xbf16, #tpu.memory_space<vmem>>, vector<1x1x10x8xbf16>
    tpu.vector_store %arg7[%c0_47, %c0_48, %c0_49, %c0_50], %65 {strides = array<i32>} : memref<1x10x10x8xbf16, #tpu.memory_space<vmem>>, vector<1x1x10x8xbf16>,
    %cst_51 = arith.constant 0.000000e+00 : bf16
    %67 = vector.broadcast %cst_51 : bf16 to vector<1x1x10x8xbf16>
    %c0_52 = arith.constant 0 : index
    %c9 = arith.constant 9 : index
    %c0_53 = arith.constant 0 : index
    %c0_54 = arith.constant 0 : index
    %68 = vector.load %arg7[%c0_52, %c9, %c0_53, %c0_54] : memref<1x10x10x8xbf16, #tpu.memory_space<vmem>>, vector<1x1x10x8xbf16>
    tpu.vector_store %arg7[%c0_52, %c9, %c0_53, %c0_54], %67 {strides = array<i32>} : memref<1x10x10x8xbf16, #tpu.memory_space<vmem>>, vector<1x1x10x8xbf16>,
    %cst_55 = arith.constant 0.000000e+00 : bf16
    %69 = vector.broadcast %cst_55 : bf16 to vector<1x8x1x8xbf16>
    %c0_56 = arith.constant 0 : index
    %c1_57 = arith.constant 1 : index
    %c0_58 = arith.constant 0 : index
    %c0_59 = arith.constant 0 : index
    %70 = vector.load %arg7[%c0_56, %c1_57, %c0_58, %c0_59] : memref<1x10x10x8xbf16, #tpu.memory_space<vmem>>, vector<1x8x1x8xbf16>
    tpu.vector_store %arg7[%c0_56, %c1_57, %c0_58, %c0_59], %69 {strides = array<i32>} : memref<1x10x10x8xbf16, #tpu.memory_space<vmem>>, vector<1x8x1x8xbf16>,
    %cst_60 = arith.constant 0.000000e+00 : bf16
    %71 = vector.broadcast %cst_60 : bf16 to vector<1x8x1x8xbf16>
    %c0_61 = arith.constant 0 : index
    %c1_62 = arith.constant 1 : index
    %c9_63 = arith.constant 9 : index
    %c0_64 = arith.constant 0 : index
    %72 = vector.load %arg7[%c0_61, %c1_62, %c9_63, %c0_64] : memref<1x10x10x8xbf16, #tpu.memory_space<vmem>>, vector<1x8x1x8xbf16>
    tpu.vector_store %arg7[%c0_61, %c1_62, %c9_63, %c0_64], %71 {strides = array<i32>} : memref<1x10x10x8xbf16, #tpu.memory_space<vmem>>, vector<1x8x1x8xbf16>,
    %73 = arith.truncf %64 : vector<1x8x8x8xf32> to vector<1x8x8x8xbf16>
    %c0_65 = arith.constant 0 : index
    %c1_66 = arith.constant 1 : index
    %c1_67 = arith.constant 1 : index
    %c0_68 = arith.constant 0 : index
    %74 = vector.load %arg7[%c0_65, %c1_66, %c1_67, %c0_68] : memref<1x10x10x8xbf16, #tpu.memory_space<vmem>>, vector<1x8x8x8xbf16>
    tpu.vector_store %arg7[%c0_65, %c1_66, %c1_67, %c0_68], %73 {strides = array<i32>} : memref<1x10x10x8xbf16, #tpu.memory_space<vmem>>, vector<1x8x8x8xbf16>,
    return
  }
  func.func @transform_0(%arg0: i32) -> (i32, i32, i32, i32) {
    %c0_i32 = arith.constant 0 : i32
    %c0_i32_0 = arith.constant 0 : i32
    %c0_i32_1 = arith.constant 0 : i32
    %c0_i32_2 = arith.constant 0 : i32
    return %arg0, %c0_i32, %c0_i32_0, %c0_i32_1 : i32, i32, i32, i32
  }
  func.func @transform_1(%arg0: i32) -> (i32, i32, i32, i32) {
    %c0_i32 = arith.constant 0 : i32
    %c0_i32_0 = arith.constant 0 : i32
    %c0_i32_1 = arith.constant 0 : i32
    %c0_i32_2 = arith.constant 0 : i32
    return %arg0, %c0_i32, %c0_i32_0, %c0_i32_1 : i32, i32, i32, i32
  }
  func.func @transform_2(%arg0: i32) -> (i32, i32, i32, i32) {
    %c0_i32 = arith.constant 0 : i32
    %c0_i32_0 = arith.constant 0 : i32
    %c0_i32_1 = arith.constant 0 : i32
    %c0_i32_2 = arith.constant 0 : i32
    return %arg0, %c0_i32, %c0_i32_0, %c0_i32_1 : i32, i32, i32, i32
  }
  func.func @transform_3(%arg0: i32) -> (i32, i32, i32, i32) {
    %c0_i32 = arith.constant 0 : i32
    %c0_i32_0 = arith.constant 0 : i32
    %c0_i32_1 = arith.constant 0 : i32
    %c0_i32_2 = arith.constant 0 : i32
    return %arg0, %c0_i32, %c0_i32_0, %c0_i32_1 : i32, i32, i32, i32
  }
  func.func @transform_4(%arg0: i32) -> (i32, i32, i32) {
    %c0_i32 = arith.constant 0 : i32
    %c0_i32_0 = arith.constant 0 : i32
    %c0_i32_1 = arith.constant 0 : i32
    %c0_i32_2 = arith.constant 0 : i32
    return %c0_i32, %c0_i32_0, %c0_i32_1 : i32, i32, i32
  }
  func.func @transform_5(%arg0: i32) -> (i32, i32) {
    %c0_i32 = arith.constant 0 : i32
    %c0_i32_0 = arith.constant 0 : i32
    %c0_i32_1 = arith.constant 0 : i32
    return %c0_i32, %c0_i32_0 : i32, i32
  }
  func.func @transform_6(%arg0: i32) -> (i32, i32, i32, i32) {
    %c0_i32 = arith.constant 0 : i32
    %c0_i32_0 = arith.constant 0 : i32
    %c0_i32_1 = arith.constant 0 : i32
    %c0_i32_2 = arith.constant 0 : i32
    return %arg0, %c0_i32, %c0_i32_0, %c0_i32_1 : i32, i32, i32, i32
  }
}

module attributes {stable_mosaic.version = 11 : i64} {
  func.func @_conv_gap_fc_kernel(%arg0: i32, %arg1: memref<1x10x10x8xbf16, #tpu.memory_space<vmem>>, %arg2: memref<9x8x4xbf16, #tpu.memory_space<vmem>>, %arg3: memref<1x4xf32, #tpu.memory_space<vmem>>, %arg4: memref<4x3xf32, #tpu.memory_space<vmem>>, %arg5: memref<1x3xf32, #tpu.memory_space<vmem>>, %arg6: memref<1x1x3xf32, #tpu.memory_space<vmem>>) attributes {dimension_semantics = [#tpu.dimension_semantics<parallel>], iteration_bounds = array<i64: 2>, scalar_prefetch = 0 : i64, scratch_operands = 0 : i64, tpu.core_type = #tpu.core_type<tc>, window_params = [{transform_indices = @transform_0, window_bounds = array<i64: 1, 10, 10, 8>}, {pipeline_mode = #tpu.pipeline_mode<synchronous>, transform_indices = @transform_1, window_bounds = array<i64: 9, 8, 4>}, {pipeline_mode = #tpu.pipeline_mode<synchronous>, transform_indices = @transform_2, window_bounds = array<i64: 1, 4>}, {pipeline_mode = #tpu.pipeline_mode<synchronous>, transform_indices = @transform_3, window_bounds = array<i64: 4, 3>}, {pipeline_mode = #tpu.pipeline_mode<synchronous>, transform_indices = @transform_4, window_bounds = array<i64: 1, 3>}, {transform_indices = @transform_5, window_bounds = array<i64: 1, 1, 3>}]} {
    %c0 = arith.constant 0 : index
    %c0_0 = arith.constant 0 : index
    %c0_1 = arith.constant 0 : index
    %c0_2 = arith.constant 0 : index
    %0 = vector.load %arg1[%c0, %c0_0, %c0_1, %c0_2] : memref<1x10x10x8xbf16, #tpu.memory_space<vmem>>, vector<1x10x10x8xbf16>
    %cst = arith.constant 0.000000e+00 : f32
    %1 = vector.broadcast %cst : f32 to vector<64x4xf32>
    %2 = vector.extract_strided_slice %0 {offsets = [0, 0, 0, 0], sizes = [1, 8, 8, 8], strides = [1, 1, 1, 1]} : vector<1x10x10x8xbf16> to vector<1x8x8x8xbf16>
    %3 = vector.shape_cast %2 : vector<1x8x8x8xbf16> to vector<64x8xbf16>
    %c0_3 = arith.constant 0 : index
    %c0_4 = arith.constant 0 : index
    %c0_5 = arith.constant 0 : index
    %4 = vector.load %arg2[%c0_3, %c0_4, %c0_5] : memref<9x8x4xbf16, #tpu.memory_space<vmem>>, vector<1x8x4xbf16>
    %5 = vector.shape_cast %4 : vector<1x8x4xbf16> to vector<8x4xbf16>
    %cst_6 = arith.constant dense<0.000000e+00> : vector<64x4xf32>
    %6 = tpu.matmul %3, %5, %cst_6 {dimension_numbers = #tpu.dot_dimension_numbers<[1], [0], [0], [1], [0, 0, 1, 1], [], []>} : vector<64x8xbf16>, vector<8x4xbf16>, vector<64x4xf32> -> vector<64x4xf32>
    %7 = arith.addf %1, %6 : vector<64x4xf32>
    %8 = vector.extract_strided_slice %0 {offsets = [0, 0, 1, 0], sizes = [1, 8, 8, 8], strides = [1, 1, 1, 1]} : vector<1x10x10x8xbf16> to vector<1x8x8x8xbf16>
    %9 = vector.shape_cast %8 : vector<1x8x8x8xbf16> to vector<64x8xbf16>
    %c1 = arith.constant 1 : index
    %c0_7 = arith.constant 0 : index
    %c0_8 = arith.constant 0 : index
    %10 = vector.load %arg2[%c1, %c0_7, %c0_8] : memref<9x8x4xbf16, #tpu.memory_space<vmem>>, vector<1x8x4xbf16>
    %11 = vector.shape_cast %10 : vector<1x8x4xbf16> to vector<8x4xbf16>
    %cst_9 = arith.constant dense<0.000000e+00> : vector<64x4xf32>
    %12 = tpu.matmul %9, %11, %cst_9 {dimension_numbers = #tpu.dot_dimension_numbers<[1], [0], [0], [1], [0, 0, 1, 1], [], []>} : vector<64x8xbf16>, vector<8x4xbf16>, vector<64x4xf32> -> vector<64x4xf32>
    %13 = arith.addf %7, %12 : vector<64x4xf32>
    %14 = vector.extract_strided_slice %0 {offsets = [0, 0, 2, 0], sizes = [1, 8, 8, 8], strides = [1, 1, 1, 1]} : vector<1x10x10x8xbf16> to vector<1x8x8x8xbf16>
    %15 = vector.shape_cast %14 : vector<1x8x8x8xbf16> to vector<64x8xbf16>
    %c2 = arith.constant 2 : index
    %c0_10 = arith.constant 0 : index
    %c0_11 = arith.constant 0 : index
    %16 = vector.load %arg2[%c2, %c0_10, %c0_11] : memref<9x8x4xbf16, #tpu.memory_space<vmem>>, vector<1x8x4xbf16>
    %17 = vector.shape_cast %16 : vector<1x8x4xbf16> to vector<8x4xbf16>
    %cst_12 = arith.constant dense<0.000000e+00> : vector<64x4xf32>
    %18 = tpu.matmul %15, %17, %cst_12 {dimension_numbers = #tpu.dot_dimension_numbers<[1], [0], [0], [1], [0, 0, 1, 1], [], []>} : vector<64x8xbf16>, vector<8x4xbf16>, vector<64x4xf32> -> vector<64x4xf32>
    %19 = arith.addf %13, %18 : vector<64x4xf32>
    %20 = vector.extract_strided_slice %0 {offsets = [0, 1, 0, 0], sizes = [1, 8, 8, 8], strides = [1, 1, 1, 1]} : vector<1x10x10x8xbf16> to vector<1x8x8x8xbf16>
    %21 = vector.shape_cast %20 : vector<1x8x8x8xbf16> to vector<64x8xbf16>
    %c3 = arith.constant 3 : index
    %c0_13 = arith.constant 0 : index
    %c0_14 = arith.constant 0 : index
    %22 = vector.load %arg2[%c3, %c0_13, %c0_14] : memref<9x8x4xbf16, #tpu.memory_space<vmem>>, vector<1x8x4xbf16>
    %23 = vector.shape_cast %22 : vector<1x8x4xbf16> to vector<8x4xbf16>
    %cst_15 = arith.constant dense<0.000000e+00> : vector<64x4xf32>
    %24 = tpu.matmul %21, %23, %cst_15 {dimension_numbers = #tpu.dot_dimension_numbers<[1], [0], [0], [1], [0, 0, 1, 1], [], []>} : vector<64x8xbf16>, vector<8x4xbf16>, vector<64x4xf32> -> vector<64x4xf32>
    %25 = arith.addf %19, %24 : vector<64x4xf32>
    %26 = vector.extract_strided_slice %0 {offsets = [0, 1, 1, 0], sizes = [1, 8, 8, 8], strides = [1, 1, 1, 1]} : vector<1x10x10x8xbf16> to vector<1x8x8x8xbf16>
    %27 = vector.shape_cast %26 : vector<1x8x8x8xbf16> to vector<64x8xbf16>
    %c4 = arith.constant 4 : index
    %c0_16 = arith.constant 0 : index
    %c0_17 = arith.constant 0 : index
    %28 = vector.load %arg2[%c4, %c0_16, %c0_17] : memref<9x8x4xbf16, #tpu.memory_space<vmem>>, vector<1x8x4xbf16>
    %29 = vector.shape_cast %28 : vector<1x8x4xbf16> to vector<8x4xbf16>
    %cst_18 = arith.constant dense<0.000000e+00> : vector<64x4xf32>
    %30 = tpu.matmul %27, %29, %cst_18 {dimension_numbers = #tpu.dot_dimension_numbers<[1], [0], [0], [1], [0, 0, 1, 1], [], []>} : vector<64x8xbf16>, vector<8x4xbf16>, vector<64x4xf32> -> vector<64x4xf32>
    %31 = arith.addf %25, %30 : vector<64x4xf32>
    %32 = vector.extract_strided_slice %0 {offsets = [0, 1, 2, 0], sizes = [1, 8, 8, 8], strides = [1, 1, 1, 1]} : vector<1x10x10x8xbf16> to vector<1x8x8x8xbf16>
    %33 = vector.shape_cast %32 : vector<1x8x8x8xbf16> to vector<64x8xbf16>
    %c5 = arith.constant 5 : index
    %c0_19 = arith.constant 0 : index
    %c0_20 = arith.constant 0 : index
    %34 = vector.load %arg2[%c5, %c0_19, %c0_20] : memref<9x8x4xbf16, #tpu.memory_space<vmem>>, vector<1x8x4xbf16>
    %35 = vector.shape_cast %34 : vector<1x8x4xbf16> to vector<8x4xbf16>
    %cst_21 = arith.constant dense<0.000000e+00> : vector<64x4xf32>
    %36 = tpu.matmul %33, %35, %cst_21 {dimension_numbers = #tpu.dot_dimension_numbers<[1], [0], [0], [1], [0, 0, 1, 1], [], []>} : vector<64x8xbf16>, vector<8x4xbf16>, vector<64x4xf32> -> vector<64x4xf32>
    %37 = arith.addf %31, %36 : vector<64x4xf32>
    %38 = vector.extract_strided_slice %0 {offsets = [0, 2, 0, 0], sizes = [1, 8, 8, 8], strides = [1, 1, 1, 1]} : vector<1x10x10x8xbf16> to vector<1x8x8x8xbf16>
    %39 = vector.shape_cast %38 : vector<1x8x8x8xbf16> to vector<64x8xbf16>
    %c6 = arith.constant 6 : index
    %c0_22 = arith.constant 0 : index
    %c0_23 = arith.constant 0 : index
    %40 = vector.load %arg2[%c6, %c0_22, %c0_23] : memref<9x8x4xbf16, #tpu.memory_space<vmem>>, vector<1x8x4xbf16>
    %41 = vector.shape_cast %40 : vector<1x8x4xbf16> to vector<8x4xbf16>
    %cst_24 = arith.constant dense<0.000000e+00> : vector<64x4xf32>
    %42 = tpu.matmul %39, %41, %cst_24 {dimension_numbers = #tpu.dot_dimension_numbers<[1], [0], [0], [1], [0, 0, 1, 1], [], []>} : vector<64x8xbf16>, vector<8x4xbf16>, vector<64x4xf32> -> vector<64x4xf32>
    %43 = arith.addf %37, %42 : vector<64x4xf32>
    %44 = vector.extract_strided_slice %0 {offsets = [0, 2, 1, 0], sizes = [1, 8, 8, 8], strides = [1, 1, 1, 1]} : vector<1x10x10x8xbf16> to vector<1x8x8x8xbf16>
    %45 = vector.shape_cast %44 : vector<1x8x8x8xbf16> to vector<64x8xbf16>
    %c7 = arith.constant 7 : index
    %c0_25 = arith.constant 0 : index
    %c0_26 = arith.constant 0 : index
    %46 = vector.load %arg2[%c7, %c0_25, %c0_26] : memref<9x8x4xbf16, #tpu.memory_space<vmem>>, vector<1x8x4xbf16>
    %47 = vector.shape_cast %46 : vector<1x8x4xbf16> to vector<8x4xbf16>
    %cst_27 = arith.constant dense<0.000000e+00> : vector<64x4xf32>
    %48 = tpu.matmul %45, %47, %cst_27 {dimension_numbers = #tpu.dot_dimension_numbers<[1], [0], [0], [1], [0, 0, 1, 1], [], []>} : vector<64x8xbf16>, vector<8x4xbf16>, vector<64x4xf32> -> vector<64x4xf32>
    %49 = arith.addf %43, %48 : vector<64x4xf32>
    %50 = vector.extract_strided_slice %0 {offsets = [0, 2, 2, 0], sizes = [1, 8, 8, 8], strides = [1, 1, 1, 1]} : vector<1x10x10x8xbf16> to vector<1x8x8x8xbf16>
    %51 = vector.shape_cast %50 : vector<1x8x8x8xbf16> to vector<64x8xbf16>
    %c8 = arith.constant 8 : index
    %c0_28 = arith.constant 0 : index
    %c0_29 = arith.constant 0 : index
    %52 = vector.load %arg2[%c8, %c0_28, %c0_29] : memref<9x8x4xbf16, #tpu.memory_space<vmem>>, vector<1x8x4xbf16>
    %53 = vector.shape_cast %52 : vector<1x8x4xbf16> to vector<8x4xbf16>
    %cst_30 = arith.constant dense<0.000000e+00> : vector<64x4xf32>
    %54 = tpu.matmul %51, %53, %cst_30 {dimension_numbers = #tpu.dot_dimension_numbers<[1], [0], [0], [1], [0, 0, 1, 1], [], []>} : vector<64x8xbf16>, vector<8x4xbf16>, vector<64x4xf32> -> vector<64x4xf32>
    %55 = arith.addf %49, %54 : vector<64x4xf32>
    %c0_31 = arith.constant 0 : index
    %c0_32 = arith.constant 0 : index
    %56 = vector.load %arg3[%c0_31, %c0_32] : memref<1x4xf32, #tpu.memory_space<vmem>>, vector<1x4xf32>
    %57 = vector.broadcast %56 : vector<1x4xf32> to vector<64x4xf32>
    %58 = arith.addf %55, %57 : vector<64x4xf32>
    %cst_33 = arith.constant 0.000000e+00 : f32
    %59 = vector.broadcast %cst_33 : f32 to vector<64x4xf32>
    %60 = arith.maximumf %58, %59 : vector<64x4xf32>
    %61 = vector.shape_cast %60 : vector<64x4xf32> to vector<1x64x4xf32>
    %cst_34 = arith.constant dense<0.000000e+00> : vector<1x4xf32>
    %62 = vector.multi_reduction <add>, %61, %cst_34 [1] : vector<1x64x4xf32> to vector<1x4xf32>
    %cst_35 = arith.constant 6.400000e+01 : f32
    %63 = vector.broadcast %cst_35 : f32 to vector<1x4xf32>
    %64 = arith.divf %62, %63 : vector<1x4xf32>
    %c0_36 = arith.constant 0 : index
    %c0_37 = arith.constant 0 : index
    %65 = vector.load %arg4[%c0_36, %c0_37] : memref<4x3xf32, #tpu.memory_space<vmem>>, vector<4x3xf32>
    %cst_38 = arith.constant dense<0.000000e+00> : vector<1x3xf32>
    %66 = tpu.matmul %64, %65, %cst_38 {dimension_numbers = #tpu.dot_dimension_numbers<[1], [0], [0], [1], [0, 0, 1, 1], [], []>} : vector<1x4xf32>, vector<4x3xf32>, vector<1x3xf32> -> vector<1x3xf32>
    %c0_39 = arith.constant 0 : index
    %c0_40 = arith.constant 0 : index
    %67 = vector.load %arg5[%c0_39, %c0_40] : memref<1x3xf32, #tpu.memory_space<vmem>>, vector<1x3xf32>
    %68 = arith.addf %66, %67 : vector<1x3xf32>
    %69 = vector.shape_cast %68 : vector<1x3xf32> to vector<1x1x3xf32>
    %c0_41 = arith.constant 0 : index
    %c0_42 = arith.constant 0 : index
    %c0_43 = arith.constant 0 : index
    %70 = vector.load %arg6[%c0_41, %c0_42, %c0_43] : memref<1x1x3xf32, #tpu.memory_space<vmem>>, vector<1x1x3xf32>
    tpu.vector_store %arg6[%c0_41, %c0_42, %c0_43], %69 {strides = array<i32>} : memref<1x1x3xf32, #tpu.memory_space<vmem>>, vector<1x1x3xf32>,
    return
  }
  func.func @transform_0(%arg0: i32) -> (i32, i32, i32, i32) {
    %c0_i32 = arith.constant 0 : i32
    %c0_i32_0 = arith.constant 0 : i32
    %c0_i32_1 = arith.constant 0 : i32
    %c0_i32_2 = arith.constant 0 : i32
    return %arg0, %c0_i32, %c0_i32_0, %c0_i32_1 : i32, i32, i32, i32
  }
  func.func @transform_1(%arg0: i32) -> (i32, i32, i32) {
    %c0_i32 = arith.constant 0 : i32
    %c0_i32_0 = arith.constant 0 : i32
    %c0_i32_1 = arith.constant 0 : i32
    %c0_i32_2 = arith.constant 0 : i32
    return %c0_i32, %c0_i32_0, %c0_i32_1 : i32, i32, i32
  }
  func.func @transform_2(%arg0: i32) -> (i32, i32) {
    %c0_i32 = arith.constant 0 : i32
    %c0_i32_0 = arith.constant 0 : i32
    %c0_i32_1 = arith.constant 0 : i32
    return %c0_i32, %c0_i32_0 : i32, i32
  }
  func.func @transform_3(%arg0: i32) -> (i32, i32) {
    %c0_i32 = arith.constant 0 : i32
    %c0_i32_0 = arith.constant 0 : i32
    %c0_i32_1 = arith.constant 0 : i32
    return %c0_i32, %c0_i32_0 : i32, i32
  }
  func.func @transform_4(%arg0: i32) -> (i32, i32) {
    %c0_i32 = arith.constant 0 : i32
    %c0_i32_0 = arith.constant 0 : i32
    %c0_i32_1 = arith.constant 0 : i32
    return %c0_i32, %c0_i32_0 : i32, i32
  }
  func.func @transform_5(%arg0: i32) -> (i32, i32, i32) {
    %c0_i32 = arith.constant 0 : i32
    %c0_i32_0 = arith.constant 0 : i32
    %c0_i32_1 = arith.constant 0 : i32
    return %arg0, %c0_i32, %c0_i32_0 : i32, i32, i32
  }
}

</mosaic_0001>

<llo_original>
// kernel: discriminator_forward.4
$region0: #{discriminator_forward.4}
  #allocation0 [shape = 'u32[]', space=smem, size = 0x4, offset = 0x4, fixed_abs, tag = 'smem constant byte address 0x4 - core index']
  #allocation1 [shape = 'u32[144,128]{1,0:T(1,128)}', space=vmem, size = 0x12000, scoped, tag = 'internal scratch']
  %s0 = inlined_call_operand.vmem [shape: f32[2,4,4,256], index: 0, kind: input, shape index: {}]
  %s1 = inlined_call_operand.vmem [shape: f32[2,4,256], index: 1, kind: output, shape index: {}]
  %s2 = sld [smem:[#allocation0]]
  $region14: #{discriminator_forward.4} parent=0
    _
  %s4 = ssub.s32 1, %s2
  %s5 = scalar_select 0, %s4, %s2
  // Predicated region
  $region2: #{discriminator_forward.4} parent=0 // pred_check
    _
  $region3: #{discriminator_forward.4} parent=0 // pred_check_branch
    %7 = sbr.rel (0) target = $region5
  $region4: #{discriminator_forward.4} parent=0 // pred_region
    _
  $region5: #{discriminator_forward.4} parent=0 // pred_fallthru
    _
  %v8 = vld [vmem:[%s0] sm:$0xff]
  %v9 = vld [vmem:[%s0 + $0x8] sm:$0xff]
  %v10 = vld [vmem:[%s0 + $0x10] sm:$0xff]
  %v11 = vld [vmem:[%s0 + $0x18] sm:$0xff]
  %v12 = vld [vmem:[%s0 + $0x20] sm:$0xff]
  %v13 = vld [vmem:[%s0 + $0x28] sm:$0xff]
  %v14 = vld [vmem:[%s0 + $0x30] sm:$0xff]
  %v15 = vld [vmem:[%s0 + $0x38] sm:$0xff]
  %v24 = vcombine.high %v8, %v8
  %v25 = vcombine.high %v9, %v9
  %v26 = vcombine.high %v10, %v10
  %v27 = vcombine.high %v11, %v11
  %v28 = vcombine.high %v12, %v12
  %v29 = vcombine.high %v13, %v13
  %v30 = vcombine.high %v14, %v14
  %v31 = vcombine.high %v15, %v15
  %vm40 = vcmask 1043456
  %v41 = vsel %vm40, %v8, 0.0
  %v42 = vrot.slane %v41, 4
  %v43 = vadd.f32 %v41, %v42
  %v44 = vrot.slane %v43, 2
  %v45 = vadd.f32 %v43, %v44
  %v46 = vrot.slane %v45, 1
  %v47 = vadd.f32 %v45, %v46
  %v48 = vsel %vm40, %v24, 0.0
  %v49 = vrot.slane %v48, 4
  %v50 = vadd.f32 %v48, %v49
  %v51 = vrot.slane %v50, 2
  %v52 = vadd.f32 %v50, %v51
  %v53 = vrot.slane %v52, 1
  %v54 = vadd.f32 %v52, %v53
  %v55 = vsel %vm40, %v9, 0.0
  %v56 = vrot.slane %v55, 4
  %v57 = vadd.f32 %v55, %v56
  %v58 = vrot.slane %v57, 2
  %v59 = vadd.f32 %v57, %v58
  %v60 = vrot.slane %v59, 1
  %v61 = vadd.f32 %v59, %v60
  %v62 = vsel %vm40, %v25, 0.0
  %v63 = vrot.slane %v62, 4
  %v64 = vadd.f32 %v62, %v63
  %v65 = vrot.slane %v64, 2
  %v66 = vadd.f32 %v64, %v65
  %v67 = vrot.slane %v66, 1
  %v68 = vadd.f32 %v66, %v67
  %v69 = vsel %vm40, %v10, 0.0
  %v70 = vrot.slane %v69, 4
  %v71 = vadd.f32 %v69, %v70
  %v72 = vrot.slane %v71, 2
  %v73 = vadd.f32 %v71, %v72
  %v74 = vrot.slane %v73, 1
  %v75 = vadd.f32 %v73, %v74
  %v76 = vsel %vm40, %v26, 0.0
  %v77 = vrot.slane %v76, 4
  %v78 = vadd.f32 %v76, %v77
  %v79 = vrot.slane %v78, 2
  %v80 = vadd.f32 %v78, %v79
  %v81 = vrot.slane %v80, 1
  %v82 = vadd.f32 %v80, %v81
  %v83 = vsel %vm40, %v11, 0.0
  %v84 = vrot.slane %v83, 4
  %v85 = vadd.f32 %v83, %v84
  %v86 = vrot.slane %v85, 2
  %v87 = vadd.f32 %v85, %v86
  %v88 = vrot.slane %v87, 1
  %v89 = vadd.f32 %v87, %v88
  %v90 = vsel %vm40, %v27, 0.0
  %v91 = vrot.slane %v90, 4
  %v92 = vadd.f32 %v90, %v91
  %v93 = vrot.slane %v92, 2
  %v94 = vadd.f32 %v92, %v93
  %v95 = vrot.slane %v94, 1
  %v96 = vadd.f32 %v94, %v95
  %v97 = vsel %vm40, %v12, 0.0
  %v98 = vrot.slane %v97, 4
  %v99 = vadd.f32 %v97, %v98
  %v100 = vrot.slane %v99, 2
  %v101 = vadd.f32 %v99, %v100
  %v102 = vrot.slane %v101, 1
  %v103 = vadd.f32 %v101, %v102
  %v104 = vsel %vm40, %v28, 0.0
  %v105 = vrot.slane %v104, 4
  %v106 = vadd.f32 %v104, %v105
  %v107 = vrot.slane %v106, 2
  %v108 = vadd.f32 %v106, %v107
  %v109 = vrot.slane %v108, 1
  %v110 = vadd.f32 %v108, %v109
  %v111 = vsel %vm40, %v13, 0.0
  %v112 = vrot.slane %v111, 4
  %v113 = vadd.f32 %v111, %v112
  %v114 = vrot.slane %v113, 2
  %v115 = vadd.f32 %v113, %v114
  %v116 = vrot.slane %v115, 1
  %v117 = vadd.f32 %v115, %v116
  %v118 = vsel %vm40, %v29, 0.0
  %v119 = vrot.slane %v118, 4
  %v120 = vadd.f32 %v118, %v119
  %v121 = vrot.slane %v120, 2
  %v122 = vadd.f32 %v120, %v121
  %v123 = vrot.slane %v122, 1
  %v124 = vadd.f32 %v122, %v123
  %v125 = vsel %vm40, %v14, 0.0
  %v126 = vrot.slane %v125, 4
  %v127 = vadd.f32 %v125, %v126
  %v128 = vrot.slane %v127, 2
  %v129 = vadd.f32 %v127, %v128
  %v130 = vrot.slane %v129, 1
  %v131 = vadd.f32 %v129, %v130
  %v132 = vsel %vm40, %v30, 0.0
  %v133 = vrot.slane %v132, 4
  %v134 = vadd.f32 %v132, %v133
  %v135 = vrot.slane %v134, 2
  %v136 = vadd.f32 %v134, %v135
  %v137 = vrot.slane %v136, 1
  %v138 = vadd.f32 %v136, %v137
  %v139 = vsel %vm40, %v15, 0.0
  %v140 = vrot.slane %v139, 4
  %v141 = vadd.f32 %v139, %v140
  %v142 = vrot.slane %v141, 2
  %v143 = vadd.f32 %v141, %v142
  %v144 = vrot.slane %v143, 1
  %v145 = vadd.f32 %v143, %v144
  %v146 = vsel %vm40, %v31, 0.0
  %v147 = vrot.slane %v146, 4
  %v148 = vadd.f32 %v146, %v147
  %v149 = vrot.slane %v148, 2
  %v150 = vadd.f32 %v148, %v149
  %v151 = vrot.slane %v150, 1
  %v152 = vadd.f32 %v150, %v151
  %v153 = vmul.f32 %v47, 0.25
  %v154 = vmul.f32 %v54, 0.25
  %v155 = vmul.f32 %v61, 0.25
  %v156 = vmul.f32 %v68, 0.25
  %v157 = vmul.f32 %v75, 0.25
  %v158 = vmul.f32 %v82, 0.25
  %v159 = vmul.f32 %v89, 0.25
  %v160 = vmul.f32 %v96, 0.25
  %v161 = vmul.f32 %v103, 0.25
  %v162 = vmul.f32 %v110, 0.25
  %v163 = vmul.f32 %v117, 0.25
  %v164 = vmul.f32 %v124, 0.25
  %v165 = vmul.f32 %v131, 0.25
  %v166 = vmul.f32 %v138, 0.25
  %v167 = vmul.f32 %v145, 0.25
  %v168 = vmul.f32 %v152, 0.25
  %v185 = vcombine.low %v153, %v154
  %v186 = vcombine.low %v155, %v156
  %v187 = vcombine.low %v157, %v158
  %v188 = vcombine.low %v159, %v160
  %v189 = vcombine.low %v161, %v162
  %v190 = vcombine.low %v163, %v164
  %v191 = vcombine.low %v165, %v166
  %v192 = vcombine.low %v167, %v168
  %v193 = vrot.slane %v186, 7
  %vm194 = vcmask 1041409
  %v195 = vsel %vm194, %v193, %v185
  %vm196 = vcmask 1045509
  %v197 = vsel %vm196, %v193, %v195
  %v198 = vrot.slane %v187, 6
  %vm199 = vcmask 1042434
  %v200 = vsel %vm199, %v198, %v197
  %vm201 = vcmask 1046534
  %v202 = vsel %vm201, %v198, %v200
  %v203 = vrot.slane %v188, 5
  %vm204 = vcmask 1043459
  %v205 = vsel %vm204, %v203, %v202
  %vm206 = vcmask 1047559
  %v207 = vsel %vm206, %v203, %v205
  %v208 = vrot.slane %v190, 7
  %v209 = vsel %vm194, %v208, %v189
  %v210 = vsel %vm196, %v208, %v209
  %v211 = vrot.slane %v191, 6
  %v212 = vsel %vm199, %v211, %v210
  %v213 = vsel %vm201, %v211, %v212
  %v214 = vrot.slane %v192, 5
  %v215 = vsel %vm204, %v214, %v213
  %v216 = vsel %vm206, %v214, %v215
  %219 = vst [vmem:[%s1] sm:$0xff] %v207
  %220 = vst [vmem:[%s1 + $0x8] sm:$0xff] %v216
  // Predicated region
  $region6: #{discriminator_forward.4} parent=0 // pred_check
    _
  $region7: #{discriminator_forward.4} parent=0 // pred_check_branch
    %222 = sbr.rel (0) target = $region9
  $region8: #{discriminator_forward.4} parent=0 // pred_region
    _
  $region9: #{discriminator_forward.4} parent=0 // pred_fallthru
    _
  // Predicated region
  $region10: #{discriminator_forward.4} parent=0 // pred_check
    _
  $region11: #{discriminator_forward.4} parent=0 // pred_check_branch
    %224 = sbr.rel (0) target = $region13
  $region12: #{discriminator_forward.4} parent=0 // pred_region
    _
  $region13: #{discriminator_forward.4} parent=0 // pred_fallthru
    _

// kernel: discriminator_forward.5
$region0: #{discriminator_forward.5}
  #allocation0 [shape = 'u32[]', space=smem, size = 0x4, offset = 0x4, fixed_abs, tag = 'smem constant byte address 0x4 - core index']
  #allocation1 [shape = 'u32[144,128]{1,0:T(1,128)}', space=vmem, size = 0x12000, scoped, tag = 'internal scratch']
  %s0 = inlined_call_operand.vmem [shape: bf16[2,9,9,4], index: 0, kind: input, shape index: {}]
  %s1 = inlined_call_operand.vmem [shape: bf16[2,9,9,4], index: 1, kind: input, shape index: {}]
  %s2 = inlined_call_operand.vmem [shape: bf16[2,9,9,4], index: 2, kind: input, shape index: {}]
  %s3 = inlined_call_operand.vmem [shape: bf16[2,9,9,4], index: 3, kind: input, shape index: {}]
  %s4 = inlined_call_operand.vmem [shape: bf16[9,4,8], index: 4, kind: input, shape index: {}]
  %s5 = inlined_call_operand.vmem [shape: f32[1,8], index: 5, kind: input, shape index: {}]
  %s6 = inlined_call_operand.vmem [shape: bf16[2,10,10,8], index: 6, kind: output, shape index: {}]
  %s7 = sld [smem:[#allocation0]]
  $region57: #{discriminator_forward.5} parent=0
    _
  %s9 = ssub.s32 1, %s7
  %s10 = scalar_select 0, %s9, %s7
  loop: start=0, step=1, limit=4
  $region2: #{discriminator_forward.5} parent=0 // loop_pre_header
    _
  $region3: #{discriminator_forward.5} parent=0 // loop_header
    %s12 = sphi 0, %s16
    %p13 = scmp.ge.s32.totalorder %s12, 4
    %s22 = sphi 0, %s24
    %s25 = sphi 0, %s22
    %s26 = sphi 0, %s25
    %s42 = sphi 0, %s26
    %s48 = sphi 0, %s50
    %s51 = sphi 0, %s48
    %s52 = sphi 0, %s51
    %s68 = sphi 0, %s52
    %s74 = sphi 0, %s76
    %s77 = sphi 0, %s74
    %s78 = sphi 0, %s77
    %s94 = sphi 0, %s78
    %s100 = sphi 0, %s102
    %s103 = sphi 0, %s100
    %s104 = sphi 0, %s103
    %s120 = sphi 0, %s104
    %s124 = sphi 0, %s124
    %s126 = sphi 0, %s124
    %s127 = sphi 0, %s126
    %s141 = sphi 0, %s127
    %s145 = sphi 0, %s145
    %s147 = sphi 0, %s145
    %s148 = sphi 0, %s147
    %s162 = sphi 0, %s148
    %s168 = sphi 0, %s170
    %s171 = sphi 0, %s168
    %s172 = sphi 0, %s171
    %s188 = sphi 0, %s172
  $region4: #{discriminator_forward.5} parent=0 // loop_header_branch
    %15 = sbr.rel (%p13) target = $region8
  $region5: #{discriminator_forward.5} parent=0 // loop_body
    %s17 = ssub.s32 %s12, 1
    %s18 = ssub.s32 %s12, 2
    %s19 = sadd.s32 %s12, 1
    %s20 = ssub.s32 %s12, %s19
    %p21 = scmp.eq.s32.totalorder %s20, 0
    %s23 = sadd.s32 %s22, 1
    %s24 = scalar_select %p21, %s22, %s23
    %p27 = pneg %p21
    %p28 = scmp.eq.s32.totalorder %s12, 1
    %p29 = por %p27, %p28
    %p30 = scmp.ne.s32.totalorder %s22, %s25
    %p31 = scmp.eq.s32.totalorder %s12, 0
    %p32 = por %p30, %p31
    %p33 = scmp.ne.s32.totalorder %s22, %s25
    %p34 = scmp.eq.s32.totalorder %s17, 1
    %p35 = por %p33, %p34
    %p36 = scmp.ne.s32.totalorder %s25, %s26
    %p37 = scmp.eq.s32.totalorder %s17, 0
    %p38 = por %p36, %p37
    %p39 = scmp.ne.s32.totalorder %s25, %s26
    %p40 = scmp.eq.s32.totalorder %s18, 1
    %p41 = por %p39, %p40
    %p43 = scmp.ne.s32.totalorder %s26, %s42
    %p44 = scmp.eq.s32.totalorder %s18, 0
    %p45 = por %p43, %p44
    %s46 = ssub.s32 %s12, %s19
    %p47 = scmp.eq.s32.totalorder %s46, 0
    %s49 = sadd.s32 %s48, 1
    %s50 = scalar_select %p47, %s48, %s49
    %p53 = pneg %p47
    %p54 = scmp.eq.s32.totalorder %s12, 1
    %p55 = por %p53, %p54
    %p56 = scmp.ne.s32.totalorder %s48, %s51
    %p57 = scmp.eq.s32.totalorder %s12, 0
    %p58 = por %p56, %p57
    %p59 = scmp.ne.s32.totalorder %s48, %s51
    %p60 = scmp.eq.s32.totalorder %s17, 1
    %p61 = por %p59, %p60
    %p62 = scmp.ne.s32.totalorder %s51, %s52
    %p63 = scmp.eq.s32.totalorder %s17, 0
    %p64 = por %p62, %p63
    %p65 = scmp.ne.s32.totalorder %s51, %s52
    %p66 = scmp.eq.s32.totalorder %s18, 1
    %p67 = por %p65, %p66
    %p69 = scmp.ne.s32.totalorder %s52, %s68
    %p70 = scmp.eq.s32.totalorder %s18, 0
    %p71 = por %p69, %p70
    %s72 = ssub.s32 %s12, %s19
    %p73 = scmp.eq.s32.totalorder %s72, 0
    %s75 = sadd.s32 %s74, 1
    %s76 = scalar_select %p73, %s74, %s75
    %p79 = pneg %p73
    %p80 = scmp.eq.s32.totalorder %s12, 1
    %p81 = por %p79, %p80
    %p82 = scmp.ne.s32.totalorder %s74, %s77
    %p83 = scmp.eq.s32.totalorder %s12, 0
    %p84 = por %p82, %p83
    %p85 = scmp.ne.s32.totalorder %s74, %s77
    %p86 = scmp.eq.s32.totalorder %s17, 1
    %p87 = por %p85, %p86
    %p88 = scmp.ne.s32.totalorder %s77, %s78
    %p89 = scmp.eq.s32.totalorder %s17, 0
    %p90 = por %p88, %p89
    %p91 = scmp.ne.s32.totalorder %s77, %s78
    %p92 = scmp.eq.s32.totalorder %s18, 1
    %p93 = por %p91, %p92
    %p95 = scmp.ne.s32.totalorder %s78, %s94
    %p96 = scmp.eq.s32.totalorder %s18, 0
    %p97 = por %p95, %p96
    %s98 = ssub.s32 %s12, %s19
    %p99 = scmp.eq.s32.totalorder %s98, 0
    %s101 = sadd.s32 %s100, 1
    %s102 = scalar_select %p99, %s100, %s101
    %p105 = pneg %p99
    %p106 = scmp.eq.s32.totalorder %s12, 1
    %p107 = por %p105, %p106
    %p108 = scmp.ne.s32.totalorder %s100, %s103
    %p109 = scmp.eq.s32.totalorder %s12, 0
    %p110 = por %p108, %p109
    %p111 = scmp.ne.s32.totalorder %s100, %s103
    %p112 = scmp.eq.s32.totalorder %s17, 1
    %p113 = por %p111, %p112
    %p114 = scmp.ne.s32.totalorder %s103, %s104
    %p115 = scmp.eq.s32.totalorder %s17, 0
    %p116 = por %p114, %p115
    %p117 = scmp.ne.s32.totalorder %s103, %s104
    %p118 = scmp.eq.s32.totalorder %s18, 1
    %p119 = por %p117, %p118
    %p121 = scmp.ne.s32.totalorder %s104, %s120
    %p122 = scmp.eq.s32.totalorder %s18, 0
    %p123 = por %p121, %p122
    %s125 = sadd.s32 %s124, 1
    %p128 = scmp.eq.s32.totalorder %s12, 1
    %p129 = scmp.ne.s32.totalorder %s124, %s126
    %p130 = scmp.eq.s32.totalorder %s12, 0
    %p131 = por %p129, %p130
    %p132 = scmp.ne.s32.totalorder %s124, %s126
    %p133 = scmp.eq.s32.totalorder %s17, 1
    %p134 = por %p132, %p133
    %p135 = scmp.ne.s32.totalorder %s126, %s127
    %p136 = scmp.eq.s32.totalorder %s17, 0
    %p137 = por %p135, %p136
    %p138 = scmp.ne.s32.totalorder %s126, %s127
    %p139 = scmp.eq.s32.totalorder %s18, 1
    %p140 = por %p138, %p139
    %p142 = scmp.ne.s32.totalorder %s127, %s141
    %p143 = scmp.eq.s32.totalorder %s18, 0
    %p144 = por %p142, %p143
    %s146 = sadd.s32 %s145, 1
    %p149 = scmp.eq.s32.totalorder %s12, 1
    %p150 = scmp.ne.s32.totalorder %s145, %s147
    %p151 = scmp.eq.s32.totalorder %s12, 0
    %p152 = por %p150, %p151
    %p153 = scmp.ne.s32.totalorder %s145, %s147
    %p154 = scmp.eq.s32.totalorder %s17, 1
    %p155 = por %p153, %p154
    %p156 = scmp.ne.s32.totalorder %s147, %s148
    %p157 = scmp.eq.s32.totalorder %s17, 0
    %p158 = por %p156, %p157
    %p159 = scmp.ne.s32.totalorder %s147, %s148
    %p160 = scmp.eq.s32.totalorder %s18, 1
    %p161 = por %p159, %p160
    %p163 = scmp.ne.s32.totalorder %s148, %s162
    %p164 = scmp.eq.s32.totalorder %s18, 0
    %p165 = por %p163, %p164
    %s166 = ssub.s32 %s12, %s19
    %p167 = scmp.eq.s32.totalorder %s166, 0
    %s169 = sadd.s32 %s168, 1
    %s170 = scalar_select %p167, %s168, %s169
    %p173 = pneg %p167
    %p174 = scmp.eq.s32.totalorder %s12, 1
    %p175 = por %p173, %p174
    %p176 = scmp.ne.s32.totalorder %s168, %s171
    %p177 = scmp.eq.s32.totalorder %s12, 0
    %p178 = por %p176, %p177
    %p179 = scmp.ne.s32.totalorder %s168, %s171
    %p180 = scmp.eq.s32.totalorder %s17, 1
    %p181 = por %p179, %p180
    %p182 = scmp.ne.s32.totalorder %s171, %s172
    %p183 = scmp.eq.s32.totalorder %s17, 0
    %p184 = por %p182, %p183
    %p185 = scmp.ne.s32.totalorder %s171, %s172
    %p186 = scmp.eq.s32.totalorder %s18, 1
    %p187 = por %p185, %p186
    %p189 = scmp.ne.s32.totalorder %s172, %s188
    %p190 = scmp.eq.s32.totalorder %s18, 0
    %p191 = por %p189, %p190
    %p192 = scmp.le.s32.totalorder 1, %s12
    %p193 = scmp.lt.s32.totalorder %s12, 3
    %p194 = pnand %p192, %p193
    %p195 = pneg %p194
    // Predicated region
    $region9: #{discriminator_forward.5} parent=5 // pred_check
      _
    $region10: #{discriminator_forward.5} parent=5 // pred_check_branch
      %197 = sbr.rel (%p194) target = $region12
    $region11: #{discriminator_forward.5} parent=5 // pred_region
      %s198 = ssub.s32 %s12, 1
      // Predicated region
      $region13: #{discriminator_forward.5} parent=11 // pred_check
        %p199 = pneg %p137
      $region14: #{discriminator_forward.5} parent=11 // pred_check_branch
        %201 = sbr.rel (%p199) target = $region16
      $region15: #{discriminator_forward.5} parent=11 // pred_region
        _
      $region16: #{discriminator_forward.5} parent=11 // pred_fallthru
        _
      // Predicated region
      $region17: #{discriminator_forward.5} parent=11 // pred_check
        %p202 = pneg %p158
      $region18: #{discriminator_forward.5} parent=11 // pred_check_branch
        %204 = sbr.rel (%p202) target = $region20
      $region19: #{discriminator_forward.5} parent=11 // pred_region
        _
      $region20: #{discriminator_forward.5} parent=11 // pred_fallthru
        _
    $region12: #{discriminator_forward.5} parent=5 // pred_fallthru
      _
    %p205 = scmp.lt.s32.totalorder %s12, 2
    // Predicated region
    $region21: #{discriminator_forward.5} parent=5 // pred_check
      %p206 = pneg %p205
    $region22: #{discriminator_forward.5} parent=5 // pred_check_branch
      %208 = sbr.rel (%p206) target = $region24
    $region23: #{discriminator_forward.5} parent=5 // pred_region
      // Predicated region
      $region25: #{discriminator_forward.5} parent=23 // pred_check
        %p209 = pneg %p32
      $region26: #{discriminator_forward.5} parent=23 // pred_check_branch
        %211 = sbr.rel (%p209) target = $region28
      $region27: #{discriminator_forward.5} parent=23 // pred_region
        %p212 = scmp.lt.s32.totalorder %s12, 1
        %s213 = scalar_select %p212, %s12, 1
        %s214 = smul.addr %s213, 18
        %s215 = smul.addr %s214, 4
        %s216 = scalar_lea.vmem %s0, %s215
      $region28: #{discriminator_forward.5} parent=23 // pred_fallthru
        _
      // Predicated region
      $region29: #{discriminator_forward.5} parent=23 // pred_check
        %p217 = pneg %p58
      $region30: #{discriminator_forward.5} parent=23 // pred_check_branch
        %219 = sbr.rel (%p217) target = $region32
      $region31: #{discriminator_forward.5} parent=23 // pred_region
        %p220 = scmp.lt.s32.totalorder %s12, 1
        %s221 = scalar_select %p220, %s12, 1
        %s222 = smul.addr %s221, 18
        %s223 = smul.addr %s222, 4
        %s224 = scalar_lea.vmem %s1, %s223
      $region32: #{discriminator_forward.5} parent=23 // pred_fallthru
        _
      // Predicated region
      $region33: #{discriminator_forward.5} parent=23 // pred_check
        %p225 = pneg %p84
      $region34: #{discriminator_forward.5} parent=23 // pred_check_branch
        %227 = sbr.rel (%p225) target = $region36
      $region35: #{discriminator_forward.5} parent=23 // pred_region
        %p228 = scmp.lt.s32.totalorder %s12, 1
        %s229 = scalar_select %p228, %s12, 1
        %s230 = smul.addr %s229, 18
        %s231 = smul.addr %s230, 4
        %s232 = scalar_lea.vmem %s2, %s231
      $region36: #{discriminator_forward.5} parent=23 // pred_fallthru
        _
      // Predicated region
      $region37: #{discriminator_forward.5} parent=23 // pred_check
        %p233 = pneg %p110
      $region38: #{discriminator_forward.5} parent=23 // pred_check_branch
        %235 = sbr.rel (%p233) target = $region40
      $region39: #{discriminator_forward.5} parent=23 // pred_region
        %p236 = scmp.lt.s32.totalorder %s12, 1
        %s237 = scalar_select %p236, %s12, 1
        %s238 = smul.addr %s237, 18
        %s239 = smul.addr %s238, 4
        %s240 = scalar_lea.vmem %s3, %s239
      $region40: #{discriminator_forward.5} parent=23 // pred_fallthru
        _
    $region24: #{discriminator_forward.5} parent=5 // pred_fallthru
      _
    %p241 = scmp.le.s32.totalorder 1, %s12
    %p242 = scmp.lt.s32.totalorder %s12, 3
    %p243 = pnand %p241, %p242
    %p244 = pneg %p243
    // Predicated region
    $region41: #{discriminator_forward.5} parent=5 // pred_check
      _
    $region42: #{discriminator_forward.5} parent=5 // pred_check_branch
      %246 = sbr.rel (%p243) target = $region44
    $region43: #{discriminator_forward.5} parent=5 // pred_region
      %s247 = ssub.s32 %s12, 1
      %p248 = scmp.lt.s32.totalorder %s17, 1
      %s249 = scalar_select %p248, %s17, 1
      %s250 = smul.addr %s249, 18
      %s251 = smul.addr %s250, 4
      %s252 = scalar_lea.vmem %s0, %s251
      %p253 = pneg %p38
      %p254 = pneg %p35
      %p255 = scmp.lt.s32.totalorder %s17, 1
      %s256 = scalar_select %p255, %s17, 1
      %s257 = smul.addr %s256, 18
      %s258 = smul.addr %s257, 4
      %s259 = scalar_lea.vmem %s1, %s258
      %p260 = pneg %p64
      %p261 = pneg %p61
      %p262 = scmp.lt.s32.totalorder %s17, 1
      %s263 = scalar_select %p262, %s17, 1
      %s264 = smul.addr %s263, 18
      %s265 = smul.addr %s264, 4
      %s266 = scalar_lea.vmem %s2, %s265
      %p267 = pneg %p90
      %p268 = pneg %p87
      %p269 = scmp.lt.s32.totalorder %s17, 1
      %s270 = scalar_select %p269, %s17, 1
      %s271 = smul.addr %s270, 18
      %s272 = smul.addr %s271, 4
      %s273 = scalar_lea.vmem %s3, %s272
      %p274 = pneg %p116
      %p275 = pneg %p113
      %p276 = pneg %p137
      %p277 = pneg %p134
      %p278 = pneg %p158
      %p279 = pneg %p155
      %p280 = pneg %p184
      %p281 = pneg %p181
      %p282 = scmp.lt.s32.totalorder %s17, 1
      %s283 = scalar_select %p282, %s17, 1
      %s284 = smul.addr %s283, 20
      %s285 = smul.addr %s284, 4
      %s286 = scalar_lea.vmem %s6, %s285
      %p287 = scmp.lt.s32.totalorder %s17, 1
      %s288 = scalar_select %p287, %s17, 1
      %s289 = smul.addr %s288, 18
      %s290 = smul.addr %s289, 4
      %s291 = scalar_lea.vmem %s0, %s290
      %p292 = scmp.lt.s32.totalorder %s17, 1
      %s293 = scalar_select %p292, %s17, 1
      %s294 = smul.addr %s293, 18
      %s295 = smul.addr %s294, 4
      %s296 = scalar_lea.vmem %s1, %s295
      %p297 = scmp.lt.s32.totalorder %s17, 1
      %s298 = scalar_select %p297, %s17, 1
      %s299 = smul.addr %s298, 18
      %s300 = smul.addr %s299, 4
      %s301 = scalar_lea.vmem %s2, %s300
      %p302 = scmp.lt.s32.totalorder %s17, 1
      %s303 = scalar_select %p302, %s17, 1
      %s304 = smul.addr %s303, 18
      %s305 = smul.addr %s304, 4
      %s306 = scalar_lea.vmem %s3, %s305
      %p307 = scmp.lt.s32.totalorder %s17, 1
      %s308 = scalar_select %p307, %s17, 1
      %s309 = smul.addr %s308, 20
      %s310 = smul.addr %s309, 4
      %s311 = scalar_lea.vmem %s6, %s310
      %v313 = vld [vmem:[%s291] sm:$0xf]
      %v314 = vld [vmem:[%s291 + $0x4] sm:$0x1]
      %v315 = vld [vmem:[%s291 + $0x8] sm:$0xf]
      %v316 = vld [vmem:[%s291 + $0xc] sm:$0x1]
      %v317 = vld [vmem:[%s291 + $0x10] sm:$0xf]
      %v318 = vld [vmem:[%s291 + $0x14] sm:$0x1]
      %v319 = vld [vmem:[%s291 + $0x18] sm:$0xf]
      %v320 = vld [vmem:[%s291 + $0x1c] sm:$0x1]
      %v321 = vld [vmem:[%s291 + $0x20] sm:$0xf]
      %v322 = vld [vmem:[%s291 + $0x24] sm:$0x1]
      %v323 = vld [vmem:[%s291 + $0x28] sm:$0xf]
      %v324 = vld [vmem:[%s291 + $0x2c] sm:$0x1]
      %v325 = vld [vmem:[%s291 + $0x30] sm:$0xf]
      %v326 = vld [vmem:[%s291 + $0x34] sm:$0x1]
      %v327 = vld [vmem:[%s291 + $0x38] sm:$0xf]
      %v328 = vld [vmem:[%s291 + $0x3c] sm:$0x1]
      %v329 = vld [vmem:[%s291 + $0x40] sm:$0xf]
      %v330 = vld [vmem:[%s291 + $0x44] sm:$0x1]
      %v331 = vld [vmem:[%s296] sm:$0xf]
      %v332 = vld [vmem:[%s296 + $0x8] sm:$0xf]
      %v333 = vld [vmem:[%s296 + $0x10] sm:$0xf]
      %v334 = vld [vmem:[%s296 + $0x18] sm:$0xf]
      %v335 = vld [vmem:[%s296 + $0x20] sm:$0xf]
      %v336 = vld [vmem:[%s296 + $0x28] sm:$0xf]
      %v337 = vld [vmem:[%s296 + $0x30] sm:$0xf]
      %v338 = vld [vmem:[%s296 + $0x38] sm:$0xf]
      %v339 = vld [vmem:[%s296 + $0x40] sm:$0xf]
      %v340 = vld [vmem:[%s301] sm:$0xf]
      %v341 = vld [vmem:[%s301 + $0x4] sm:$0x1]
      %v342 = vld [vmem:[%s301 + $0x8] sm:$0xf]
      %v343 = vld [vmem:[%s301 + $0xc] sm:$0x1]
      %v344 = vld [vmem:[%s301 + $0x10] sm:$0xf]
      %v345 = vld [vmem:[%s301 + $0x14] sm:$0x1]
      %v346 = vld [vmem:[%s301 + $0x18] sm:$0xf]
      %v347 = vld [vmem:[%s301 + $0x1c] sm:$0x1]
      %v348 = vld [vmem:[%s301 + $0x20] sm:$0xf]
      %v349 = vld [vmem:[%s301 + $0x24] sm:$0x1]
      %v350 = vld [vmem:[%s301 + $0x28] sm:$0xf]
      %v351 = vld [vmem:[%s301 + $0x2c] sm:$0x1]
      %v352 = vld [vmem:[%s301 + $0x30] sm:$0xf]
      %v353 = vld [vmem:[%s301 + $0x34] sm:$0x1]
      %v354 = vld [vmem:[%s301 + $0x38] sm:$0xf]
      %v355 = vld [vmem:[%s301 + $0x3c] sm:$0x1]
      %v356 = vld [vmem:[%s306] sm:$0xf]
      %v357 = vld [vmem:[%s306 + $0x8] sm:$0xf]
      %v358 = vld [vmem:[%s306 + $0x10] sm:$0xf]
      %v359 = vld [vmem:[%s306 + $0x18] sm:$0xf]
      %v360 = vld [vmem:[%s306 + $0x20] sm:$0xf]
      %v361 = vld [vmem:[%s306 + $0x28] sm:$0xf]
      %v362 = vld [vmem:[%s306 + $0x30] sm:$0xf]
      %v363 = vld [vmem:[%s306 + $0x38] sm:$0xf]
      %v364 = vld [vmem:[%s4] sm:$0x3]
      %s365 = scalar_lea.vmem %s4, 2
      %v366 = vld [vmem:[%s365] sm:$0x3]
      %v375 = vunpack.c.l.b16 %v331
      %v376 = vunpack.c.l.b16 %v332
      %v377 = vunpack.c.l.b16 %v333
      %v378 = vunpack.c.l.b16 %v334
      %v379 = vunpack.c.l.b16 %v335
      %v380 = vunpack.c.l.b16 %v336
      %v381 = vunpack.c.l.b16 %v337
      %v382 = vunpack.c.l.b16 %v338
      %v383 = vpack.c.b16 %v376, %v375
      %v384 = vpack.c.b16 %v378, %v377
      %v385 = vpack.c.b16 %v380, %v379
      %v386 = vpack.c.b16 %v382, %v381
      %vm387 = vcmask 31744
      %v389 = vsel %vm387, %v383, 0
      %v392 = vsel %vm387, %v384, 0
      %v395 = vsel %vm387, %v385, 0
      %v398 = vsel %vm387, %v386, 0
      %vm400 = vcmask 1041408
      %v402 = vsel %vm400, %v366, 0
      %404 = vmatprep.subr.bf16.mxu0 0
      %405 = vmatpush1.bf16.msra.mxu0 0
      %406 = vmatprep.subr.bf16.mxu0 0
      %407 = vmatpush1.bf16.msra.mxu0 0
      %408 = vmatprep.subr.bf16.mxu0 0
      %409 = vmatpush1.bf16.msra.mxu0 0
      %410 = vmatprep.subr.bf16.mxu0 0
      %411 = vmatpush1.bf16.msra.mxu0 0
      %412 = vmatprep.subr.bf16.mxu0 0
      %413 = vmatpush1.bf16.msra.mxu0 0
      %414 = vmatprep.subr.bf16.mxu0 0
      %415 = vmatpush1.bf16.msra.mxu0 0
      %416 = vmatprep.subr.bf16.mxu0 0
      %417 = vmatpush1.bf16.msra.mxu0 0
      %418 = vmatprep.subr.bf16.mxu0 0
      %419 = vmatpush1.bf16.msra.mxu0 %v402
      %420 = vmatprep.subr.bf16.mxu0 0
      %421 = vmatpush2.bf16.msra.mxu0 0
      %422 = vmatprep.subr.bf16.mxu0 0
      %423 = vmatpush2.bf16.msra.mxu0 0
      %424 = vmatprep.subr.bf16.mxu0 0
      %425 = vmatpush2.bf16.msra.mxu0 0
      %426 = vmatprep.subr.bf16.mxu0 0
      %427 = vmatpush2.bf16.msra.mxu0 0
      %428 = vmatprep.subr.bf16.mxu0 0
      %429 = vmatpush2.bf16.msra.mxu0 0
      %430 = vmatprep.subr.bf16.mxu0 0
      %431 = vmatpush2.bf16.msra.mxu0 0
      %432 = vmatprep.subr.bf16.mxu0 0
      %433 = vmatpush2.bf16.msra.mxu0 0
      %434 = vmatprep.subr.bf16.mxu0 0
      %435 = vmatpush2.bf16.msra.mxu0 0
      %436 = vmatprep.mubr.bf16.mxu0 0
      %437 = vmatmul.mubr.bf16.gmra.mxu0 %v389
      %v438 = vpop.f32.mrf.mxu0
      %v439 = vadd.f32 0.0, %v438
      %v440 = vpop.f32.mrf.mxu0
      %v441 = vpop.f32.mrf.mxu0
      %v442 = vadd.f32 0.0, %v441
      %v443 = vpop.f32.mrf.mxu0
      %444 = vmatprep.mubr.bf16.mxu0 0
      %445 = vmatmul.mubr.bf16.gmra.mxu0 %v392
      %v446 = vpop.f32.mrf.mxu0
      %v447 = vadd.f32 0.0, %v446
      %v448 = vpop.f32.mrf.mxu0
      %v449 = vpop.f32.mrf.mxu0
      %v450 = vadd.f32 0.0, %v449
      %v451 = vpop.f32.mrf.mxu0
      %452 = vmatprep.mubr.bf16.mxu0 0
      %453 = vmatmul.mubr.bf16.gmra.mxu0 %v395
      %v454 = vpop.f32.mrf.mxu0
      %v455 = vadd.f32 0.0, %v454
      %v456 = vpop.f32.mrf.mxu0
      %v457 = vpop.f32.mrf.mxu0
      %v458 = vadd.f32 0.0, %v457
      %v459 = vpop.f32.mrf.mxu0
      %460 = vmatprep.mubr.bf16.mxu0 0
      %461 = vmatmul.mubr.bf16.gmra.mxu0 %v398
      %v462 = vpop.f32.mrf.mxu0
      %v463 = vadd.f32 0.0, %v462
      %v464 = vpop.f32.mrf.mxu0
      %v465 = vpop.f32.mrf.mxu0
      %v466 = vadd.f32 0.0, %v465
      %v467 = vpop.f32.mrf.mxu0
      %468 = vdwg.mxu0
      %v477 = vunpack.c.l.b16 %v313
      %v478 = vunpack.c.l.b16 %v315
      %v479 = vunpack.c.l.b16 %v317
      %v480 = vunpack.c.l.b16 %v319
      %v481 = vunpack.c.l.b16 %v321
      %v482 = vunpack.c.l.b16 %v323
      %v483 = vunpack.c.l.b16 %v325
      %v484 = vunpack.c.l.b16 %v327
      %v485 = vpack.c.b16 %v478, %v477
      %v486 = vpack.c.b16 %v480, %v479
      %v487 = vpack.c.b16 %v482, %v481
      %v488 = vpack.c.b16 %v484, %v483
      %v490 = vsel %vm387, %v485, 0
      %v493 = vsel %vm387, %v486, 0
      %v496 = vsel %vm387, %v487, 0
      %v499 = vsel %vm387, %v488, 0
      %v502 = vsel %vm400, %v364, 0
      %504 = vmatprep.subr.bf16.mxu0 0
      %505 = vmatpush1.bf16.msra.mxu0 0
      %506 = vmatprep.subr.bf16.mxu0 0
      %507 = vmatpush1.bf16.msra.mxu0 0
      %508 = vmatprep.subr.bf16.mxu0 0
      %509 = vmatpush1.bf16.msra.mxu0 0
      %510 = vmatprep.subr.bf16.mxu0 0
      %511 = vmatpush1.bf16.msra.mxu0 0
      %512 = vmatprep.subr.bf16.mxu0 0
      %513 = vmatpush1.bf16.msra.mxu0 0
      %514 = vmatprep.subr.bf16.mxu0 0
      %515 = vmatpush1.bf16.msra.mxu0 0
      %516 = vmatprep.subr.bf16.mxu0 0
      %517 = vmatpush1.bf16.msra.mxu0 0
      %518 = vmatprep.subr.bf16.mxu0 0
      %519 = vmatpush1.bf16.msra.mxu0 %v502
      %520 = vmatprep.subr.bf16.mxu0 0
      %521 = vmatpush2.bf16.msra.mxu0 0
      %522 = vmatprep.subr.bf16.mxu0 0
      %523 = vmatpush2.bf16.msra.mxu0 0
      %524 = vmatprep.subr.bf16.mxu0 0
      %525 = vmatpush2.bf16.msra.mxu0 0
      %526 = vmatprep.subr.bf16.mxu0 0
      %527 = vmatpush2.bf16.msra.mxu0 0
      %528 = vmatprep.subr.bf16.mxu0 0
      %529 = vmatpush2.bf16.msra.mxu0 0
      %530 = vmatprep.subr.bf16.mxu0 0
      %531 = vmatpush2.bf16.msra.mxu0 0
      %532 = vmatprep.subr.bf16.mxu0 0
      %533 = vmatpush2.bf16.msra.mxu0 0
      %534 = vmatprep.subr.bf16.mxu0 0
      %535 = vmatpush2.bf16.msra.mxu0 0
      %536 = vmatprep.mubr.bf16.mxu0 0
      %537 = vmatmul.mubr.bf16.gmra.mxu0 %v490
      %v538 = vpop.f32.mrf.mxu0
      %v539 = vadd.f32 %v439, %v538
      %v540 = vpop.f32.mrf.mxu0
      %v541 = vpop.f32.mrf.mxu0
      %v542 = vadd.f32 %v442, %v541
      %v543 = vpop.f32.mrf.mxu0
      %544 = vmatprep.mubr.bf16.mxu0 0
      %545 = vmatmul.mubr.bf16.gmra.mxu0 %v493
      %v546 = vpop.f32.mrf.mxu0
      %v547 = vadd.f32 %v447, %v546
      %v548 = vpop.f32.mrf.mxu0
      %v549 = vpop.f32.mrf.mxu0
      %v550 = vadd.f32 %v450, %v549
      %v551 = vpop.f32.mrf.mxu0
      %552 = vmatprep.mubr.bf16.mxu0 0
      %553 = vmatmul.mubr.bf16.gmra.mxu0 %v496
      %v554 = vpop.f32.mrf.mxu0
      %v555 = vadd.f32 %v455, %v554
      %v556 = vpop.f32.mrf.mxu0
      %v557 = vpop.f32.mrf.mxu0
      %v558 = vadd.f32 %v458, %v557
      %v559 = vpop.f32.mrf.mxu0
      %560 = vmatprep.mubr.bf16.mxu0 0
      %561 = vmatmul.mubr.bf16.gmra.mxu0 %v499
      %v562 = vpop.f32.mrf.mxu0
      %v563 = vadd.f32 %v463, %v562
      %v564 = vpop.f32.mrf.mxu0
      %v565 = vpop.f32.mrf.mxu0
      %v566 = vadd.f32 %v466, %v565
      %v567 = vpop.f32.mrf.mxu0
      %568 = vdwg.mxu0
      %vm569 = vsmask.f32 3328
      %vm570 = vsmask.f32 7440
      %vm571 = vmor %vm569, %vm570
      %v573 = vshrl.u32 %v313, 16
      %v575 = vrot.slane %v573, 4
      %v576 = vshll.u32 %v313, 16
      %v578 = vrot.slane %v576, 5
      %v579 = vor.u32 %v575, %v578
      %v580 = vrot.slane %v579, 4
      %v582 = vshll.u32 %v314, 16
      %v584 = vrot.slane %v582, 5
      %v585 = vsel %vm571, %v580, %v584
      %v587 = vshrl.u32 %v315, 16
      %v589 = vrot.slane %v587, 4
      %v590 = vshll.u32 %v315, 16
      %v592 = vrot.slane %v590, 5
      %v593 = vor.u32 %v589, %v592
      %v594 = vrot.slane %v593, 4
      %v596 = vshll.u32 %v316, 16
      %v598 = vrot.slane %v596, 5
      %v599 = vsel %vm571, %v594, %v598
      %v601 = vshrl.u32 %v317, 16
      %v603 = vrot.slane %v601, 4
      %v604 = vshll.u32 %v317, 16
      %v606 = vrot.slane %v604, 5
      %v607 = vor.u32 %v603, %v606
      %v608 = vrot.slane %v607, 4
      %v610 = vshll.u32 %v318, 16
      %v612 = vrot.slane %v610, 5
      %v613 = vsel %vm571, %v608, %v612
      %v615 = vshrl.u32 %v319, 16
      %v617 = vrot.slane %v615, 4
      %v618 = vshll.u32 %v319, 16
      %v620 = vrot.slane %v618, 5
      %v621 = vor.u32 %v617, %v620
      %v622 = vrot.slane %v621, 4
      %v624 = vshll.u32 %v320, 16
      %v626 = vrot.slane %v624, 5
      %v627 = vsel %vm571, %v622, %v626
      %v629 = vshrl.u32 %v321, 16
      %v631 = vrot.slane %v629, 4
      %v632 = vshll.u32 %v321, 16
      %v634 = vrot.slane %v632, 5
      %v635 = vor.u32 %v631, %v634
      %v636 = vrot.slane %v635, 4
      %v638 = vshll.u32 %v322, 16
      %v640 = vrot.slane %v638, 5
      %v641 = vsel %vm571, %v636, %v640
      %v643 = vshrl.u32 %v323, 16
      %v645 = vrot.slane %v643, 4
      %v646 = vshll.u32 %v323, 16
      %v648 = vrot.slane %v646, 5
      %v649 = vor.u32 %v645, %v648
      %v650 = vrot.slane %v649, 4
      %v652 = vshll.u32 %v324, 16
      %v654 = vrot.slane %v652, 5
      %v655 = vsel %vm571, %v650, %v654
      %v657 = vshrl.u32 %v325, 16
      %v659 = vrot.slane %v657, 4
      %v660 = vshll.u32 %v325, 16
      %v662 = vrot.slane %v660, 5
      %v663 = vor.u32 %v659, %v662
      %v664 = vrot.slane %v663, 4
      %v666 = vshll.u32 %v326, 16
      %v668 = vrot.slane %v666, 5
      %v669 = vsel %vm571, %v664, %v668
      %v671 = vshrl.u32 %v327, 16
      %v673 = vrot.slane %v671, 4
      %v674 = vshll.u32 %v327, 16
      %v676 = vrot.slane %v674, 5
      %v677 = vor.u32 %v673, %v676
      %v678 = vrot.slane %v677, 4
      %v680 = vshll.u32 %v328, 16
      %v682 = vrot.slane %v680, 5
      %v683 = vsel %vm571, %v678, %v682
      %s684 = scalar_lea.vmem %s4, 4
      %v685 = vld [vmem:[%s684] sm:$0x3]
      %v686 = vunpack.c.l.b16 %v585
      %v687 = vunpack.c.l.b16 %v599
      %v688 = vunpack.c.l.b16 %v613
      %v689 = vunpack.c.l.b16 %v627
      %v690 = vunpack.c.l.b16 %v641
      %v691 = vunpack.c.l.b16 %v655
      %v692 = vunpack.c.l.b16 %v669
      %v693 = vunpack.c.l.b16 %v683
      %v694 = vpack.c.b16 %v687, %v686
      %v695 = vpack.c.b16 %v689, %v688
      %v696 = vpack.c.b16 %v691, %v690
      %v697 = vpack.c.b16 %v693, %v692
      %v699 = vsel %vm387, %v694, 0
      %v702 = vsel %vm387, %v695, 0
      %v705 = vsel %vm387, %v696, 0
      %v708 = vsel %vm387, %v697, 0
      %v711 = vsel %vm400, %v685, 0
      %713 = vmatprep.subr.bf16.mxu0 0
      %714 = vmatpush1.bf16.msra.mxu0 0
      %715 = vmatprep.subr.bf16.mxu0 0
      %716 = vmatpush1.bf16.msra.mxu0 0
      %717 = vmatprep.subr.bf16.mxu0 0
      %718 = vmatpush1.bf16.msra.mxu0 0
      %719 = vmatprep.subr.bf16.mxu0 0
      %720 = vmatpush1.bf16.msra.mxu0 0
      %721 = vmatprep.subr.bf16.mxu0 0
      %722 = vmatpush1.bf16.msra.mxu0 0
      %723 = vmatprep.subr.bf16.mxu0 0
      %724 = vmatpush1.bf16.msra.mxu0 0
      %725 = vmatprep.subr.bf16.mxu0 0
      %726 = vmatpush1.bf16.msra.mxu0 0
      %727 = vmatprep.subr.bf16.mxu0 0
      %728 = vmatpush1.bf16.msra.mxu0 %v711
      %729 = vmatprep.subr.bf16.mxu0 0
      %730 = vmatpush2.bf16.msra.mxu0 0
      %731 = vmatprep.subr.bf16.mxu0 0
      %732 = vmatpush2.bf16.msra.mxu0 0
      %733 = vmatprep.subr.bf16.mxu0 0
      %734 = vmatpush2.bf16.msra.mxu0 0
      %735 = vmatprep.subr.bf16.mxu0 0
      %736 = vmatpush2.bf16.msra.mxu0 0
      %737 = vmatprep.subr.bf16.mxu0 0
      %738 = vmatpush2.bf16.msra.mxu0 0
      %739 = vmatprep.subr.bf16.mxu0 0
      %740 = vmatpush2.bf16.msra.mxu0 0
      %741 = vmatprep.subr.bf16.mxu0 0
      %742 = vmatpush2.bf16.msra.mxu0 0
      %743 = vmatprep.subr.bf16.mxu0 0
      %744 = vmatpush2.bf16.msra.mxu0 0
      %745 = vmatprep.mubr.bf16.mxu0 0
      %746 = vmatmul.mubr.bf16.gmra.mxu0 %v699
      %v747 = vpop.f32.mrf.mxu0
      %v748 = vadd.f32 0.0, %v747
      %v749 = vpop.f32.mrf.mxu0
      %v750 = vpop.f32.mrf.mxu0
      %v751 = vadd.f32 0.0, %v750
      %v752 = vpop.f32.mrf.mxu0
      %753 = vmatprep.mubr.bf16.mxu0 0
      %754 = vmatmul.mubr.bf16.gmra.mxu0 %v702
      %v755 = vpop.f32.mrf.mxu0
      %v756 = vadd.f32 0.0, %v755
      %v757 = vpop.f32.mrf.mxu0
      %v758 = vpop.f32.mrf.mxu0
      %v759 = vadd.f32 0.0, %v758
      %v760 = vpop.f32.mrf.mxu0
      %761 = vmatprep.mubr.bf16.mxu0 0
      %762 = vmatmul.mubr.bf16.gmra.mxu0 %v705
      %v763 = vpop.f32.mrf.mxu0
      %v764 = vadd.f32 0.0, %v763
      %v765 = vpop.f32.mrf.mxu0
      %v766 = vpop.f32.mrf.mxu0
      %v767 = vadd.f32 0.0, %v766
      %v768 = vpop.f32.mrf.mxu0
      %769 = vmatprep.mubr.bf16.mxu0 0
      %770 = vmatmul.mubr.bf16.gmra.mxu0 %v708
      %v771 = vpop.f32.mrf.mxu0
      %v772 = vadd.f32 0.0, %v771
      %v773 = vpop.f32.mrf.mxu0
      %v774 = vpop.f32.mrf.mxu0
      %v775 = vadd.f32 0.0, %v774
      %v776 = vpop.f32.mrf.mxu0
      %777 = vdwg.mxu0
      %v778 = vadd.f32 %v539, %v748
      %v779 = vadd.f32 %v542, %v751
      %v780 = vadd.f32 %v547, %v756
      %v781 = vadd.f32 %v550, %v759
      %v782 = vadd.f32 %v555, %v764
      %v783 = vadd.f32 %v558, %v767
      %v784 = vadd.f32 %v563, %v772
      %v785 = vadd.f32 %v566, %v775
      %s786 = scalar_lea.vmem %s4, 6
      %v787 = vld [vmem:[%s786] sm:$0x3]
      %v796 = vunpack.c.l.b16 %v340
      %v797 = vunpack.c.l.b16 %v342
      %v798 = vunpack.c.l.b16 %v344
      %v799 = vunpack.c.l.b16 %v346
      %v800 = vunpack.c.l.b16 %v348
      %v801 = vunpack.c.l.b16 %v350
      %v802 = vunpack.c.l.b16 %v352
      %v803 = vunpack.c.l.b16 %v354
      %v804 = vpack.c.b16 %v797, %v796
      %v805 = vpack.c.b16 %v799, %v798
      %v806 = vpack.c.b16 %v801, %v800
      %v807 = vpack.c.b16 %v803, %v802
      %v809 = vsel %vm387, %v804, 0
      %v812 = vsel %vm387, %v805, 0
      %v815 = vsel %vm387, %v806, 0
      %v818 = vsel %vm387, %v807, 0
      %v821 = vsel %vm400, %v787, 0
      %823 = vmatprep.subr.bf16.mxu0 0
      %824 = vmatpush1.bf16.msra.mxu0 0
      %825 = vmatprep.subr.bf16.mxu0 0
      %826 = vmatpush1.bf16.msra.mxu0 0
      %827 = vmatprep.subr.bf16.mxu0 0
      %828 = vmatpush1.bf16.msra.mxu0 0
      %829 = vmatprep.subr.bf16.mxu0 0
      %830 = vmatpush1.bf16.msra.mxu0 0
      %831 = vmatprep.subr.bf16.mxu0 0
      %832 = vmatpush1.bf16.msra.mxu0 0
      %833 = vmatprep.subr.bf16.mxu0 0
      %834 = vmatpush1.bf16.msra.mxu0 0
      %835 = vmatprep.subr.bf16.mxu0 0
      %836 = vmatpush1.bf16.msra.mxu0 0
      %837 = vmatprep.subr.bf16.mxu0 0
      %838 = vmatpush1.bf16.msra.mxu0 %v821
      %839 = vmatprep.subr.bf16.mxu0 0
      %840 = vmatpush2.bf16.msra.mxu0 0
      %841 = vmatprep.subr.bf16.mxu0 0
      %842 = vmatpush2.bf16.msra.mxu0 0
      %843 = vmatprep.subr.bf16.mxu0 0
      %844 = vmatpush2.bf16.msra.mxu0 0
      %845 = vmatprep.subr.bf16.mxu0 0
      %846 = vmatpush2.bf16.msra.mxu0 0
      %847 = vmatprep.subr.bf16.mxu0 0
      %848 = vmatpush2.bf16.msra.mxu0 0
      %849 = vmatprep.subr.bf16.mxu0 0
      %850 = vmatpush2.bf16.msra.mxu0 0
      %851 = vmatprep.subr.bf16.mxu0 0
      %852 = vmatpush2.bf16.msra.mxu0 0
      %853 = vmatprep.subr.bf16.mxu0 0
      %854 = vmatpush2.bf16.msra.mxu0 0
      %855 = vmatprep.mubr.bf16.mxu0 0
      %856 = vmatmul.mubr.bf16.gmra.mxu0 %v809
      %v857 = vpop.f32.mrf.mxu0
      %v858 = vadd.f32 0.0, %v857
      %v859 = vpop.f32.mrf.mxu0
      %v860 = vpop.f32.mrf.mxu0
      %v861 = vadd.f32 0.0, %v860
      %v862 = vpop.f32.mrf.mxu0
      %863 = vmatprep.mubr.bf16.mxu0 0
      %864 = vmatmul.mubr.bf16.gmra.mxu0 %v812
      %v865 = vpop.f32.mrf.mxu0
      %v866 = vadd.f32 0.0, %v865
      %v867 = vpop.f32.mrf.mxu0
      %v868 = vpop.f32.mrf.mxu0
      %v869 = vadd.f32 0.0, %v868
      %v870 = vpop.f32.mrf.mxu0
      %871 = vmatprep.mubr.bf16.mxu0 0
      %872 = vmatmul.mubr.bf16.gmra.mxu0 %v815
      %v873 = vpop.f32.mrf.mxu0
      %v874 = vadd.f32 0.0, %v873
      %v875 = vpop.f32.mrf.mxu0
      %v876 = vpop.f32.mrf.mxu0
      %v877 = vadd.f32 0.0, %v876
      %v878 = vpop.f32.mrf.mxu0
      %879 = vmatprep.mubr.bf16.mxu0 0
      %880 = vmatmul.mubr.bf16.gmra.mxu0 %v818
      %v881 = vpop.f32.mrf.mxu0
      %v882 = vadd.f32 0.0, %v881
      %v883 = vpop.f32.mrf.mxu0
      %v884 = vpop.f32.mrf.mxu0
      %v885 = vadd.f32 0.0, %v884
      %v886 = vpop.f32.mrf.mxu0
      %887 = vdwg.mxu0
      %v888 = vadd.f32 %v778, %v858
      %v889 = vadd.f32 %v779, %v861
      %v890 = vadd.f32 %v780, %v866
      %v891 = vadd.f32 %v781, %v869
      %v892 = vadd.f32 %v782, %v874
      %v893 = vadd.f32 %v783, %v877
      %v894 = vadd.f32 %v784, %v882
      %v895 = vadd.f32 %v785, %v885
      %s896 = scalar_lea.vmem %s4, 8
      %v897 = vld [vmem:[%s896] sm:$0x3]
      %v906 = vunpack.c.l.b16 %v356
      %v907 = vunpack.c.l.b16 %v357
      %v908 = vunpack.c.l.b16 %v358
      %v909 = vunpack.c.l.b16 %v359
      %v910 = vunpack.c.l.b16 %v360
      %v911 = vunpack.c.l.b16 %v361
      %v912 = vunpack.c.l.b16 %v362
      %v913 = vunpack.c.l.b16 %v363
      %v914 = vpack.c.b16 %v907, %v906
      %v915 = vpack.c.b16 %v909, %v908
      %v916 = vpack.c.b16 %v911, %v910
      %v917 = vpack.c.b16 %v913, %v912
      %v919 = vsel %vm387, %v914, 0
      %v922 = vsel %vm387, %v915, 0
      %v925 = vsel %vm387, %v916, 0
      %v928 = vsel %vm387, %v917, 0
      %v931 = vsel %vm400, %v897, 0
      %933 = vmatprep.subr.bf16.mxu0 0
      %934 = vmatpush1.bf16.msra.mxu0 0
      %935 = vmatprep.subr.bf16.mxu0 0
      %936 = vmatpush1.bf16.msra.mxu0 0
      %937 = vmatprep.subr.bf16.mxu0 0
      %938 = vmatpush1.bf16.msra.mxu0 0
      %939 = vmatprep.subr.bf16.mxu0 0
      %940 = vmatpush1.bf16.msra.mxu0 0
      %941 = vmatprep.subr.bf16.mxu0 0
      %942 = vmatpush1.bf16.msra.mxu0 0
      %943 = vmatprep.subr.bf16.mxu0 0
      %944 = vmatpush1.bf16.msra.mxu0 0
      %945 = vmatprep.subr.bf16.mxu0 0
      %946 = vmatpush1.bf16.msra.mxu0 0
      %947 = vmatprep.subr.bf16.mxu0 0
      %948 = vmatpush1.bf16.msra.mxu0 %v931
      %949 = vmatprep.subr.bf16.mxu0 0
      %950 = vmatpush2.bf16.msra.mxu0 0
      %951 = vmatprep.subr.bf16.mxu0 0
      %952 = vmatpush2.bf16.msra.mxu0 0
      %953 = vmatprep.subr.bf16.mxu0 0
      %954 = vmatpush2.bf16.msra.mxu0 0
      %955 = vmatprep.subr.bf16.mxu0 0
      %956 = vmatpush2.bf16.msra.mxu0 0
      %957 = vmatprep.subr.bf16.mxu0 0
      %958 = vmatpush2.bf16.msra.mxu0 0
      %959 = vmatprep.subr.bf16.mxu0 0
      %960 = vmatpush2.bf16.msra.mxu0 0
      %961 = vmatprep.subr.bf16.mxu0 0
      %962 = vmatpush2.bf16.msra.mxu0 0
      %963 = vmatprep.subr.bf16.mxu0 0
      %964 = vmatpush2.bf16.msra.mxu0 0
      %965 = vmatprep.mubr.bf16.mxu0 0
      %966 = vmatmul.mubr.bf16.gmra.mxu0 %v919
      %v967 = vpop.f32.mrf.mxu0
      %v968 = vadd.f32 0.0, %v967
      %v969 = vpop.f32.mrf.mxu0
      %v970 = vpop.f32.mrf.mxu0
      %v971 = vadd.f32 0.0, %v970
      %v972 = vpop.f32.mrf.mxu0
      %973 = vmatprep.mubr.bf16.mxu0 0
      %974 = vmatmul.mubr.bf16.gmra.mxu0 %v922
      %v975 = vpop.f32.mrf.mxu0
      %v976 = vadd.f32 0.0, %v975
      %v977 = vpop.f32.mrf.mxu0
      %v978 = vpop.f32.mrf.mxu0
      %v979 = vadd.f32 0.0, %v978
      %v980 = vpop.f32.mrf.mxu0
      %981 = vmatprep.mubr.bf16.mxu0 0
      %982 = vmatmul.mubr.bf16.gmra.mxu0 %v925
      %v983 = vpop.f32.mrf.mxu0
      %v984 = vadd.f32 0.0, %v983
      %v985 = vpop.f32.mrf.mxu0
      %v986 = vpop.f32.mrf.mxu0
      %v987 = vadd.f32 0.0, %v986
      %v988 = vpop.f32.mrf.mxu0
      %989 = vmatprep.mubr.bf16.mxu0 0
      %990 = vmatmul.mubr.bf16.gmra.mxu0 %v928
      %v991 = vpop.f32.mrf.mxu0
      %v992 = vadd.f32 0.0, %v991
      %v993 = vpop.f32.mrf.mxu0
      %v994 = vpop.f32.mrf.mxu0
      %v995 = vadd.f32 0.0, %v994
      %v996 = vpop.f32.mrf.mxu0
      %997 = vdwg.mxu0
      %v998 = vadd.f32 %v888, %v968
      %v999 = vadd.f32 %v889, %v971
      %v1000 = vadd.f32 %v890, %v976
      %v1001 = vadd.f32 %v891, %v979
      %v1002 = vadd.f32 %v892, %v984
      %v1003 = vadd.f32 %v893, %v987
      %v1004 = vadd.f32 %v894, %v992
      %v1005 = vadd.f32 %v895, %v995
      %v1007 = vshrl.u32 %v340, 16
      %v1009 = vrot.slane %v1007, 4
      %v1010 = vshll.u32 %v340, 16
      %v1012 = vrot.slane %v1010, 5
      %v1013 = vor.u32 %v1009, %v1012
      %v1014 = vrot.slane %v1013, 4
      %v1016 = vshll.u32 %v341, 16
      %v1018 = vrot.slane %v1016, 5
      %v1019 = vsel %vm571, %v1014, %v1018
      %v1021 = vshrl.u32 %v342, 16
      %v1023 = vrot.slane %v1021, 4
      %v1024 = vshll.u32 %v342, 16
      %v1026 = vrot.slane %v1024, 5
      %v1027 = vor.u32 %v1023, %v1026
      %v1028 = vrot.slane %v1027, 4
      %v1030 = vshll.u32 %v343, 16
      %v1032 = vrot.slane %v1030, 5
      %v1033 = vsel %vm571, %v1028, %v1032
      %v1035 = vshrl.u32 %v344, 16
      %v1037 = vrot.slane %v1035, 4
      %v1038 = vshll.u32 %v344, 16
      %v1040 = vrot.slane %v1038, 5
      %v1041 = vor.u32 %v1037, %v1040
      %v1042 = vrot.slane %v1041, 4
      %v1044 = vshll.u32 %v345, 16
      %v1046 = vrot.slane %v1044, 5
      %v1047 = vsel %vm571, %v1042, %v1046
      %v1049 = vshrl.u32 %v346, 16
      %v1051 = vrot.slane %v1049, 4
      %v1052 = vshll.u32 %v346, 16
      %v1054 = vrot.slane %v1052, 5
      %v1055 = vor.u32 %v1051, %v1054
      %v1056 = vrot.slane %v1055, 4
      %v1058 = vshll.u32 %v347, 16
      %v1060 = vrot.slane %v1058, 5
      %v1061 = vsel %vm571, %v1056, %v1060
      %v1063 = vshrl.u32 %v348, 16
      %v1065 = vrot.slane %v1063, 4
      %v1066 = vshll.u32 %v348, 16
      %v1068 = vrot.slane %v1066, 5
      %v1069 = vor.u32 %v1065, %v1068
      %v1070 = vrot.slane %v1069, 4
      %v1072 = vshll.u32 %v349, 16
      %v1074 = vrot.slane %v1072, 5
      %v1075 = vsel %vm571, %v1070, %v1074
      %v1077 = vshrl.u32 %v350, 16
      %v1079 = vrot.slane %v1077, 4
      %v1080 = vshll.u32 %v350, 16
      %v1082 = vrot.slane %v1080, 5
      %v1083 = vor.u32 %v1079, %v1082
      %v1084 = vrot.slane %v1083, 4
      %v1086 = vshll.u32 %v351, 16
      %v1088 = vrot.slane %v1086, 5
      %v1089 = vsel %vm571, %v1084, %v1088
      %v1091 = vshrl.u32 %v352, 16
      %v1093 = vrot.slane %v1091, 4
      %v1094 = vshll.u32 %v352, 16
      %v1096 = vrot.slane %v1094, 5
      %v1097 = vor.u32 %v1093, %v1096
      %v1098 = vrot.slane %v1097, 4
      %v1100 = vshll.u32 %v353, 16
      %v1102 = vrot.slane %v1100, 5
      %v1103 = vsel %vm571, %v1098, %v1102
      %v1105 = vshrl.u32 %v354, 16
      %v1107 = vrot.slane %v1105, 4
      %v1108 = vshll.u32 %v354, 16
      %v1110 = vrot.slane %v1108, 5
      %v1111 = vor.u32 %v1107, %v1110
      %v1112 = vrot.slane %v1111, 4
      %v1114 = vshll.u32 %v355, 16
      %v1116 = vrot.slane %v1114, 5
      %v1117 = vsel %vm571, %v1112, %v1116
      %s1118 = scalar_lea.vmem %s4, 10
      %v1119 = vld [vmem:[%s1118] sm:$0x3]
      %v1120 = vunpack.c.l.b16 %v1019
      %v1121 = vunpack.c.l.b16 %v1033
      %v1122 = vunpack.c.l.b16 %v1047
      %v1123 = vunpack.c.l.b16 %v1061
      %v1124 = vunpack.c.l.b16 %v1075
      %v1125 = vunpack.c.l.b16 %v1089
      %v1126 = vunpack.c.l.b16 %v1103
      %v1127 = vunpack.c.l.b16 %v1117
      %v1128 = vpack.c.b16 %v1121, %v1120
      %v1129 = vpack.c.b16 %v1123, %v1122
      %v1130 = vpack.c.b16 %v1125, %v1124
      %v1131 = vpack.c.b16 %v1127, %v1126
      %v1133 = vsel %vm387, %v1128, 0
      %v1136 = vsel %vm387, %v1129, 0
      %v1139 = vsel %vm387, %v1130, 0
      %v1142 = vsel %vm387, %v1131, 0
      %v1145 = vsel %vm400, %v1119, 0
      %1147 = vmatprep.subr.bf16.mxu0 0
      %1148 = vmatpush1.bf16.msra.mxu0 0
      %1149 = vmatprep.subr.bf16.mxu0 0
      %1150 = vmatpush1.bf16.msra.mxu0 0
      %1151 = vmatprep.subr.bf16.mxu0 0
      %1152 = vmatpush1.bf16.msra.mxu0 0
      %1153 = vmatprep.subr.bf16.mxu0 0
      %1154 = vmatpush1.bf16.msra.mxu0 0
      %1155 = vmatprep.subr.bf16.mxu0 0
      %1156 = vmatpush1.bf16.msra.mxu0 0
      %1157 = vmatprep.subr.bf16.mxu0 0
      %1158 = vmatpush1.bf16.msra.mxu0 0
      %1159 = vmatprep.subr.bf16.mxu0 0
      %1160 = vmatpush1.bf16.msra.mxu0 0
      %1161 = vmatprep.subr.bf16.mxu0 0
      %1162 = vmatpush1.bf16.msra.mxu0 %v1145
      %1163 = vmatprep.subr.bf16.mxu0 0
      %1164 = vmatpush2.bf16.msra.mxu0 0
      %1165 = vmatprep.subr.bf16.mxu0 0
      %1166 = vmatpush2.bf16.msra.mxu0 0
      %1167 = vmatprep.subr.bf16.mxu0 0
      %1168 = vmatpush2.bf16.msra.mxu0 0
      %1169 = vmatprep.subr.bf16.mxu0 0
      %1170 = vmatpush2.bf16.msra.mxu0 0
      %1171 = vmatprep.subr.bf16.mxu0 0
      %1172 = vmatpush2.bf16.msra.mxu0 0
      %1173 = vmatprep.subr.bf16.mxu0 0
      %1174 = vmatpush2.bf16.msra.mxu0 0
      %1175 = vmatprep.subr.bf16.mxu0 0
      %1176 = vmatpush2.bf16.msra.mxu0 0
      %1177 = vmatprep.subr.bf16.mxu0 0
      %1178 = vmatpush2.bf16.msra.mxu0 0
      %1179 = vmatprep.mubr.bf16.mxu0 0
      %1180 = vmatmul.mubr.bf16.gmra.mxu0 %v1133
      %v1181 = vpop.f32.mrf.mxu0
      %v1182 = vadd.f32 0.0, %v1181
      %v1183 = vpop.f32.mrf.mxu0
      %v1184 = vpop.f32.mrf.mxu0
      %v1185 = vadd.f32 0.0, %v1184
      %v1186 = vpop.f32.mrf.mxu0
      %1187 = vmatprep.mubr.bf16.mxu0 0
      %1188 = vmatmul.mubr.bf16.gmra.mxu0 %v1136
      %v1189 = vpop.f32.mrf.mxu0
      %v1190 = vadd.f32 0.0, %v1189
      %v1191 = vpop.f32.mrf.mxu0
      %v1192 = vpop.f32.mrf.mxu0
      %v1193 = vadd.f32 0.0, %v1192
      %v1194 = vpop.f32.mrf.mxu0
      %1195 = vmatprep.mubr.bf16.mxu0 0
      %1196 = vmatmul.mubr.bf16.gmra.mxu0 %v1139
      %v1197 = vpop.f32.mrf.mxu0
      %v1198 = vadd.f32 0.0, %v1197
      %v1199 = vpop.f32.mrf.mxu0
      %v1200 = vpop.f32.mrf.mxu0
      %v1201 = vadd.f32 0.0, %v1200
      %v1202 = vpop.f32.mrf.mxu0
      %1203 = vmatprep.mubr.bf16.mxu0 0
      %1204 = vmatmul.mubr.bf16.gmra.mxu0 %v1142
      %v1205 = vpop.f32.mrf.mxu0
      %v1206 = vadd.f32 0.0, %v1205
      %v1207 = vpop.f32.mrf.mxu0
      %v1208 = vpop.f32.mrf.mxu0
      %v1209 = vadd.f32 0.0, %v1208
      %v1210 = vpop.f32.mrf.mxu0
      %1211 = vdwg.mxu0
      %v1212 = vadd.f32 %v998, %v1182
      %v1213 = vadd.f32 %v999, %v1185
      %v1214 = vadd.f32 %v1000, %v1190
      %v1215 = vadd.f32 %v1001, %v1193
      %v1216 = vadd.f32 %v1002, %v1198
      %v1217 = vadd.f32 %v1003, %v1201
      %v1218 = vadd.f32 %v1004, %v1206
      %v1219 = vadd.f32 %v1005, %v1209
      %s1220 = scalar_lea.vmem %s4, 12
      %v1221 = vld [vmem:[%s1220] sm:$0x3]
      %v1223 = vunpack.c.l.b16 %v329
      %v1224 = vpack.c.b16 %v479, %v478
      %v1225 = vpack.c.b16 %v481, %v480
      %v1226 = vpack.c.b16 %v483, %v482
      %v1227 = vpack.c.b16 %v1223, %v484
      %v1229 = vsel %vm387, %v1224, 0
      %v1232 = vsel %vm387, %v1225, 0
      %v1235 = vsel %vm387, %v1226, 0
      %v1238 = vsel %vm387, %v1227, 0
      %v1241 = vsel %vm400, %v1221, 0
      %1243 = vmatprep.subr.bf16.mxu0 0
      %1244 = vmatpush1.bf16.msra.mxu0 0
      %1245 = vmatprep.subr.bf16.mxu0 0
      %1246 = vmatpush1.bf16.msra.mxu0 0
      %1247 = vmatprep.subr.bf16.mxu0 0
      %1248 = vmatpush1.bf16.msra.mxu0 0
      %1249 = vmatprep.subr.bf16.mxu0 0
      %1250 = vmatpush1.bf16.msra.mxu0 0
      %1251 = vmatprep.subr.bf16.mxu0 0
      %1252 = vmatpush1.bf16.msra.mxu0 0
      %1253 = vmatprep.subr.bf16.mxu0 0
      %1254 = vmatpush1.bf16.msra.mxu0 0
      %1255 = vmatprep.subr.bf16.mxu0 0
      %1256 = vmatpush1.bf16.msra.mxu0 0
      %1257 = vmatprep.subr.bf16.mxu0 0
      %1258 = vmatpush1.bf16.msra.mxu0 %v1241
      %1259 = vmatprep.subr.bf16.mxu0 0
      %1260 = vmatpush2.bf16.msra.mxu0 0
      %1261 = vmatprep.subr.bf16.mxu0 0
      %1262 = vmatpush2.bf16.msra.mxu0 0
      %1263 = vmatprep.subr.bf16.mxu0 0
      %1264 = vmatpush2.bf16.msra.mxu0 0
      %1265 = vmatprep.subr.bf16.mxu0 0
      %1266 = vmatpush2.bf16.msra.mxu0 0
      %1267 = vmatprep.subr.bf16.mxu0 0
      %1268 = vmatpush2.bf16.msra.mxu0 0
      %1269 = vmatprep.subr.bf16.mxu0 0
      %1270 = vmatpush2.bf16.msra.mxu0 0
      %1271 = vmatprep.subr.bf16.mxu0 0
      %1272 = vmatpush2.bf16.msra.mxu0 0
      %1273 = vmatprep.subr.bf16.mxu0 0
      %1274 = vmatpush2.bf16.msra.mxu0 0
      %1275 = vmatprep.mubr.bf16.mxu0 0
      %1276 = vmatmul.mubr.bf16.gmra.mxu0 %v1229
      %v1277 = vpop.f32.mrf.mxu0
      %v1278 = vadd.f32 0.0, %v1277
      %v1279 = vpop.f32.mrf.mxu0
      %v1280 = vpop.f32.mrf.mxu0
      %v1281 = vadd.f32 0.0, %v1280
      %v1282 = vpop.f32.mrf.mxu0
      %1283 = vmatprep.mubr.bf16.mxu0 0
      %1284 = vmatmul.mubr.bf16.gmra.mxu0 %v1232
      %v1285 = vpop.f32.mrf.mxu0
      %v1286 = vadd.f32 0.0, %v1285
      %v1287 = vpop.f32.mrf.mxu0
      %v1288 = vpop.f32.mrf.mxu0
      %v1289 = vadd.f32 0.0, %v1288
      %v1290 = vpop.f32.mrf.mxu0
      %1291 = vmatprep.mubr.bf16.mxu0 0
      %1292 = vmatmul.mubr.bf16.gmra.mxu0 %v1235
      %v1293 = vpop.f32.mrf.mxu0
      %v1294 = vadd.f32 0.0, %v1293
      %v1295 = vpop.f32.mrf.mxu0
      %v1296 = vpop.f32.mrf.mxu0
      %v1297 = vadd.f32 0.0, %v1296
      %v1298 = vpop.f32.mrf.mxu0
      %1299 = vmatprep.mubr.bf16.mxu0 0
      %1300 = vmatmul.mubr.bf16.gmra.mxu0 %v1238
      %v1301 = vpop.f32.mrf.mxu0
      %v1302 = vadd.f32 0.0, %v1301
      %v1303 = vpop.f32.mrf.mxu0
      %v1304 = vpop.f32.mrf.mxu0
      %v1305 = vadd.f32 0.0, %v1304
      %v1306 = vpop.f32.mrf.mxu0
      %1307 = vdwg.mxu0
      %v1308 = vadd.f32 %v1212, %v1278
      %v1309 = vadd.f32 %v1213, %v1281
      %v1310 = vadd.f32 %v1214, %v1286
      %v1311 = vadd.f32 %v1215, %v1289
      %v1312 = vadd.f32 %v1216, %v1294
      %v1313 = vadd.f32 %v1217, %v1297
      %v1314 = vadd.f32 %v1218, %v1302
      %v1315 = vadd.f32 %v1219, %v1305
      %s1316 = scalar_lea.vmem %s4, 14
      %v1317 = vld [vmem:[%s1316] sm:$0x3]
      %v1319 = vunpack.c.l.b16 %v339
      %v1320 = vpack.c.b16 %v377, %v376
      %v1321 = vpack.c.b16 %v379, %v378
      %v1322 = vpack.c.b16 %v381, %v380
      %v1323 = vpack.c.b16 %v1319, %v382
      %v1325 = vsel %vm387, %v1320, 0
      %v1328 = vsel %vm387, %v1321, 0
      %v1331 = vsel %vm387, %v1322, 0
      %v1334 = vsel %vm387, %v1323, 0
      %v1337 = vsel %vm400, %v1317, 0
      %1339 = vmatprep.subr.bf16.mxu0 0
      %1340 = vmatpush1.bf16.msra.mxu0 0
      %1341 = vmatprep.subr.bf16.mxu0 0
      %1342 = vmatpush1.bf16.msra.mxu0 0
      %1343 = vmatprep.subr.bf16.mxu0 0
      %1344 = vmatpush1.bf16.msra.mxu0 0
      %1345 = vmatprep.subr.bf16.mxu0 0
      %1346 = vmatpush1.bf16.msra.mxu0 0
      %1347 = vmatprep.subr.bf16.mxu0 0
      %1348 = vmatpush1.bf16.msra.mxu0 0
      %1349 = vmatprep.subr.bf16.mxu0 0
      %1350 = vmatpush1.bf16.msra.mxu0 0
      %1351 = vmatprep.subr.bf16.mxu0 0
      %1352 = vmatpush1.bf16.msra.mxu0 0
      %1353 = vmatprep.subr.bf16.mxu0 0
      %1354 = vmatpush1.bf16.msra.mxu0 %v1337
      %1355 = vmatprep.subr.bf16.mxu0 0
      %1356 = vmatpush2.bf16.msra.mxu0 0
      %1357 = vmatprep.subr.bf16.mxu0 0
      %1358 = vmatpush2.bf16.msra.mxu0 0
      %1359 = vmatprep.subr.bf16.mxu0 0
      %1360 = vmatpush2.bf16.msra.mxu0 0
      %1361 = vmatprep.subr.bf16.mxu0 0
      %1362 = vmatpush2.bf16.msra.mxu0 0
      %1363 = vmatprep.subr.bf16.mxu0 0
      %1364 = vmatpush2.bf16.msra.mxu0 0
      %1365 = vmatprep.subr.bf16.mxu0 0
      %1366 = vmatpush2.bf16.msra.mxu0 0
      %1367 = vmatprep.subr.bf16.mxu0 0
      %1368 = vmatpush2.bf16.msra.mxu0 0
      %1369 = vmatprep.subr.bf16.mxu0 0
      %1370 = vmatpush2.bf16.msra.mxu0 0
      %1371 = vmatprep.mubr.bf16.mxu0 0
      %1372 = vmatmul.mubr.bf16.gmra.mxu0 %v1325
      %v1373 = vpop.f32.mrf.mxu0
      %v1374 = vadd.f32 0.0, %v1373
      %v1375 = vpop.f32.mrf.mxu0
      %v1376 = vpop.f32.mrf.mxu0
      %v1377 = vadd.f32 0.0, %v1376
      %v1378 = vpop.f32.mrf.mxu0
      %1379 = vmatprep.mubr.bf16.mxu0 0
      %1380 = vmatmul.mubr.bf16.gmra.mxu0 %v1328
      %v1381 = vpop.f32.mrf.mxu0
      %v1382 = vadd.f32 0.0, %v1381
      %v1383 = vpop.f32.mrf.mxu0
      %v1384 = vpop.f32.mrf.mxu0
      %v1385 = vadd.f32 0.0, %v1384
      %v1386 = vpop.f32.mrf.mxu0
      %1387 = vmatprep.mubr.bf16.mxu0 0
      %1388 = vmatmul.mubr.bf16.gmra.mxu0 %v1331
      %v1389 = vpop.f32.mrf.mxu0
      %v1390 = vadd.f32 0.0, %v1389
      %v1391 = vpop.f32.mrf.mxu0
      %v1392 = vpop.f32.mrf.mxu0
      %v1393 = vadd.f32 0.0, %v1392
      %v1394 = vpop.f32.mrf.mxu0
      %1395 = vmatprep.mubr.bf16.mxu0 0
      %1396 = vmatmul.mubr.bf16.gmra.mxu0 %v1334
      %v1397 = vpop.f32.mrf.mxu0
      %v1398 = vadd.f32 0.0, %v1397
      %v1399 = vpop.f32.mrf.mxu0
      %v1400 = vpop.f32.mrf.mxu0
      %v1401 = vadd.f32 0.0, %v1400
      %v1402 = vpop.f32.mrf.mxu0
      %1403 = vdwg.mxu0
      %v1404 = vadd.f32 %v1308, %v1374
      %v1405 = vadd.f32 %v1309, %v1377
      %v1406 = vadd.f32 %v1310, %v1382
      %v1407 = vadd.f32 %v1311, %v1385
      %v1408 = vadd.f32 %v1312, %v1390
      %v1409 = vadd.f32 %v1313, %v1393
      %v1410 = vadd.f32 %v1314, %v1398
      %v1411 = vadd.f32 %v1315, %v1401
      %v1413 = vshrl.u32 %v329, 16
      %v1415 = vrot.slane %v1413, 4
      %v1416 = vshll.u32 %v329, 16
      %v1418 = vrot.slane %v1416, 5
      %v1419 = vor.u32 %v1415, %v1418
      %v1420 = vrot.slane %v1419, 4
      %v1422 = vshll.u32 %v330, 16
      %v1424 = vrot.slane %v1422, 5
      %v1425 = vsel %vm571, %v1420, %v1424
      %s1426 = scalar_lea.vmem %s4, 16
      %v1427 = vld [vmem:[%s1426] sm:$0x3]
      %v1428 = vunpack.c.l.b16 %v1425
      %v1429 = vpack.c.b16 %v688, %v687
      %v1430 = vpack.c.b16 %v690, %v689
      %v1431 = vpack.c.b16 %v692, %v691
      %v1432 = vpack.c.b16 %v1428, %v693
      %v1434 = vsel %vm387, %v1429, 0
      %v1437 = vsel %vm387, %v1430, 0
      %v1440 = vsel %vm387, %v1431, 0
      %v1443 = vsel %vm387, %v1432, 0
      %v1446 = vsel %vm400, %v1427, 0
      %1448 = vmatprep.subr.bf16.mxu0 0
      %1449 = vmatpush1.bf16.msra.mxu0 0
      %1450 = vmatprep.subr.bf16.mxu0 0
      %1451 = vmatpush1.bf16.msra.mxu0 0
      %1452 = vmatprep.subr.bf16.mxu0 0
      %1453 = vmatpush1.bf16.msra.mxu0 0
      %1454 = vmatprep.subr.bf16.mxu0 0
      %1455 = vmatpush1.bf16.msra.mxu0 0
      %1456 = vmatprep.subr.bf16.mxu0 0
      %1457 = vmatpush1.bf16.msra.mxu0 0
      %1458 = vmatprep.subr.bf16.mxu0 0
      %1459 = vmatpush1.bf16.msra.mxu0 0
      %1460 = vmatprep.subr.bf16.mxu0 0
      %1461 = vmatpush1.bf16.msra.mxu0 0
      %1462 = vmatprep.subr.bf16.mxu0 0
      %1463 = vmatpush1.bf16.msra.mxu0 %v1446
      %1464 = vmatprep.subr.bf16.mxu0 0
      %1465 = vmatpush2.bf16.msra.mxu0 0
      %1466 = vmatprep.subr.bf16.mxu0 0
      %1467 = vmatpush2.bf16.msra.mxu0 0
      %1468 = vmatprep.subr.bf16.mxu0 0
      %1469 = vmatpush2.bf16.msra.mxu0 0
      %1470 = vmatprep.subr.bf16.mxu0 0
      %1471 = vmatpush2.bf16.msra.mxu0 0
      %1472 = vmatprep.subr.bf16.mxu0 0
      %1473 = vmatpush2.bf16.msra.mxu0 0
      %1474 = vmatprep.subr.bf16.mxu0 0
      %1475 = vmatpush2.bf16.msra.mxu0 0
      %1476 = vmatprep.subr.bf16.mxu0 0
      %1477 = vmatpush2.bf16.msra.mxu0 0
      %1478 = vmatprep.subr.bf16.mxu0 0
      %1479 = vmatpush2.bf16.msra.mxu0 0
      %1480 = vmatprep.mubr.bf16.mxu0 0
      %1481 = vmatmul.mubr.bf16.gmra.mxu0 %v1434
      %v1482 = vpop.f32.mrf.mxu0
      %v1483 = vadd.f32 0.0, %v1482
      %v1484 = vpop.f32.mrf.mxu0
      %v1485 = vpop.f32.mrf.mxu0
      %v1486 = vadd.f32 0.0, %v1485
      %v1487 = vpop.f32.mrf.mxu0
      %1488 = vmatprep.mubr.bf16.mxu0 0
      %1489 = vmatmul.mubr.bf16.gmra.mxu0 %v1437
      %v1490 = vpop.f32.mrf.mxu0
      %v1491 = vadd.f32 0.0, %v1490
      %v1492 = vpop.f32.mrf.mxu0
      %v1493 = vpop.f32.mrf.mxu0
      %v1494 = vadd.f32 0.0, %v1493
      %v1495 = vpop.f32.mrf.mxu0
      %1496 = vmatprep.mubr.bf16.mxu0 0
      %1497 = vmatmul.mubr.bf16.gmra.mxu0 %v1440
      %v1498 = vpop.f32.mrf.mxu0
      %v1499 = vadd.f32 0.0, %v1498
      %v1500 = vpop.f32.mrf.mxu0
      %v1501 = vpop.f32.mrf.mxu0
      %v1502 = vadd.f32 0.0, %v1501
      %v1503 = vpop.f32.mrf.mxu0
      %1504 = vmatprep.mubr.bf16.mxu0 0
      %1505 = vmatmul.mubr.bf16.gmra.mxu0 %v1443
      %v1506 = vpop.f32.mrf.mxu0
      %v1507 = vadd.f32 0.0, %v1506
      %v1508 = vpop.f32.mrf.mxu0
      %v1509 = vpop.f32.mrf.mxu0
      %v1510 = vadd.f32 0.0, %v1509
      %v1511 = vpop.f32.mrf.mxu0
      %1512 = vdwg.mxu0
      %v1513 = vadd.f32 %v1404, %v1483
      %v1514 = vadd.f32 %v1405, %v1486
      %v1515 = vadd.f32 %v1406, %v1491
      %v1516 = vadd.f32 %v1407, %v1494
      %v1517 = vadd.f32 %v1408, %v1499
      %v1518 = vadd.f32 %v1409, %v1502
      %v1519 = vadd.f32 %v1410, %v1507
      %v1520 = vadd.f32 %v1411, %v1510
      %v1521 = vld [vmem:[%s5] sm:$0x1]
      %v1523 = vlaneseq
      %v1524 = vshrl.u32 %v1523, 7
      %v1525 = vsub.s32 0, %v1524
      %v1526 = vrot.slane %v1521, %v1525
      %v1528 = vadd.f32 %v1513, %v1526
      %v1529 = vadd.f32 %v1514, %v1526
      %v1530 = vadd.f32 %v1515, %v1526
      %v1531 = vadd.f32 %v1516, %v1526
      %v1532 = vadd.f32 %v1517, %v1526
      %v1533 = vadd.f32 %v1518, %v1526
      %v1534 = vadd.f32 %v1519, %v1526
      %v1535 = vadd.f32 %v1520, %v1526
      %v1536 = vmax.f32 %v1528, 0.0
      %v1537 = vmax.f32 %v1529, 0.0
      %v1538 = vmax.f32 %v1530, 0.0
      %v1539 = vmax.f32 %v1531, 0.0
      %v1540 = vmax.f32 %v1532, 0.0
      %v1541 = vmax.f32 %v1533, 0.0
      %v1542 = vmax.f32 %v1534, 0.0
      %v1543 = vmax.f32 %v1535, 0.0
      %vm1544 = vcmask 60416
      %1545 = vst.msk [vmem:[%s311] sm:$0xf] %vm1544, 0
      %vm1546 = vcmask 57344
      %1547 = vst.msk [vmem:[%s311 + $0x4] sm:$0x1] %vm1546, 0
      %s1548 = scalar_lea.vmem %s311, 72
      %1549 = vst.msk [vmem:[%s1548] sm:$0xf] %vm1544, 0
      %1550 = vst.msk [vmem:[%s1548 + $0x4] sm:$0x1] %vm1546, 0
      %s1551 = scalar_lea.vmem %s311, 8
      %vm1552 = vcmask 57344
      %vm1553 = vsmask.f32 256
      %vm1554 = vmand %vm1552, %vm1553
      %v1555 = vld [vmem:[%s1551] sm:$0x1]
      %v1556 = vsel %vm1554, 0, %v1555
      %1557 = vst [vmem:[%s1551] sm:$0x1] %v1556
      %v1558 = vld [vmem:[%s1551 + $0x8] sm:$0x1]
      %v1559 = vsel %vm1554, 0, %v1558
      %1560 = vst [vmem:[%s1551 + $0x8] sm:$0x1] %v1559
      %v1561 = vld [vmem:[%s1551 + $0x10] sm:$0x1]
      %v1562 = vsel %vm1554, 0, %v1561
      %1563 = vst [vmem:[%s1551 + $0x10] sm:$0x1] %v1562
      %v1564 = vld [vmem:[%s1551 + $0x18] sm:$0x1]
      %v1565 = vsel %vm1554, 0, %v1564
      %1566 = vst [vmem:[%s1551 + $0x18] sm:$0x1] %v1565
      %v1567 = vld [vmem:[%s1551 + $0x20] sm:$0x1]
      %v1568 = vsel %vm1554, 0, %v1567
      %1569 = vst [vmem:[%s1551 + $0x20] sm:$0x1] %v1568
      %v1570 = vld [vmem:[%s1551 + $0x28] sm:$0x1]
      %v1571 = vsel %vm1554, 0, %v1570
      %1572 = vst [vmem:[%s1551 + $0x28] sm:$0x1] %v1571
      %v1573 = vld [vmem:[%s1551 + $0x30] sm:$0x1]
      %v1574 = vsel %vm1554, 0, %v1573
      %1575 = vst [vmem:[%s1551 + $0x30] sm:$0x1] %v1574
      %v1576 = vld [vmem:[%s1551 + $0x38] sm:$0x1]
      %v1577 = vsel %vm1554, 0, %v1576
      %1578 = vst [vmem:[%s1551 + $0x38] sm:$0x1] %v1577
      %vm1579 = vsmask.f32 7938
      %vm1580 = vmand %vm1552, %vm1579
      %v1581 = vld [vmem:[%s1551 + $0x4] sm:$0x1]
      %v1582 = vsel %vm1580, 0, %v1581
      %1583 = vst [vmem:[%s1551 + $0x4] sm:$0x1] %v1582
      %v1584 = vld [vmem:[%s1551 + $0xc] sm:$0x1]
      %v1585 = vsel %vm1580, 0, %v1584
      %1586 = vst [vmem:[%s1551 + $0xc] sm:$0x1] %v1585
      %v1587 = vld [vmem:[%s1551 + $0x14] sm:$0x1]
      %v1588 = vsel %vm1580, 0, %v1587
      %1589 = vst [vmem:[%s1551 + $0x14] sm:$0x1] %v1588
      %v1590 = vld [vmem:[%s1551 + $0x1c] sm:$0x1]
      %v1591 = vsel %vm1580, 0, %v1590
      %1592 = vst [vmem:[%s1551 + $0x1c] sm:$0x1] %v1591
      %v1593 = vld [vmem:[%s1551 + $0x24] sm:$0x1]
      %v1594 = vsel %vm1580, 0, %v1593
      %1595 = vst [vmem:[%s1551 + $0x24] sm:$0x1] %v1594
      %v1596 = vld [vmem:[%s1551 + $0x2c] sm:$0x1]
      %v1597 = vsel %vm1580, 0, %v1596
      %1598 = vst [vmem:[%s1551 + $0x2c] sm:$0x1] %v1597
      %v1599 = vld [vmem:[%s1551 + $0x34] sm:$0x1]
      %v1600 = vsel %vm1580, 0, %v1599
      %1601 = vst [vmem:[%s1551 + $0x34] sm:$0x1] %v1600
      %v1602 = vld [vmem:[%s1551 + $0x3c] sm:$0x1]
      %v1603 = vsel %vm1580, 0, %v1602
      %1604 = vst [vmem:[%s1551 + $0x3c] sm:$0x1] %v1603
      %v1605 = vpack.c.bf16 %v1536, %v1536
      %v1606 = vpack.c.bf16 %v1537, %v1537
      %v1607 = vpack.c.bf16 %v1538, %v1538
      %v1608 = vpack.c.bf16 %v1539, %v1539
      %v1609 = vpack.c.bf16 %v1540, %v1540
      %v1610 = vpack.c.bf16 %v1541, %v1541
      %v1611 = vpack.c.bf16 %v1542, %v1542
      %v1612 = vpack.c.bf16 %v1543, %v1543
      %v1621 = vunpack.c.l.b16 %v1605
      %v1622 = vunpack.c.l.b16 %v1606
      %v1623 = vunpack.c.l.b16 %v1607
      %v1624 = vunpack.c.l.b16 %v1608
      %v1625 = vunpack.c.l.b16 %v1609
      %v1626 = vunpack.c.l.b16 %v1610
      %v1627 = vunpack.c.l.b16 %v1611
      %v1628 = vunpack.c.l.b16 %v1612
      %v1629 = vpack.c.b16 %v1621, %v1621
      %v1630 = vpack.c.b16 %v1622, %v1622
      %v1631 = vpack.c.b16 %v1623, %v1623
      %v1632 = vpack.c.b16 %v1624, %v1624
      %v1633 = vpack.c.b16 %v1625, %v1625
      %v1634 = vpack.c.b16 %v1626, %v1626
      %v1635 = vpack.c.b16 %v1627, %v1627
      %v1636 = vpack.c.b16 %v1628, %v1628
      %v1638 = vshrl.u32 %v1629, 16
      %v1640 = vrot.slane %v1638, 7
      %v1641 = vshll.u32 %v1629, 16
      %v1643 = vor.u32 %v1640, %v1641
      %v1644 = vrot.slane %v1640, 4
      %v1646 = vshrl.u32 %v1630, 16
      %v1648 = vrot.slane %v1646, 7
      %v1649 = vshll.u32 %v1630, 16
      %v1651 = vor.u32 %v1648, %v1649
      %v1652 = vrot.slane %v1648, 4
      %v1654 = vshrl.u32 %v1631, 16
      %v1656 = vrot.slane %v1654, 7
      %v1657 = vshll.u32 %v1631, 16
      %v1659 = vor.u32 %v1656, %v1657
      %v1660 = vrot.slane %v1656, 4
      %v1662 = vshrl.u32 %v1632, 16
      %v1664 = vrot.slane %v1662, 7
      %v1665 = vshll.u32 %v1632, 16
      %v1667 = vor.u32 %v1664, %v1665
      %v1668 = vrot.slane %v1664, 4
      %v1670 = vshrl.u32 %v1633, 16
      %v1672 = vrot.slane %v1670, 7
      %v1673 = vshll.u32 %v1633, 16
      %v1675 = vor.u32 %v1672, %v1673
      %v1676 = vrot.slane %v1672, 4
      %v1678 = vshrl.u32 %v1634, 16
      %v1680 = vrot.slane %v1678, 7
      %v1681 = vshll.u32 %v1634, 16
      %v1683 = vor.u32 %v1680, %v1681
      %v1684 = vrot.slane %v1680, 4
      %v1686 = vshrl.u32 %v1635, 16
      %v1688 = vrot.slane %v1686, 7
      %v1689 = vshll.u32 %v1635, 16
      %v1691 = vor.u32 %v1688, %v1689
      %v1692 = vrot.slane %v1688, 4
      %v1694 = vshrl.u32 %v1636, 16
      %v1696 = vrot.slane %v1694, 7
      %v1697 = vshll.u32 %v1636, 16
      %v1699 = vor.u32 %v1696, %v1697
      %v1700 = vrot.slane %v1696, 4
      %vm1717 = vcmask 60416
      %vm1718 = vmand %vm1717, %vm1579
      %v1719 = vld [vmem:[%s1551] sm:$0xf]
      %v1720 = vsel %vm1718, %v1643, %v1719
      %1721 = vst [vmem:[%s1551] sm:$0xf] %v1720
      %v1722 = vld [vmem:[%s1551 + $0x4] sm:$0x1]
      %v1723 = vsel %vm1554, %v1644, %v1722
      %1724 = vst [vmem:[%s1551 + $0x4] sm:$0x1] %v1723
      %v1725 = vld [vmem:[%s1551 + $0x8] sm:$0xf]
      %v1726 = vsel %vm1718, %v1651, %v1725
      %1727 = vst [vmem:[%s1551 + $0x8] sm:$0xf] %v1726
      %v1728 = vld [vmem:[%s1551 + $0xc] sm:$0x1]
      %v1729 = vsel %vm1554, %v1652, %v1728
      %1730 = vst [vmem:[%s1551 + $0xc] sm:$0x1] %v1729
      %v1731 = vld [vmem:[%s1551 + $0x10] sm:$0xf]
      %v1732 = vsel %vm1718, %v1659, %v1731
      %1733 = vst [vmem:[%s1551 + $0x10] sm:$0xf] %v1732
      %v1734 = vld [vmem:[%s1551 + $0x14] sm:$0x1]
      %v1735 = vsel %vm1554, %v1660, %v1734
      %1736 = vst [vmem:[%s1551 + $0x14] sm:$0x1] %v1735
      %v1737 = vld [vmem:[%s1551 + $0x18] sm:$0xf]
      %v1738 = vsel %vm1718, %v1667, %v1737
      %1739 = vst [vmem:[%s1551 + $0x18] sm:$0xf] %v1738
      %v1740 = vld [vmem:[%s1551 + $0x1c] sm:$0x1]
      %v1741 = vsel %vm1554, %v1668, %v1740
      %1742 = vst [vmem:[%s1551 + $0x1c] sm:$0x1] %v1741
      %v1743 = vld [vmem:[%s1551 + $0x20] sm:$0xf]
      %v1744 = vsel %vm1718, %v1675, %v1743
      %1745 = vst [vmem:[%s1551 + $0x20] sm:$0xf] %v1744
      %v1746 = vld [vmem:[%s1551 + $0x24] sm:$0x1]
      %v1747 = vsel %vm1554, %v1676, %v1746
      %1748 = vst [vmem:[%s1551 + $0x24] sm:$0x1] %v1747
      %v1749 = vld [vmem:[%s1551 + $0x28] sm:$0xf]
      %v1750 = vsel %vm1718, %v1683, %v1749
      %1751 = vst [vmem:[%s1551 + $0x28] sm:$0xf] %v1750
      %v1752 = vld [vmem:[%s1551 + $0x2c] sm:$0x1]
      %v1753 = vsel %vm1554, %v1684, %v1752
      %1754 = vst [vmem:[%s1551 + $0x2c] sm:$0x1] %v1753
      %v1755 = vld [vmem:[%s1551 + $0x30] sm:$0xf]
      %v1756 = vsel %vm1718, %v1691, %v1755
      %1757 = vst [vmem:[%s1551 + $0x30] sm:$0xf] %v1756
      %v1758 = vld [vmem:[%s1551 + $0x34] sm:$0x1]
      %v1759 = vsel %vm1554, %v1692, %v1758
      %1760 = vst [vmem:[%s1551 + $0x34] sm:$0x1] %v1759
      %v1761 = vld [vmem:[%s1551 + $0x38] sm:$0xf]
      %v1762 = vsel %vm1718, %v1699, %v1761
      %1763 = vst [vmem:[%s1551 + $0x38] sm:$0xf] %v1762
      %v1764 = vld [vmem:[%s1551 + $0x3c] sm:$0x1]
      %v1765 = vsel %vm1554, %v1700, %v1764
      %1766 = vst [vmem:[%s1551 + $0x3c] sm:$0x1] %v1765
      %p1767 = scmp.lt.s32.totalorder %s17, 1
      %s1768 = scalar_select %p1767, %s17, 1
      %s1769 = smul.addr %s1768, 20
      %s1770 = smul.addr %s1769, 4
      %s1771 = scalar_lea.vmem %s6, %s1770
      // Predicated region
      $region45: #{discriminator_forward.5} parent=43 // pred_check
        %p1772 = pneg %p181
      $region46: #{discriminator_forward.5} parent=43 // pred_check_branch
        %1774 = sbr.rel (%p1772) target = $region48
      $region47: #{discriminator_forward.5} parent=43 // pred_region
        _
      $region48: #{discriminator_forward.5} parent=43 // pred_fallthru
        _
    $region44: #{discriminator_forward.5} parent=5 // pred_fallthru
      _
    %p1775 = scmp.le.s32.totalorder 2, %s12
    // Predicated region
    $region49: #{discriminator_forward.5} parent=5 // pred_check
      %p1776 = pneg %p1775
    $region50: #{discriminator_forward.5} parent=5 // pred_check_branch
      %1778 = sbr.rel (%p1776) target = $region52
    $region51: #{discriminator_forward.5} parent=5 // pred_region
      %s1779 = ssub.s32 %s12, 2
      // Predicated region
      $region53: #{discriminator_forward.5} parent=51 // pred_check
        %p1780 = pneg %p187
      $region54: #{discriminator_forward.5} parent=51 // pred_check_branch
        %1782 = sbr.rel (%p1780) target = $region56
      $region55: #{discriminator_forward.5} parent=51 // pred_region
        %p1783 = scmp.lt.s32.totalorder %s18, 1
        %s1784 = scalar_select %p1783, %s18, 1
        %s1785 = smul.addr %s1784, 20
        %s1786 = smul.addr %s1785, 4
        %s1787 = scalar_lea.vmem %s6, %s1786
      $region56: #{discriminator_forward.5} parent=51 // pred_fallthru
        _
    $region52: #{discriminator_forward.5} parent=5 // pred_fallthru
      _
  $region6: #{discriminator_forward.5} parent=0 // loop_footer
    %s16 = sadd.s32 1, %s12
  $region7: #{discriminator_forward.5} parent=0 // loop_footer_branch
    %11 = sbr.rel target = $region3
  $region8: #{discriminator_forward.5} parent=0 // loop_exit
    _

// kernel: discriminator_forward.6
$region0: #{discriminator_forward.6}
  #allocation0 [shape = 'u32[]', space=smem, size = 0x4, offset = 0x4, fixed_abs, tag = 'smem constant byte address 0x4 - core index']
  #allocation1 [shape = 'u32[144,128]{1,0:T(1,128)}', space=vmem, size = 0x12000, scoped, tag = 'internal scratch']
  %s0 = inlined_call_operand.vmem [shape: bf16[2,10,10,8], index: 0, kind: input, shape index: {}]
  %s1 = inlined_call_operand.vmem [shape: bf16[9,8,8], index: 1, kind: input, shape index: {}]
  %s2 = inlined_call_operand.vmem [shape: f32[1,8], index: 2, kind: input, shape index: {}]
  %s3 = inlined_call_operand.vmem [shape: bf16[2,10,10,8], index: 3, kind: output, shape index: {}]
  %s4 = sld [smem:[#allocation0]]
  $region45: #{discriminator_forward.6} parent=0
    _
  %s6 = ssub.s32 1, %s4
  %s7 = scalar_select 0, %s6, %s4
  loop: start=0, step=1, limit=4
  $region2: #{discriminator_forward.6} parent=0 // loop_pre_header
    _
  $region3: #{discriminator_forward.6} parent=0 // loop_header
    %s9 = sphi 0, %s13
    %p10 = scmp.ge.s32.totalorder %s9, 4
    %s19 = sphi 0, %s21
    %s22 = sphi 0, %s19
    %s23 = sphi 0, %s22
    %s39 = sphi 0, %s23
    %s43 = sphi 0, %s43
    %s45 = sphi 0, %s43
    %s46 = sphi 0, %s45
    %s60 = sphi 0, %s46
    %s64 = sphi 0, %s64
    %s66 = sphi 0, %s64
    %s67 = sphi 0, %s66
    %s81 = sphi 0, %s67
    %s87 = sphi 0, %s89
    %s90 = sphi 0, %s87
    %s91 = sphi 0, %s90
    %s107 = sphi 0, %s91
  $region4: #{discriminator_forward.6} parent=0 // loop_header_branch
    %12 = sbr.rel (%p10) target = $region8
  $region5: #{discriminator_forward.6} parent=0 // loop_body
    %s14 = ssub.s32 %s9, 1
    %s15 = ssub.s32 %s9, 2
    %s16 = sadd.s32 %s9, 1
    %s17 = ssub.s32 %s9, %s16
    %p18 = scmp.eq.s32.totalorder %s17, 0
    %s20 = sadd.s32 %s19, 1
    %s21 = scalar_select %p18, %s19, %s20
    %p24 = pneg %p18
    %p25 = scmp.eq.s32.totalorder %s9, 1
    %p26 = por %p24, %p25
    %p27 = scmp.ne.s32.totalorder %s19, %s22
    %p28 = scmp.eq.s32.totalorder %s9, 0
    %p29 = por %p27, %p28
    %p30 = scmp.ne.s32.totalorder %s19, %s22
    %p31 = scmp.eq.s32.totalorder %s14, 1
    %p32 = por %p30, %p31
    %p33 = scmp.ne.s32.totalorder %s22, %s23
    %p34 = scmp.eq.s32.totalorder %s14, 0
    %p35 = por %p33, %p34
    %p36 = scmp.ne.s32.totalorder %s22, %s23
    %p37 = scmp.eq.s32.totalorder %s15, 1
    %p38 = por %p36, %p37
    %p40 = scmp.ne.s32.totalorder %s23, %s39
    %p41 = scmp.eq.s32.totalorder %s15, 0
    %p42 = por %p40, %p41
    %s44 = sadd.s32 %s43, 1
    %p47 = scmp.eq.s32.totalorder %s9, 1
    %p48 = scmp.ne.s32.totalorder %s43, %s45
    %p49 = scmp.eq.s32.totalorder %s9, 0
    %p50 = por %p48, %p49
    %p51 = scmp.ne.s32.totalorder %s43, %s45
    %p52 = scmp.eq.s32.totalorder %s14, 1
    %p53 = por %p51, %p52
    %p54 = scmp.ne.s32.totalorder %s45, %s46
    %p55 = scmp.eq.s32.totalorder %s14, 0
    %p56 = por %p54, %p55
    %p57 = scmp.ne.s32.totalorder %s45, %s46
    %p58 = scmp.eq.s32.totalorder %s15, 1
    %p59 = por %p57, %p58
    %p61 = scmp.ne.s32.totalorder %s46, %s60
    %p62 = scmp.eq.s32.totalorder %s15, 0
    %p63 = por %p61, %p62
    %s65 = sadd.s32 %s64, 1
    %p68 = scmp.eq.s32.totalorder %s9, 1
    %p69 = scmp.ne.s32.totalorder %s64, %s66
    %p70 = scmp.eq.s32.totalorder %s9, 0
    %p71 = por %p69, %p70
    %p72 = scmp.ne.s32.totalorder %s64, %s66
    %p73 = scmp.eq.s32.totalorder %s14, 1
    %p74 = por %p72, %p73
    %p75 = scmp.ne.s32.totalorder %s66, %s67
    %p76 = scmp.eq.s32.totalorder %s14, 0
    %p77 = por %p75, %p76
    %p78 = scmp.ne.s32.totalorder %s66, %s67
    %p79 = scmp.eq.s32.totalorder %s15, 1
    %p80 = por %p78, %p79
    %p82 = scmp.ne.s32.totalorder %s67, %s81
    %p83 = scmp.eq.s32.totalorder %s15, 0
    %p84 = por %p82, %p83
    %s85 = ssub.s32 %s9, %s16
    %p86 = scmp.eq.s32.totalorder %s85, 0
    %s88 = sadd.s32 %s87, 1
    %s89 = scalar_select %p86, %s87, %s88
    %p92 = pneg %p86
    %p93 = scmp.eq.s32.totalorder %s9, 1
    %p94 = por %p92, %p93
    %p95 = scmp.ne.s32.totalorder %s87, %s90
    %p96 = scmp.eq.s32.totalorder %s9, 0
    %p97 = por %p95, %p96
    %p98 = scmp.ne.s32.totalorder %s87, %s90
    %p99 = scmp.eq.s32.totalorder %s14, 1
    %p100 = por %p98, %p99
    %p101 = scmp.ne.s32.totalorder %s90, %s91
    %p102 = scmp.eq.s32.totalorder %s14, 0
    %p103 = por %p101, %p102
    %p104 = scmp.ne.s32.totalorder %s90, %s91
    %p105 = scmp.eq.s32.totalorder %s15, 1
    %p106 = por %p104, %p105
    %p108 = scmp.ne.s32.totalorder %s91, %s107
    %p109 = scmp.eq.s32.totalorder %s15, 0
    %p110 = por %p108, %p109
    %p111 = scmp.le.s32.totalorder 1, %s9
    %p112 = scmp.lt.s32.totalorder %s9, 3
    %p113 = pnand %p111, %p112
    %p114 = pneg %p113
    // Predicated region
    $region9: #{discriminator_forward.6} parent=5 // pred_check
      _
    $region10: #{discriminator_forward.6} parent=5 // pred_check_branch
      %116 = sbr.rel (%p113) target = $region12
    $region11: #{discriminator_forward.6} parent=5 // pred_region
      %s117 = ssub.s32 %s9, 1
      // Predicated region
      $region13: #{discriminator_forward.6} parent=11 // pred_check
        %p118 = pneg %p56
      $region14: #{discriminator_forward.6} parent=11 // pred_check_branch
        %120 = sbr.rel (%p118) target = $region16
      $region15: #{discriminator_forward.6} parent=11 // pred_region
        _
      $region16: #{discriminator_forward.6} parent=11 // pred_fallthru
        _
      // Predicated region
      $region17: #{discriminator_forward.6} parent=11 // pred_check
        %p121 = pneg %p77
      $region18: #{discriminator_forward.6} parent=11 // pred_check_branch
        %123 = sbr.rel (%p121) target = $region20
      $region19: #{discriminator_forward.6} parent=11 // pred_region
        _
      $region20: #{discriminator_forward.6} parent=11 // pred_fallthru
        _
    $region12: #{discriminator_forward.6} parent=5 // pred_fallthru
      _
    %p124 = scmp.lt.s32.totalorder %s9, 2
    // Predicated region
    $region21: #{discriminator_forward.6} parent=5 // pred_check
      %p125 = pneg %p124
    $region22: #{discriminator_forward.6} parent=5 // pred_check_branch
      %127 = sbr.rel (%p125) target = $region24
    $region23: #{discriminator_forward.6} parent=5 // pred_region
      // Predicated region
      $region25: #{discriminator_forward.6} parent=23 // pred_check
        %p128 = pneg %p29
      $region26: #{discriminator_forward.6} parent=23 // pred_check_branch
        %130 = sbr.rel (%p128) target = $region28
      $region27: #{discriminator_forward.6} parent=23 // pred_region
        %p131 = scmp.lt.s32.totalorder %s9, 1
        %s132 = scalar_select %p131, %s9, 1
        %s133 = smul.addr %s132, 20
        %s134 = smul.addr %s133, 4
        %s135 = scalar_lea.vmem %s0, %s134
      $region28: #{discriminator_forward.6} parent=23 // pred_fallthru
        _
    $region24: #{discriminator_forward.6} parent=5 // pred_fallthru
      _
    %p136 = scmp.le.s32.totalorder 1, %s9
    %p137 = scmp.lt.s32.totalorder %s9, 3
    %p138 = pnand %p136, %p137
    %p139 = pneg %p138
    // Predicated region
    $region29: #{discriminator_forward.6} parent=5 // pred_check
      _
    $region30: #{discriminator_forward.6} parent=5 // pred_check_branch
      %141 = sbr.rel (%p138) target = $region32
    $region31: #{discriminator_forward.6} parent=5 // pred_region
      %s142 = ssub.s32 %s9, 1
      %p143 = scmp.lt.s32.totalorder %s14, 1
      %s144 = scalar_select %p143, %s14, 1
      %s145 = smul.addr %s144, 20
      %s146 = smul.addr %s145, 4
      %s147 = scalar_lea.vmem %s0, %s146
      %p148 = pneg %p35
      %p149 = pneg %p32
      %p150 = pneg %p56
      %p151 = pneg %p53
      %p152 = pneg %p77
      %p153 = pneg %p74
      %p154 = pneg %p103
      %p155 = pneg %p100
      %p156 = scmp.lt.s32.totalorder %s14, 1
      %s157 = scalar_select %p156, %s14, 1
      %s158 = smul.addr %s157, 20
      %s159 = smul.addr %s158, 4
      %s160 = scalar_lea.vmem %s3, %s159
      %p161 = scmp.lt.s32.totalorder %s14, 1
      %s162 = scalar_select %p161, %s14, 1
      %s163 = smul.addr %s162, 20
      %s164 = smul.addr %s163, 4
      %s165 = scalar_lea.vmem %s0, %s164
      %p166 = scmp.lt.s32.totalorder %s14, 1
      %s167 = scalar_select %p166, %s14, 1
      %s168 = smul.addr %s167, 20
      %s169 = smul.addr %s168, 4
      %s170 = scalar_lea.vmem %s3, %s169
      %v172 = vld [vmem:[%s165] sm:$0xf]
      %v173 = vld [vmem:[%s165 + $0x4] sm:$0x1]
      %v174 = vld [vmem:[%s165 + $0x8] sm:$0xf]
      %v175 = vld [vmem:[%s165 + $0xc] sm:$0x1]
      %v176 = vld [vmem:[%s165 + $0x10] sm:$0xf]
      %v177 = vld [vmem:[%s165 + $0x14] sm:$0x1]
      %v178 = vld [vmem:[%s165 + $0x18] sm:$0xf]
      %v179 = vld [vmem:[%s165 + $0x1c] sm:$0x1]
      %v180 = vld [vmem:[%s165 + $0x20] sm:$0xf]
      %v181 = vld [vmem:[%s165 + $0x24] sm:$0x1]
      %v182 = vld [vmem:[%s165 + $0x28] sm:$0xf]
      %v183 = vld [vmem:[%s165 + $0x2c] sm:$0x1]
      %v184 = vld [vmem:[%s165 + $0x30] sm:$0xf]
      %v185 = vld [vmem:[%s165 + $0x34] sm:$0x1]
      %v186 = vld [vmem:[%s165 + $0x38] sm:$0xf]
      %v187 = vld [vmem:[%s165 + $0x3c] sm:$0x1]
      %v188 = vld [vmem:[%s165 + $0x40] sm:$0xf]
      %v189 = vld [vmem:[%s165 + $0x44] sm:$0x1]
      %v190 = vld [vmem:[%s165 + $0x48] sm:$0xf]
      %v191 = vld [vmem:[%s165 + $0x4c] sm:$0x1]
      %v192 = vld [vmem:[%s1] sm:$0xf]
      %vm193 = vsmask.f32 3328
      %vm194 = vsmask.f32 7440
      %vm195 = vmor %vm193, %vm194
      %v197 = vshrl.u32 %v172, 16
      %v199 = vrot.slane %v197, 4
      %v200 = vshll.u32 %v172, 16
      %v202 = vrot.slane %v200, 5
      %v203 = vor.u32 %v199, %v202
      %v204 = vrot.slane %v203, 4
      %v206 = vshll.u32 %v173, 16
      %v208 = vrot.slane %v206, 5
      %v209 = vsel %vm195, %v204, %v208
      %v211 = vshrl.u32 %v174, 16
      %v213 = vrot.slane %v211, 4
      %v214 = vshll.u32 %v174, 16
      %v216 = vrot.slane %v214, 5
      %v217 = vor.u32 %v213, %v216
      %v218 = vrot.slane %v217, 4
      %v220 = vshll.u32 %v175, 16
      %v222 = vrot.slane %v220, 5
      %v223 = vsel %vm195, %v218, %v222
      %v225 = vshrl.u32 %v176, 16
      %v227 = vrot.slane %v225, 4
      %v228 = vshll.u32 %v176, 16
      %v230 = vrot.slane %v228, 5
      %v231 = vor.u32 %v227, %v230
      %v232 = vrot.slane %v231, 4
      %v234 = vshll.u32 %v177, 16
      %v236 = vrot.slane %v234, 5
      %v237 = vsel %vm195, %v232, %v236
      %v239 = vshrl.u32 %v178, 16
      %v241 = vrot.slane %v239, 4
      %v242 = vshll.u32 %v178, 16
      %v244 = vrot.slane %v242, 5
      %v245 = vor.u32 %v241, %v244
      %v246 = vrot.slane %v245, 4
      %v248 = vshll.u32 %v179, 16
      %v250 = vrot.slane %v248, 5
      %v251 = vsel %vm195, %v246, %v250
      %v253 = vshrl.u32 %v180, 16
      %v255 = vrot.slane %v253, 4
      %v256 = vshll.u32 %v180, 16
      %v258 = vrot.slane %v256, 5
      %v259 = vor.u32 %v255, %v258
      %v260 = vrot.slane %v259, 4
      %v262 = vshll.u32 %v181, 16
      %v264 = vrot.slane %v262, 5
      %v265 = vsel %vm195, %v260, %v264
      %v267 = vshrl.u32 %v182, 16
      %v269 = vrot.slane %v267, 4
      %v270 = vshll.u32 %v182, 16
      %v272 = vrot.slane %v270, 5
      %v273 = vor.u32 %v269, %v272
      %v274 = vrot.slane %v273, 4
      %v276 = vshll.u32 %v183, 16
      %v278 = vrot.slane %v276, 5
      %v279 = vsel %vm195, %v274, %v278
      %v281 = vshrl.u32 %v184, 16
      %v283 = vrot.slane %v281, 4
      %v284 = vshll.u32 %v184, 16
      %v286 = vrot.slane %v284, 5
      %v287 = vor.u32 %v283, %v286
      %v288 = vrot.slane %v287, 4
      %v290 = vshll.u32 %v185, 16
      %v292 = vrot.slane %v290, 5
      %v293 = vsel %vm195, %v288, %v292
      %v295 = vshrl.u32 %v186, 16
      %v297 = vrot.slane %v295, 4
      %v298 = vshll.u32 %v186, 16
      %v300 = vrot.slane %v298, 5
      %v301 = vor.u32 %v297, %v300
      %v302 = vrot.slane %v301, 4
      %v304 = vshll.u32 %v187, 16
      %v306 = vrot.slane %v304, 5
      %v307 = vsel %vm195, %v302, %v306
      %s308 = scalar_lea.vmem %s1, 4
      %v309 = vld [vmem:[%s308] sm:$0xf]
      %v310 = vunpack.c.l.b16 %v209
      %v311 = vunpack.c.l.b16 %v223
      %v312 = vunpack.c.l.b16 %v237
      %v313 = vunpack.c.l.b16 %v251
      %v314 = vunpack.c.l.b16 %v265
      %v315 = vunpack.c.l.b16 %v279
      %v316 = vunpack.c.l.b16 %v293
      %v317 = vunpack.c.l.b16 %v307
      %v318 = vpack.c.b16 %v311, %v310
      %v319 = vpack.c.b16 %v313, %v312
      %v320 = vpack.c.b16 %v315, %v314
      %v321 = vpack.c.b16 %v317, %v316
      %vm322 = vcmask 64512
      %v324 = vsel %vm322, %v318, 0
      %v327 = vsel %vm322, %v319, 0
      %v330 = vsel %vm322, %v320, 0
      %v333 = vsel %vm322, %v321, 0
      %vm335 = vcmask 1043456
      %v337 = vsel %vm335, %v309, 0
      %339 = vmatprep.subr.bf16.mxu0 0
      %340 = vmatpush1.bf16.msra.mxu0 0
      %341 = vmatprep.subr.bf16.mxu0 0
      %342 = vmatpush1.bf16.msra.mxu0 0
      %343 = vmatprep.subr.bf16.mxu0 0
      %344 = vmatpush1.bf16.msra.mxu0 0
      %345 = vmatprep.subr.bf16.mxu0 0
      %346 = vmatpush1.bf16.msra.mxu0 0
      %347 = vmatprep.subr.bf16.mxu0 0
      %348 = vmatpush1.bf16.msra.mxu0 0
      %349 = vmatprep.subr.bf16.mxu0 0
      %350 = vmatpush1.bf16.msra.mxu0 0
      %351 = vmatprep.subr.bf16.mxu0 0
      %352 = vmatpush1.bf16.msra.mxu0 0
      %353 = vmatprep.subr.bf16.mxu0 0
      %354 = vmatpush1.bf16.msra.mxu0 %v337
      %355 = vmatprep.subr.bf16.mxu0 0
      %356 = vmatpush2.bf16.msra.mxu0 0
      %357 = vmatprep.subr.bf16.mxu0 0
      %358 = vmatpush2.bf16.msra.mxu0 0
      %359 = vmatprep.subr.bf16.mxu0 0
      %360 = vmatpush2.bf16.msra.mxu0 0
      %361 = vmatprep.subr.bf16.mxu0 0
      %362 = vmatpush2.bf16.msra.mxu0 0
      %363 = vmatprep.subr.bf16.mxu0 0
      %364 = vmatpush2.bf16.msra.mxu0 0
      %365 = vmatprep.subr.bf16.mxu0 0
      %366 = vmatpush2.bf16.msra.mxu0 0
      %367 = vmatprep.subr.bf16.mxu0 0
      %368 = vmatpush2.bf16.msra.mxu0 0
      %369 = vmatprep.subr.bf16.mxu0 0
      %370 = vmatpush2.bf16.msra.mxu0 0
      %371 = vmatprep.mubr.bf16.mxu0 0
      %372 = vmatmul.mubr.bf16.gmra.mxu0 %v324
      %v373 = vpop.f32.mrf.mxu0
      %v374 = vadd.f32 0.0, %v373
      %v375 = vpop.f32.mrf.mxu0
      %v376 = vpop.f32.mrf.mxu0
      %v377 = vadd.f32 0.0, %v376
      %v378 = vpop.f32.mrf.mxu0
      %379 = vmatprep.mubr.bf16.mxu0 0
      %380 = vmatmul.mubr.bf16.gmra.mxu0 %v327
      %v381 = vpop.f32.mrf.mxu0
      %v382 = vadd.f32 0.0, %v381
      %v383 = vpop.f32.mrf.mxu0
      %v384 = vpop.f32.mrf.mxu0
      %v385 = vadd.f32 0.0, %v384
      %v386 = vpop.f32.mrf.mxu0
      %387 = vmatprep.mubr.bf16.mxu0 0
      %388 = vmatmul.mubr.bf16.gmra.mxu0 %v330
      %v389 = vpop.f32.mrf.mxu0
      %v390 = vadd.f32 0.0, %v389
      %v391 = vpop.f32.mrf.mxu0
      %v392 = vpop.f32.mrf.mxu0
      %v393 = vadd.f32 0.0, %v392
      %v394 = vpop.f32.mrf.mxu0
      %395 = vmatprep.mubr.bf16.mxu0 0
      %396 = vmatmul.mubr.bf16.gmra.mxu0 %v333
      %v397 = vpop.f32.mrf.mxu0
      %v398 = vadd.f32 0.0, %v397
      %v399 = vpop.f32.mrf.mxu0
      %v400 = vpop.f32.mrf.mxu0
      %v401 = vadd.f32 0.0, %v400
      %v402 = vpop.f32.mrf.mxu0
      %403 = vdwg.mxu0
      %v412 = vunpack.c.l.b16 %v172
      %v413 = vunpack.c.l.b16 %v174
      %v414 = vunpack.c.l.b16 %v176
      %v415 = vunpack.c.l.b16 %v178
      %v416 = vunpack.c.l.b16 %v180
      %v417 = vunpack.c.l.b16 %v182
      %v418 = vunpack.c.l.b16 %v184
      %v419 = vunpack.c.l.b16 %v186
      %v420 = vpack.c.b16 %v413, %v412
      %v421 = vpack.c.b16 %v415, %v414
      %v422 = vpack.c.b16 %v417, %v416
      %v423 = vpack.c.b16 %v419, %v418
      %v425 = vsel %vm322, %v420, 0
      %v428 = vsel %vm322, %v421, 0
      %v431 = vsel %vm322, %v422, 0
      %v434 = vsel %vm322, %v423, 0
      %v437 = vsel %vm335, %v192, 0
      %439 = vmatprep.subr.bf16.mxu0 0
      %440 = vmatpush1.bf16.msra.mxu0 0
      %441 = vmatprep.subr.bf16.mxu0 0
      %442 = vmatpush1.bf16.msra.mxu0 0
      %443 = vmatprep.subr.bf16.mxu0 0
      %444 = vmatpush1.bf16.msra.mxu0 0
      %445 = vmatprep.subr.bf16.mxu0 0
      %446 = vmatpush1.bf16.msra.mxu0 0
      %447 = vmatprep.subr.bf16.mxu0 0
      %448 = vmatpush1.bf16.msra.mxu0 0
      %449 = vmatprep.subr.bf16.mxu0 0
      %450 = vmatpush1.bf16.msra.mxu0 0
      %451 = vmatprep.subr.bf16.mxu0 0
      %452 = vmatpush1.bf16.msra.mxu0 0
      %453 = vmatprep.subr.bf16.mxu0 0
      %454 = vmatpush1.bf16.msra.mxu0 %v437
      %455 = vmatprep.subr.bf16.mxu0 0
      %456 = vmatpush2.bf16.msra.mxu0 0
      %457 = vmatprep.subr.bf16.mxu0 0
      %458 = vmatpush2.bf16.msra.mxu0 0
      %459 = vmatprep.subr.bf16.mxu0 0
      %460 = vmatpush2.bf16.msra.mxu0 0
      %461 = vmatprep.subr.bf16.mxu0 0
      %462 = vmatpush2.bf16.msra.mxu0 0
      %463 = vmatprep.subr.bf16.mxu0 0
      %464 = vmatpush2.bf16.msra.mxu0 0
      %465 = vmatprep.subr.bf16.mxu0 0
      %466 = vmatpush2.bf16.msra.mxu0 0
      %467 = vmatprep.subr.bf16.mxu0 0
      %468 = vmatpush2.bf16.msra.mxu0 0
      %469 = vmatprep.subr.bf16.mxu0 0
      %470 = vmatpush2.bf16.msra.mxu0 0
      %471 = vmatprep.mubr.bf16.mxu0 0
      %472 = vmatmul.mubr.bf16.gmra.mxu0 %v425
      %v473 = vpop.f32.mrf.mxu0
      %v474 = vadd.f32 %v374, %v473
      %v475 = vpop.f32.mrf.mxu0
      %v476 = vpop.f32.mrf.mxu0
      %v477 = vadd.f32 %v377, %v476
      %v478 = vpop.f32.mrf.mxu0
      %479 = vmatprep.mubr.bf16.mxu0 0
      %480 = vmatmul.mubr.bf16.gmra.mxu0 %v428
      %v481 = vpop.f32.mrf.mxu0
      %v482 = vadd.f32 %v382, %v481
      %v483 = vpop.f32.mrf.mxu0
      %v484 = vpop.f32.mrf.mxu0
      %v485 = vadd.f32 %v385, %v484
      %v486 = vpop.f32.mrf.mxu0
      %487 = vmatprep.mubr.bf16.mxu0 0
      %488 = vmatmul.mubr.bf16.gmra.mxu0 %v431
      %v489 = vpop.f32.mrf.mxu0
      %v490 = vadd.f32 %v390, %v489
      %v491 = vpop.f32.mrf.mxu0
      %v492 = vpop.f32.mrf.mxu0
      %v493 = vadd.f32 %v393, %v492
      %v494 = vpop.f32.mrf.mxu0
      %495 = vmatprep.mubr.bf16.mxu0 0
      %496 = vmatmul.mubr.bf16.gmra.mxu0 %v434
      %v497 = vpop.f32.mrf.mxu0
      %v498 = vadd.f32 %v398, %v497
      %v499 = vpop.f32.mrf.mxu0
      %v500 = vpop.f32.mrf.mxu0
      %v501 = vadd.f32 %v401, %v500
      %v502 = vpop.f32.mrf.mxu0
      %503 = vdwg.mxu0
      %vm512 = vcmask 1042432
      %vm513 = vcmask 1046532
      %vm514 = vmor %vm512, %vm513
      %v515 = vrot.slane %v172, 5
      %v516 = vrot.slane %v515, 4
      %v517 = vrot.slane %v173, 5
      %v518 = vsel %vm514, %v516, %v517
      %v519 = vrot.slane %v174, 5
      %v520 = vrot.slane %v519, 4
      %v521 = vrot.slane %v175, 5
      %v522 = vsel %vm514, %v520, %v521
      %v523 = vrot.slane %v176, 5
      %v524 = vrot.slane %v523, 4
      %v525 = vrot.slane %v177, 5
      %v526 = vsel %vm514, %v524, %v525
      %v527 = vrot.slane %v178, 5
      %v528 = vrot.slane %v527, 4
      %v529 = vrot.slane %v179, 5
      %v530 = vsel %vm514, %v528, %v529
      %v531 = vrot.slane %v180, 5
      %v532 = vrot.slane %v531, 4
      %v533 = vrot.slane %v181, 5
      %v534 = vsel %vm514, %v532, %v533
      %v535 = vrot.slane %v182, 5
      %v536 = vrot.slane %v535, 4
      %v537 = vrot.slane %v183, 5
      %v538 = vsel %vm514, %v536, %v537
      %v539 = vrot.slane %v184, 5
      %v540 = vrot.slane %v539, 4
      %v541 = vrot.slane %v185, 5
      %v542 = vsel %vm514, %v540, %v541
      %v543 = vrot.slane %v186, 5
      %v544 = vrot.slane %v543, 4
      %v545 = vrot.slane %v187, 5
      %v546 = vsel %vm514, %v544, %v545
      %s547 = scalar_lea.vmem %s1, 8
      %v548 = vld [vmem:[%s547] sm:$0xf]
      %v549 = vunpack.c.l.b16 %v518
      %v550 = vunpack.c.l.b16 %v522
      %v551 = vunpack.c.l.b16 %v526
      %v552 = vunpack.c.l.b16 %v530
      %v553 = vunpack.c.l.b16 %v534
      %v554 = vunpack.c.l.b16 %v538
      %v555 = vunpack.c.l.b16 %v542
      %v556 = vunpack.c.l.b16 %v546
      %v557 = vpack.c.b16 %v550, %v549
      %v558 = vpack.c.b16 %v552, %v551
      %v559 = vpack.c.b16 %v554, %v553
      %v560 = vpack.c.b16 %v556, %v555
      %v562 = vsel %vm322, %v557, 0
      %v565 = vsel %vm322, %v558, 0
      %v568 = vsel %vm322, %v559, 0
      %v571 = vsel %vm322, %v560, 0
      %v574 = vsel %vm335, %v548, 0
      %576 = vmatprep.subr.bf16.mxu0 0
      %577 = vmatpush1.bf16.msra.mxu0 0
      %578 = vmatprep.subr.bf16.mxu0 0
      %579 = vmatpush1.bf16.msra.mxu0 0
      %580 = vmatprep.subr.bf16.mxu0 0
      %581 = vmatpush1.bf16.msra.mxu0 0
      %582 = vmatprep.subr.bf16.mxu0 0
      %583 = vmatpush1.bf16.msra.mxu0 0
      %584 = vmatprep.subr.bf16.mxu0 0
      %585 = vmatpush1.bf16.msra.mxu0 0
      %586 = vmatprep.subr.bf16.mxu0 0
      %587 = vmatpush1.bf16.msra.mxu0 0
      %588 = vmatprep.subr.bf16.mxu0 0
      %589 = vmatpush1.bf16.msra.mxu0 0
      %590 = vmatprep.subr.bf16.mxu0 0
      %591 = vmatpush1.bf16.msra.mxu0 %v574
      %592 = vmatprep.subr.bf16.mxu0 0
      %593 = vmatpush2.bf16.msra.mxu0 0
      %594 = vmatprep.subr.bf16.mxu0 0
      %595 = vmatpush2.bf16.msra.mxu0 0
      %596 = vmatprep.subr.bf16.mxu0 0
      %597 = vmatpush2.bf16.msra.mxu0 0
      %598 = vmatprep.subr.bf16.mxu0 0
      %599 = vmatpush2.bf16.msra.mxu0 0
      %600 = vmatprep.subr.bf16.mxu0 0
      %601 = vmatpush2.bf16.msra.mxu0 0
      %602 = vmatprep.subr.bf16.mxu0 0
      %603 = vmatpush2.bf16.msra.mxu0 0
      %604 = vmatprep.subr.bf16.mxu0 0
      %605 = vmatpush2.bf16.msra.mxu0 0
      %606 = vmatprep.subr.bf16.mxu0 0
      %607 = vmatpush2.bf16.msra.mxu0 0
      %608 = vmatprep.mubr.bf16.mxu0 0
      %609 = vmatmul.mubr.bf16.gmra.mxu0 %v562
      %v610 = vpop.f32.mrf.mxu0
      %v611 = vadd.f32 0.0, %v610
      %v612 = vpop.f32.mrf.mxu0
      %v613 = vpop.f32.mrf.mxu0
      %v614 = vadd.f32 0.0, %v613
      %v615 = vpop.f32.mrf.mxu0
      %616 = vmatprep.mubr.bf16.mxu0 0
      %617 = vmatmul.mubr.bf16.gmra.mxu0 %v565
      %v618 = vpop.f32.mrf.mxu0
      %v619 = vadd.f32 0.0, %v618
      %v620 = vpop.f32.mrf.mxu0
      %v621 = vpop.f32.mrf.mxu0
      %v622 = vadd.f32 0.0, %v621
      %v623 = vpop.f32.mrf.mxu0
      %624 = vmatprep.mubr.bf16.mxu0 0
      %625 = vmatmul.mubr.bf16.gmra.mxu0 %v568
      %v626 = vpop.f32.mrf.mxu0
      %v627 = vadd.f32 0.0, %v626
      %v628 = vpop.f32.mrf.mxu0
      %v629 = vpop.f32.mrf.mxu0
      %v630 = vadd.f32 0.0, %v629
      %v631 = vpop.f32.mrf.mxu0
      %632 = vmatprep.mubr.bf16.mxu0 0
      %633 = vmatmul.mubr.bf16.gmra.mxu0 %v571
      %v634 = vpop.f32.mrf.mxu0
      %v635 = vadd.f32 0.0, %v634
      %v636 = vpop.f32.mrf.mxu0
      %v637 = vpop.f32.mrf.mxu0
      %v638 = vadd.f32 0.0, %v637
      %v639 = vpop.f32.mrf.mxu0
      %640 = vdwg.mxu0
      %v641 = vadd.f32 %v474, %v611
      %v642 = vadd.f32 %v477, %v614
      %v643 = vadd.f32 %v482, %v619
      %v644 = vadd.f32 %v485, %v622
      %v645 = vadd.f32 %v490, %v627
      %v646 = vadd.f32 %v493, %v630
      %v647 = vadd.f32 %v498, %v635
      %v648 = vadd.f32 %v501, %v638
      %s649 = scalar_lea.vmem %s1, 12
      %v650 = vld [vmem:[%s649] sm:$0xf]
      %v652 = vunpack.c.l.b16 %v188
      %v653 = vpack.c.b16 %v414, %v413
      %v654 = vpack.c.b16 %v416, %v415
      %v655 = vpack.c.b16 %v418, %v417
      %v656 = vpack.c.b16 %v652, %v419
      %v658 = vsel %vm322, %v653, 0
      %v661 = vsel %vm322, %v654, 0
      %v664 = vsel %vm322, %v655, 0
      %v667 = vsel %vm322, %v656, 0
      %v670 = vsel %vm335, %v650, 0
      %672 = vmatprep.subr.bf16.mxu0 0
      %673 = vmatpush1.bf16.msra.mxu0 0
      %674 = vmatprep.subr.bf16.mxu0 0
      %675 = vmatpush1.bf16.msra.mxu0 0
      %676 = vmatprep.subr.bf16.mxu0 0
      %677 = vmatpush1.bf16.msra.mxu0 0
      %678 = vmatprep.subr.bf16.mxu0 0
      %679 = vmatpush1.bf16.msra.mxu0 0
      %680 = vmatprep.subr.bf16.mxu0 0
      %681 = vmatpush1.bf16.msra.mxu0 0
      %682 = vmatprep.subr.bf16.mxu0 0
      %683 = vmatpush1.bf16.msra.mxu0 0
      %684 = vmatprep.subr.bf16.mxu0 0
      %685 = vmatpush1.bf16.msra.mxu0 0
      %686 = vmatprep.subr.bf16.mxu0 0
      %687 = vmatpush1.bf16.msra.mxu0 %v670
      %688 = vmatprep.subr.bf16.mxu0 0
      %689 = vmatpush2.bf16.msra.mxu0 0
      %690 = vmatprep.subr.bf16.mxu0 0
      %691 = vmatpush2.bf16.msra.mxu0 0
      %692 = vmatprep.subr.bf16.mxu0 0
      %693 = vmatpush2.bf16.msra.mxu0 0
      %694 = vmatprep.subr.bf16.mxu0 0
      %695 = vmatpush2.bf16.msra.mxu0 0
      %696 = vmatprep.subr.bf16.mxu0 0
      %697 = vmatpush2.bf16.msra.mxu0 0
      %698 = vmatprep.subr.bf16.mxu0 0
      %699 = vmatpush2.bf16.msra.mxu0 0
      %700 = vmatprep.subr.bf16.mxu0 0
      %701 = vmatpush2.bf16.msra.mxu0 0
      %702 = vmatprep.subr.bf16.mxu0 0
      %703 = vmatpush2.bf16.msra.mxu0 0
      %704 = vmatprep.mubr.bf16.mxu0 0
      %705 = vmatmul.mubr.bf16.gmra.mxu0 %v658
      %v706 = vpop.f32.mrf.mxu0
      %v707 = vadd.f32 0.0, %v706
      %v708 = vpop.f32.mrf.mxu0
      %v709 = vpop.f32.mrf.mxu0
      %v710 = vadd.f32 0.0, %v709
      %v711 = vpop.f32.mrf.mxu0
      %712 = vmatprep.mubr.bf16.mxu0 0
      %713 = vmatmul.mubr.bf16.gmra.mxu0 %v661
      %v714 = vpop.f32.mrf.mxu0
      %v715 = vadd.f32 0.0, %v714
      %v716 = vpop.f32.mrf.mxu0
      %v717 = vpop.f32.mrf.mxu0
      %v718 = vadd.f32 0.0, %v717
      %v719 = vpop.f32.mrf.mxu0
      %720 = vmatprep.mubr.bf16.mxu0 0
      %721 = vmatmul.mubr.bf16.gmra.mxu0 %v664
      %v722 = vpop.f32.mrf.mxu0
      %v723 = vadd.f32 0.0, %v722
      %v724 = vpop.f32.mrf.mxu0
      %v725 = vpop.f32.mrf.mxu0
      %v726 = vadd.f32 0.0, %v725
      %v727 = vpop.f32.mrf.mxu0
      %728 = vmatprep.mubr.bf16.mxu0 0
      %729 = vmatmul.mubr.bf16.gmra.mxu0 %v667
      %v730 = vpop.f32.mrf.mxu0
      %v731 = vadd.f32 0.0, %v730
      %v732 = vpop.f32.mrf.mxu0
      %v733 = vpop.f32.mrf.mxu0
      %v734 = vadd.f32 0.0, %v733
      %v735 = vpop.f32.mrf.mxu0
      %736 = vdwg.mxu0
      %v737 = vadd.f32 %v641, %v707
      %v738 = vadd.f32 %v642, %v710
      %v739 = vadd.f32 %v643, %v715
      %v740 = vadd.f32 %v644, %v718
      %v741 = vadd.f32 %v645, %v723
      %v742 = vadd.f32 %v646, %v726
      %v743 = vadd.f32 %v647, %v731
      %v744 = vadd.f32 %v648, %v734
      %v746 = vshrl.u32 %v188, 16
      %v748 = vrot.slane %v746, 4
      %v749 = vshll.u32 %v188, 16
      %v751 = vrot.slane %v749, 5
      %v752 = vor.u32 %v748, %v751
      %v753 = vrot.slane %v752, 4
      %v755 = vshll.u32 %v189, 16
      %v757 = vrot.slane %v755, 5
      %v758 = vsel %vm195, %v753, %v757
      %s759 = scalar_lea.vmem %s1, 16
      %v760 = vld [vmem:[%s759] sm:$0xf]
      %v761 = vunpack.c.l.b16 %v758
      %v762 = vpack.c.b16 %v312, %v311
      %v763 = vpack.c.b16 %v314, %v313
      %v764 = vpack.c.b16 %v316, %v315
      %v765 = vpack.c.b16 %v761, %v317
      %v767 = vsel %vm322, %v762, 0
      %v770 = vsel %vm322, %v763, 0
      %v773 = vsel %vm322, %v764, 0
      %v776 = vsel %vm322, %v765, 0
      %v779 = vsel %vm335, %v760, 0
      %781 = vmatprep.subr.bf16.mxu0 0
      %782 = vmatpush1.bf16.msra.mxu0 0
      %783 = vmatprep.subr.bf16.mxu0 0
      %784 = vmatpush1.bf16.msra.mxu0 0
      %785 = vmatprep.subr.bf16.mxu0 0
      %786 = vmatpush1.bf16.msra.mxu0 0
      %787 = vmatprep.subr.bf16.mxu0 0
      %788 = vmatpush1.bf16.msra.mxu0 0
      %789 = vmatprep.subr.bf16.mxu0 0
      %790 = vmatpush1.bf16.msra.mxu0 0
      %791 = vmatprep.subr.bf16.mxu0 0
      %792 = vmatpush1.bf16.msra.mxu0 0
      %793 = vmatprep.subr.bf16.mxu0 0
      %794 = vmatpush1.bf16.msra.mxu0 0
      %795 = vmatprep.subr.bf16.mxu0 0
      %796 = vmatpush1.bf16.msra.mxu0 %v779
      %797 = vmatprep.subr.bf16.mxu0 0
      %798 = vmatpush2.bf16.msra.mxu0 0
      %799 = vmatprep.subr.bf16.mxu0 0
      %800 = vmatpush2.bf16.msra.mxu0 0
      %801 = vmatprep.subr.bf16.mxu0 0
      %802 = vmatpush2.bf16.msra.mxu0 0
      %803 = vmatprep.subr.bf16.mxu0 0
      %804 = vmatpush2.bf16.msra.mxu0 0
      %805 = vmatprep.subr.bf16.mxu0 0
      %806 = vmatpush2.bf16.msra.mxu0 0
      %807 = vmatprep.subr.bf16.mxu0 0
      %808 = vmatpush2.bf16.msra.mxu0 0
      %809 = vmatprep.subr.bf16.mxu0 0
      %810 = vmatpush2.bf16.msra.mxu0 0
      %811 = vmatprep.subr.bf16.mxu0 0
      %812 = vmatpush2.bf16.msra.mxu0 0
      %813 = vmatprep.mubr.bf16.mxu0 0
      %814 = vmatmul.mubr.bf16.gmra.mxu0 %v767
      %v815 = vpop.f32.mrf.mxu0
      %v816 = vadd.f32 0.0, %v815
      %v817 = vpop.f32.mrf.mxu0
      %v818 = vpop.f32.mrf.mxu0
      %v819 = vadd.f32 0.0, %v818
      %v820 = vpop.f32.mrf.mxu0
      %821 = vmatprep.mubr.bf16.mxu0 0
      %822 = vmatmul.mubr.bf16.gmra.mxu0 %v770
      %v823 = vpop.f32.mrf.mxu0
      %v824 = vadd.f32 0.0, %v823
      %v825 = vpop.f32.mrf.mxu0
      %v826 = vpop.f32.mrf.mxu0
      %v827 = vadd.f32 0.0, %v826
      %v828 = vpop.f32.mrf.mxu0
      %829 = vmatprep.mubr.bf16.mxu0 0
      %830 = vmatmul.mubr.bf16.gmra.mxu0 %v773
      %v831 = vpop.f32.mrf.mxu0
      %v832 = vadd.f32 0.0, %v831
      %v833 = vpop.f32.mrf.mxu0
      %v834 = vpop.f32.mrf.mxu0
      %v835 = vadd.f32 0.0, %v834
      %v836 = vpop.f32.mrf.mxu0
      %837 = vmatprep.mubr.bf16.mxu0 0
      %838 = vmatmul.mubr.bf16.gmra.mxu0 %v776
      %v839 = vpop.f32.mrf.mxu0
      %v840 = vadd.f32 0.0, %v839
      %v841 = vpop.f32.mrf.mxu0
      %v842 = vpop.f32.mrf.mxu0
      %v843 = vadd.f32 0.0, %v842
      %v844 = vpop.f32.mrf.mxu0
      %845 = vdwg.mxu0
      %v846 = vadd.f32 %v737, %v816
      %v847 = vadd.f32 %v738, %v819
      %v848 = vadd.f32 %v739, %v824
      %v849 = vadd.f32 %v740, %v827
      %v850 = vadd.f32 %v741, %v832
      %v851 = vadd.f32 %v742, %v835
      %v852 = vadd.f32 %v743, %v840
      %v853 = vadd.f32 %v744, %v843
      %v855 = vrot.slane %v188, 5
      %v856 = vrot.slane %v855, 4
      %v857 = vrot.slane %v189, 5
      %v858 = vsel %vm514, %v856, %v857
      %s859 = scalar_lea.vmem %s1, 20
      %v860 = vld [vmem:[%s859] sm:$0xf]
      %v861 = vunpack.c.l.b16 %v858
      %v862 = vpack.c.b16 %v551, %v550
      %v863 = vpack.c.b16 %v553, %v552
      %v864 = vpack.c.b16 %v555, %v554
      %v865 = vpack.c.b16 %v861, %v556
      %v867 = vsel %vm322, %v862, 0
      %v870 = vsel %vm322, %v863, 0
      %v873 = vsel %vm322, %v864, 0
      %v876 = vsel %vm322, %v865, 0
      %v879 = vsel %vm335, %v860, 0
      %881 = vmatprep.subr.bf16.mxu0 0
      %882 = vmatpush1.bf16.msra.mxu0 0
      %883 = vmatprep.subr.bf16.mxu0 0
      %884 = vmatpush1.bf16.msra.mxu0 0
      %885 = vmatprep.subr.bf16.mxu0 0
      %886 = vmatpush1.bf16.msra.mxu0 0
      %887 = vmatprep.subr.bf16.mxu0 0
      %888 = vmatpush1.bf16.msra.mxu0 0
      %889 = vmatprep.subr.bf16.mxu0 0
      %890 = vmatpush1.bf16.msra.mxu0 0
      %891 = vmatprep.subr.bf16.mxu0 0
      %892 = vmatpush1.bf16.msra.mxu0 0
      %893 = vmatprep.subr.bf16.mxu0 0
      %894 = vmatpush1.bf16.msra.mxu0 0
      %895 = vmatprep.subr.bf16.mxu0 0
      %896 = vmatpush1.bf16.msra.mxu0 %v879
      %897 = vmatprep.subr.bf16.mxu0 0
      %898 = vmatpush2.bf16.msra.mxu0 0
      %899 = vmatprep.subr.bf16.mxu0 0
      %900 = vmatpush2.bf16.msra.mxu0 0
      %901 = vmatprep.subr.bf16.mxu0 0
      %902 = vmatpush2.bf16.msra.mxu0 0
      %903 = vmatprep.subr.bf16.mxu0 0
      %904 = vmatpush2.bf16.msra.mxu0 0
      %905 = vmatprep.subr.bf16.mxu0 0
      %906 = vmatpush2.bf16.msra.mxu0 0
      %907 = vmatprep.subr.bf16.mxu0 0
      %908 = vmatpush2.bf16.msra.mxu0 0
      %909 = vmatprep.subr.bf16.mxu0 0
      %910 = vmatpush2.bf16.msra.mxu0 0
      %911 = vmatprep.subr.bf16.mxu0 0
      %912 = vmatpush2.bf16.msra.mxu0 0
      %913 = vmatprep.mubr.bf16.mxu0 0
      %914 = vmatmul.mubr.bf16.gmra.mxu0 %v867
      %v915 = vpop.f32.mrf.mxu0
      %v916 = vadd.f32 0.0, %v915
      %v917 = vpop.f32.mrf.mxu0
      %v918 = vpop.f32.mrf.mxu0
      %v919 = vadd.f32 0.0, %v918
      %v920 = vpop.f32.mrf.mxu0
      %921 = vmatprep.mubr.bf16.mxu0 0
      %922 = vmatmul.mubr.bf16.gmra.mxu0 %v870
      %v923 = vpop.f32.mrf.mxu0
      %v924 = vadd.f32 0.0, %v923
      %v925 = vpop.f32.mrf.mxu0
      %v926 = vpop.f32.mrf.mxu0
      %v927 = vadd.f32 0.0, %v926
      %v928 = vpop.f32.mrf.mxu0
      %929 = vmatprep.mubr.bf16.mxu0 0
      %930 = vmatmul.mubr.bf16.gmra.mxu0 %v873
      %v931 = vpop.f32.mrf.mxu0
      %v932 = vadd.f32 0.0, %v931
      %v933 = vpop.f32.mrf.mxu0
      %v934 = vpop.f32.mrf.mxu0
      %v935 = vadd.f32 0.0, %v934
      %v936 = vpop.f32.mrf.mxu0
      %937 = vmatprep.mubr.bf16.mxu0 0
      %938 = vmatmul.mubr.bf16.gmra.mxu0 %v876
      %v939 = vpop.f32.mrf.mxu0
      %v940 = vadd.f32 0.0, %v939
      %v941 = vpop.f32.mrf.mxu0
      %v942 = vpop.f32.mrf.mxu0
      %v943 = vadd.f32 0.0, %v942
      %v944 = vpop.f32.mrf.mxu0
      %945 = vdwg.mxu0
      %v946 = vadd.f32 %v846, %v916
      %v947 = vadd.f32 %v847, %v919
      %v948 = vadd.f32 %v848, %v924
      %v949 = vadd.f32 %v849, %v927
      %v950 = vadd.f32 %v850, %v932
      %v951 = vadd.f32 %v851, %v935
      %v952 = vadd.f32 %v852, %v940
      %v953 = vadd.f32 %v853, %v943
      %s954 = scalar_lea.vmem %s1, 24
      %v955 = vld [vmem:[%s954] sm:$0xf]
      %v957 = vunpack.c.l.b16 %v190
      %v958 = vpack.c.b16 %v957, %v652
      %v960 = vsel %vm322, %v958, 0
      %v963 = vsel %vm335, %v955, 0
      %965 = vmatprep.subr.bf16.mxu0 0
      %966 = vmatpush1.bf16.msra.mxu0 0
      %967 = vmatprep.subr.bf16.mxu0 0
      %968 = vmatpush1.bf16.msra.mxu0 0
      %969 = vmatprep.subr.bf16.mxu0 0
      %970 = vmatpush1.bf16.msra.mxu0 0
      %971 = vmatprep.subr.bf16.mxu0 0
      %972 = vmatpush1.bf16.msra.mxu0 0
      %973 = vmatprep.subr.bf16.mxu0 0
      %974 = vmatpush1.bf16.msra.mxu0 0
      %975 = vmatprep.subr.bf16.mxu0 0
      %976 = vmatpush1.bf16.msra.mxu0 0
      %977 = vmatprep.subr.bf16.mxu0 0
      %978 = vmatpush1.bf16.msra.mxu0 0
      %979 = vmatprep.subr.bf16.mxu0 0
      %980 = vmatpush1.bf16.msra.mxu0 %v963
      %981 = vmatprep.subr.bf16.mxu0 0
      %982 = vmatpush2.bf16.msra.mxu0 0
      %983 = vmatprep.subr.bf16.mxu0 0
      %984 = vmatpush2.bf16.msra.mxu0 0
      %985 = vmatprep.subr.bf16.mxu0 0
      %986 = vmatpush2.bf16.msra.mxu0 0
      %987 = vmatprep.subr.bf16.mxu0 0
      %988 = vmatpush2.bf16.msra.mxu0 0
      %989 = vmatprep.subr.bf16.mxu0 0
      %990 = vmatpush2.bf16.msra.mxu0 0
      %991 = vmatprep.subr.bf16.mxu0 0
      %992 = vmatpush2.bf16.msra.mxu0 0
      %993 = vmatprep.subr.bf16.mxu0 0
      %994 = vmatpush2.bf16.msra.mxu0 0
      %995 = vmatprep.subr.bf16.mxu0 0
      %996 = vmatpush2.bf16.msra.mxu0 0
      %997 = vmatprep.mubr.bf16.mxu0 0
      %998 = vmatmul.mubr.bf16.gmra.mxu0 %v428
      %v999 = vpop.f32.mrf.mxu0
      %v1000 = vadd.f32 0.0, %v999
      %v1001 = vpop.f32.mrf.mxu0
      %v1002 = vpop.f32.mrf.mxu0
      %v1003 = vadd.f32 0.0, %v1002
      %v1004 = vpop.f32.mrf.mxu0
      %1005 = vmatprep.mubr.bf16.mxu0 0
      %1006 = vmatmul.mubr.bf16.gmra.mxu0 %v431
      %v1007 = vpop.f32.mrf.mxu0
      %v1008 = vadd.f32 0.0, %v1007
      %v1009 = vpop.f32.mrf.mxu0
      %v1010 = vpop.f32.mrf.mxu0
      %v1011 = vadd.f32 0.0, %v1010
      %v1012 = vpop.f32.mrf.mxu0
      %1013 = vmatprep.mubr.bf16.mxu0 0
      %1014 = vmatmul.mubr.bf16.gmra.mxu0 %v434
      %v1015 = vpop.f32.mrf.mxu0
      %v1016 = vadd.f32 0.0, %v1015
      %v1017 = vpop.f32.mrf.mxu0
      %v1018 = vpop.f32.mrf.mxu0
      %v1019 = vadd.f32 0.0, %v1018
      %v1020 = vpop.f32.mrf.mxu0
      %1021 = vmatprep.mubr.bf16.mxu0 0
      %1022 = vmatmul.mubr.bf16.gmra.mxu0 %v960
      %v1023 = vpop.f32.mrf.mxu0
      %v1024 = vadd.f32 0.0, %v1023
      %v1025 = vpop.f32.mrf.mxu0
      %v1026 = vpop.f32.mrf.mxu0
      %v1027 = vadd.f32 0.0, %v1026
      %v1028 = vpop.f32.mrf.mxu0
      %1029 = vdwg.mxu0
      %v1030 = vadd.f32 %v946, %v1000
      %v1031 = vadd.f32 %v947, %v1003
      %v1032 = vadd.f32 %v948, %v1008
      %v1033 = vadd.f32 %v949, %v1011
      %v1034 = vadd.f32 %v950, %v1016
      %v1035 = vadd.f32 %v951, %v1019
      %v1036 = vadd.f32 %v952, %v1024
      %v1037 = vadd.f32 %v953, %v1027
      %v1039 = vshrl.u32 %v190, 16
      %v1041 = vrot.slane %v1039, 4
      %v1042 = vshll.u32 %v190, 16
      %v1044 = vrot.slane %v1042, 5
      %v1045 = vor.u32 %v1041, %v1044
      %v1046 = vrot.slane %v1045, 4
      %v1048 = vshll.u32 %v191, 16
      %v1050 = vrot.slane %v1048, 5
      %v1051 = vsel %vm195, %v1046, %v1050
      %s1052 = scalar_lea.vmem %s1, 28
      %v1053 = vld [vmem:[%s1052] sm:$0xf]
      %v1054 = vunpack.c.l.b16 %v1051
      %v1055 = vpack.c.b16 %v1054, %v761
      %v1057 = vsel %vm322, %v1055, 0
      %v1060 = vsel %vm335, %v1053, 0
      %1062 = vmatprep.subr.bf16.mxu0 0
      %1063 = vmatpush1.bf16.msra.mxu0 0
      %1064 = vmatprep.subr.bf16.mxu0 0
      %1065 = vmatpush1.bf16.msra.mxu0 0
      %1066 = vmatprep.subr.bf16.mxu0 0
      %1067 = vmatpush1.bf16.msra.mxu0 0
      %1068 = vmatprep.subr.bf16.mxu0 0
      %1069 = vmatpush1.bf16.msra.mxu0 0
      %1070 = vmatprep.subr.bf16.mxu0 0
      %1071 = vmatpush1.bf16.msra.mxu0 0
      %1072 = vmatprep.subr.bf16.mxu0 0
      %1073 = vmatpush1.bf16.msra.mxu0 0
      %1074 = vmatprep.subr.bf16.mxu0 0
      %1075 = vmatpush1.bf16.msra.mxu0 0
      %1076 = vmatprep.subr.bf16.mxu0 0
      %1077 = vmatpush1.bf16.msra.mxu0 %v1060
      %1078 = vmatprep.subr.bf16.mxu0 0
      %1079 = vmatpush2.bf16.msra.mxu0 0
      %1080 = vmatprep.subr.bf16.mxu0 0
      %1081 = vmatpush2.bf16.msra.mxu0 0
      %1082 = vmatprep.subr.bf16.mxu0 0
      %1083 = vmatpush2.bf16.msra.mxu0 0
      %1084 = vmatprep.subr.bf16.mxu0 0
      %1085 = vmatpush2.bf16.msra.mxu0 0
      %1086 = vmatprep.subr.bf16.mxu0 0
      %1087 = vmatpush2.bf16.msra.mxu0 0
      %1088 = vmatprep.subr.bf16.mxu0 0
      %1089 = vmatpush2.bf16.msra.mxu0 0
      %1090 = vmatprep.subr.bf16.mxu0 0
      %1091 = vmatpush2.bf16.msra.mxu0 0
      %1092 = vmatprep.subr.bf16.mxu0 0
      %1093 = vmatpush2.bf16.msra.mxu0 0
      %1094 = vmatprep.mubr.bf16.mxu0 0
      %1095 = vmatmul.mubr.bf16.gmra.mxu0 %v327
      %v1096 = vpop.f32.mrf.mxu0
      %v1097 = vadd.f32 0.0, %v1096
      %v1098 = vpop.f32.mrf.mxu0
      %v1099 = vpop.f32.mrf.mxu0
      %v1100 = vadd.f32 0.0, %v1099
      %v1101 = vpop.f32.mrf.mxu0
      %1102 = vmatprep.mubr.bf16.mxu0 0
      %1103 = vmatmul.mubr.bf16.gmra.mxu0 %v330
      %v1104 = vpop.f32.mrf.mxu0
      %v1105 = vadd.f32 0.0, %v1104
      %v1106 = vpop.f32.mrf.mxu0
      %v1107 = vpop.f32.mrf.mxu0
      %v1108 = vadd.f32 0.0, %v1107
      %v1109 = vpop.f32.mrf.mxu0
      %1110 = vmatprep.mubr.bf16.mxu0 0
      %1111 = vmatmul.mubr.bf16.gmra.mxu0 %v333
      %v1112 = vpop.f32.mrf.mxu0
      %v1113 = vadd.f32 0.0, %v1112
      %v1114 = vpop.f32.mrf.mxu0
      %v1115 = vpop.f32.mrf.mxu0
      %v1116 = vadd.f32 0.0, %v1115
      %v1117 = vpop.f32.mrf.mxu0
      %1118 = vmatprep.mubr.bf16.mxu0 0
      %1119 = vmatmul.mubr.bf16.gmra.mxu0 %v1057
      %v1120 = vpop.f32.mrf.mxu0
      %v1121 = vadd.f32 0.0, %v1120
      %v1122 = vpop.f32.mrf.mxu0
      %v1123 = vpop.f32.mrf.mxu0
      %v1124 = vadd.f32 0.0, %v1123
      %v1125 = vpop.f32.mrf.mxu0
      %1126 = vdwg.mxu0
      %v1127 = vadd.f32 %v1030, %v1097
      %v1128 = vadd.f32 %v1031, %v1100
      %v1129 = vadd.f32 %v1032, %v1105
      %v1130 = vadd.f32 %v1033, %v1108
      %v1131 = vadd.f32 %v1034, %v1113
      %v1132 = vadd.f32 %v1035, %v1116
      %v1133 = vadd.f32 %v1036, %v1121
      %v1134 = vadd.f32 %v1037, %v1124
      %v1136 = vrot.slane %v190, 5
      %v1137 = vrot.slane %v1136, 4
      %v1138 = vrot.slane %v191, 5
      %v1139 = vsel %vm514, %v1137, %v1138
      %s1140 = scalar_lea.vmem %s1, 32
      %v1141 = vld [vmem:[%s1140] sm:$0xf]
      %v1142 = vunpack.c.l.b16 %v1139
      %v1143 = vpack.c.b16 %v1142, %v861
      %v1145 = vsel %vm322, %v1143, 0
      %v1148 = vsel %vm335, %v1141, 0
      %1150 = vmatprep.subr.bf16.mxu0 0
      %1151 = vmatpush1.bf16.msra.mxu0 0
      %1152 = vmatprep.subr.bf16.mxu0 0
      %1153 = vmatpush1.bf16.msra.mxu0 0
      %1154 = vmatprep.subr.bf16.mxu0 0
      %1155 = vmatpush1.bf16.msra.mxu0 0
      %1156 = vmatprep.subr.bf16.mxu0 0
      %1157 = vmatpush1.bf16.msra.mxu0 0
      %1158 = vmatprep.subr.bf16.mxu0 0
      %1159 = vmatpush1.bf16.msra.mxu0 0
      %1160 = vmatprep.subr.bf16.mxu0 0
      %1161 = vmatpush1.bf16.msra.mxu0 0
      %1162 = vmatprep.subr.bf16.mxu0 0
      %1163 = vmatpush1.bf16.msra.mxu0 0
      %1164 = vmatprep.subr.bf16.mxu0 0
      %1165 = vmatpush1.bf16.msra.mxu0 %v1148
      %1166 = vmatprep.subr.bf16.mxu0 0
      %1167 = vmatpush2.bf16.msra.mxu0 0
      %1168 = vmatprep.subr.bf16.mxu0 0
      %1169 = vmatpush2.bf16.msra.mxu0 0
      %1170 = vmatprep.subr.bf16.mxu0 0
      %1171 = vmatpush2.bf16.msra.mxu0 0
      %1172 = vmatprep.subr.bf16.mxu0 0
      %1173 = vmatpush2.bf16.msra.mxu0 0
      %1174 = vmatprep.subr.bf16.mxu0 0
      %1175 = vmatpush2.bf16.msra.mxu0 0
      %1176 = vmatprep.subr.bf16.mxu0 0
      %1177 = vmatpush2.bf16.msra.mxu0 0
      %1178 = vmatprep.subr.bf16.mxu0 0
      %1179 = vmatpush2.bf16.msra.mxu0 0
      %1180 = vmatprep.subr.bf16.mxu0 0
      %1181 = vmatpush2.bf16.msra.mxu0 0
      %1182 = vmatprep.mubr.bf16.mxu0 0
      %1183 = vmatmul.mubr.bf16.gmra.mxu0 %v565
      %v1184 = vpop.f32.mrf.mxu0
      %v1185 = vadd.f32 0.0, %v1184
      %v1186 = vpop.f32.mrf.mxu0
      %v1187 = vpop.f32.mrf.mxu0
      %v1188 = vadd.f32 0.0, %v1187
      %v1189 = vpop.f32.mrf.mxu0
      %1190 = vmatprep.mubr.bf16.mxu0 0
      %1191 = vmatmul.mubr.bf16.gmra.mxu0 %v568
      %v1192 = vpop.f32.mrf.mxu0
      %v1193 = vadd.f32 0.0, %v1192
      %v1194 = vpop.f32.mrf.mxu0
      %v1195 = vpop.f32.mrf.mxu0
      %v1196 = vadd.f32 0.0, %v1195
      %v1197 = vpop.f32.mrf.mxu0
      %1198 = vmatprep.mubr.bf16.mxu0 0
      %1199 = vmatmul.mubr.bf16.gmra.mxu0 %v571
      %v1200 = vpop.f32.mrf.mxu0
      %v1201 = vadd.f32 0.0, %v1200
      %v1202 = vpop.f32.mrf.mxu0
      %v1203 = vpop.f32.mrf.mxu0
      %v1204 = vadd.f32 0.0, %v1203
      %v1205 = vpop.f32.mrf.mxu0
      %1206 = vmatprep.mubr.bf16.mxu0 0
      %1207 = vmatmul.mubr.bf16.gmra.mxu0 %v1145
      %v1208 = vpop.f32.mrf.mxu0
      %v1209 = vadd.f32 0.0, %v1208
      %v1210 = vpop.f32.mrf.mxu0
      %v1211 = vpop.f32.mrf.mxu0
      %v1212 = vadd.f32 0.0, %v1211
      %v1213 = vpop.f32.mrf.mxu0
      %1214 = vdwg.mxu0
      %v1215 = vadd.f32 %v1127, %v1185
      %v1216 = vadd.f32 %v1128, %v1188
      %v1217 = vadd.f32 %v1129, %v1193
      %v1218 = vadd.f32 %v1130, %v1196
      %v1219 = vadd.f32 %v1131, %v1201
      %v1220 = vadd.f32 %v1132, %v1204
      %v1221 = vadd.f32 %v1133, %v1209
      %v1222 = vadd.f32 %v1134, %v1212
      %v1223 = vld [vmem:[%s2] sm:$0x1]
      %v1225 = vlaneseq
      %v1226 = vshrl.u32 %v1225, 7
      %v1227 = vsub.s32 0, %v1226
      %v1228 = vrot.slane %v1223, %v1227
      %v1230 = vadd.f32 %v1215, %v1228
      %v1231 = vadd.f32 %v1216, %v1228
      %v1232 = vadd.f32 %v1217, %v1228
      %v1233 = vadd.f32 %v1218, %v1228
      %v1234 = vadd.f32 %v1219, %v1228
      %v1235 = vadd.f32 %v1220, %v1228
      %v1236 = vadd.f32 %v1221, %v1228
      %v1237 = vadd.f32 %v1222, %v1228
      %v1238 = vmax.f32 %v1230, 0.0
      %v1239 = vmax.f32 %v1231, 0.0
      %v1240 = vmax.f32 %v1232, 0.0
      %v1241 = vmax.f32 %v1233, 0.0
      %v1242 = vmax.f32 %v1234, 0.0
      %v1243 = vmax.f32 %v1235, 0.0
      %v1244 = vmax.f32 %v1236, 0.0
      %v1245 = vmax.f32 %v1237, 0.0
      %vm1246 = vcmask 60416
      %1247 = vst.msk [vmem:[%s170] sm:$0xf] %vm1246, 0
      %vm1248 = vcmask 57344
      %1249 = vst.msk [vmem:[%s170 + $0x4] sm:$0x1] %vm1248, 0
      %s1250 = scalar_lea.vmem %s170, 72
      %1251 = vst.msk [vmem:[%s1250] sm:$0xf] %vm1246, 0
      %1252 = vst.msk [vmem:[%s1250 + $0x4] sm:$0x1] %vm1248, 0
      %s1253 = scalar_lea.vmem %s170, 8
      %vm1254 = vcmask 57344
      %vm1255 = vsmask.f32 256
      %vm1256 = vmand %vm1254, %vm1255
      %v1257 = vld [vmem:[%s1253] sm:$0x1]
      %v1258 = vsel %vm1256, 0, %v1257
      %1259 = vst [vmem:[%s1253] sm:$0x1] %v1258
      %v1260 = vld [vmem:[%s1253 + $0x8] sm:$0x1]
      %v1261 = vsel %vm1256, 0, %v1260
      %1262 = vst [vmem:[%s1253 + $0x8] sm:$0x1] %v1261
      %v1263 = vld [vmem:[%s1253 + $0x10] sm:$0x1]
      %v1264 = vsel %vm1256, 0, %v1263
      %1265 = vst [vmem:[%s1253 + $0x10] sm:$0x1] %v1264
      %v1266 = vld [vmem:[%s1253 + $0x18] sm:$0x1]
      %v1267 = vsel %vm1256, 0, %v1266
      %1268 = vst [vmem:[%s1253 + $0x18] sm:$0x1] %v1267
      %v1269 = vld [vmem:[%s1253 + $0x20] sm:$0x1]
      %v1270 = vsel %vm1256, 0, %v1269
      %1271 = vst [vmem:[%s1253 + $0x20] sm:$0x1] %v1270
      %v1272 = vld [vmem:[%s1253 + $0x28] sm:$0x1]
      %v1273 = vsel %vm1256, 0, %v1272
      %1274 = vst [vmem:[%s1253 + $0x28] sm:$0x1] %v1273
      %v1275 = vld [vmem:[%s1253 + $0x30] sm:$0x1]
      %v1276 = vsel %vm1256, 0, %v1275
      %1277 = vst [vmem:[%s1253 + $0x30] sm:$0x1] %v1276
      %v1278 = vld [vmem:[%s1253 + $0x38] sm:$0x1]
      %v1279 = vsel %vm1256, 0, %v1278
      %1280 = vst [vmem:[%s1253 + $0x38] sm:$0x1] %v1279
      %vm1281 = vsmask.f32 7938
      %vm1282 = vmand %vm1254, %vm1281
      %v1283 = vld [vmem:[%s1253 + $0x4] sm:$0x1]
      %v1284 = vsel %vm1282, 0, %v1283
      %1285 = vst [vmem:[%s1253 + $0x4] sm:$0x1] %v1284
      %v1286 = vld [vmem:[%s1253 + $0xc] sm:$0x1]
      %v1287 = vsel %vm1282, 0, %v1286
      %1288 = vst [vmem:[%s1253 + $0xc] sm:$0x1] %v1287
      %v1289 = vld [vmem:[%s1253 + $0x14] sm:$0x1]
      %v1290 = vsel %vm1282, 0, %v1289
      %1291 = vst [vmem:[%s1253 + $0x14] sm:$0x1] %v1290
      %v1292 = vld [vmem:[%s1253 + $0x1c] sm:$0x1]
      %v1293 = vsel %vm1282, 0, %v1292
      %1294 = vst [vmem:[%s1253 + $0x1c] sm:$0x1] %v1293
      %v1295 = vld [vmem:[%s1253 + $0x24] sm:$0x1]
      %v1296 = vsel %vm1282, 0, %v1295
      %1297 = vst [vmem:[%s1253 + $0x24] sm:$0x1] %v1296
      %v1298 = vld [vmem:[%s1253 + $0x2c] sm:$0x1]
      %v1299 = vsel %vm1282, 0, %v1298
      %1300 = vst [vmem:[%s1253 + $0x2c] sm:$0x1] %v1299
      %v1301 = vld [vmem:[%s1253 + $0x34] sm:$0x1]
      %v1302 = vsel %vm1282, 0, %v1301
      %1303 = vst [vmem:[%s1253 + $0x34] sm:$0x1] %v1302
      %v1304 = vld [vmem:[%s1253 + $0x3c] sm:$0x1]
      %v1305 = vsel %vm1282, 0, %v1304
      %1306 = vst [vmem:[%s1253 + $0x3c] sm:$0x1] %v1305
      %v1307 = vpack.c.bf16 %v1238, %v1238
      %v1308 = vpack.c.bf16 %v1239, %v1239
      %v1309 = vpack.c.bf16 %v1240, %v1240
      %v1310 = vpack.c.bf16 %v1241, %v1241
      %v1311 = vpack.c.bf16 %v1242, %v1242
      %v1312 = vpack.c.bf16 %v1243, %v1243
      %v1313 = vpack.c.bf16 %v1244, %v1244
      %v1314 = vpack.c.bf16 %v1245, %v1245
      %v1323 = vunpack.c.l.b16 %v1307
      %v1324 = vunpack.c.l.b16 %v1308
      %v1325 = vunpack.c.l.b16 %v1309
      %v1326 = vunpack.c.l.b16 %v1310
      %v1327 = vunpack.c.l.b16 %v1311
      %v1328 = vunpack.c.l.b16 %v1312
      %v1329 = vunpack.c.l.b16 %v1313
      %v1330 = vunpack.c.l.b16 %v1314
      %v1331 = vpack.c.b16 %v1323, %v1323
      %v1332 = vpack.c.b16 %v1324, %v1324
      %v1333 = vpack.c.b16 %v1325, %v1325
      %v1334 = vpack.c.b16 %v1326, %v1326
      %v1335 = vpack.c.b16 %v1327, %v1327
      %v1336 = vpack.c.b16 %v1328, %v1328
      %v1337 = vpack.c.b16 %v1329, %v1329
      %v1338 = vpack.c.b16 %v1330, %v1330
      %v1340 = vshrl.u32 %v1331, 16
      %v1342 = vrot.slane %v1340, 7
      %v1343 = vshll.u32 %v1331, 16
      %v1345 = vor.u32 %v1342, %v1343
      %v1346 = vrot.slane %v1342, 4
      %v1348 = vshrl.u32 %v1332, 16
      %v1350 = vrot.slane %v1348, 7
      %v1351 = vshll.u32 %v1332, 16
      %v1353 = vor.u32 %v1350, %v1351
      %v1354 = vrot.slane %v1350, 4
      %v1356 = vshrl.u32 %v1333, 16
      %v1358 = vrot.slane %v1356, 7
      %v1359 = vshll.u32 %v1333, 16
      %v1361 = vor.u32 %v1358, %v1359
      %v1362 = vrot.slane %v1358, 4
      %v1364 = vshrl.u32 %v1334, 16
      %v1366 = vrot.slane %v1364, 7
      %v1367 = vshll.u32 %v1334, 16
      %v1369 = vor.u32 %v1366, %v1367
      %v1370 = vrot.slane %v1366, 4
      %v1372 = vshrl.u32 %v1335, 16
      %v1374 = vrot.slane %v1372, 7
      %v1375 = vshll.u32 %v1335, 16
      %v1377 = vor.u32 %v1374, %v1375
      %v1378 = vrot.slane %v1374, 4
      %v1380 = vshrl.u32 %v1336, 16
      %v1382 = vrot.slane %v1380, 7
      %v1383 = vshll.u32 %v1336, 16
      %v1385 = vor.u32 %v1382, %v1383
      %v1386 = vrot.slane %v1382, 4
      %v1388 = vshrl.u32 %v1337, 16
      %v1390 = vrot.slane %v1388, 7
      %v1391 = vshll.u32 %v1337, 16
      %v1393 = vor.u32 %v1390, %v1391
      %v1394 = vrot.slane %v1390, 4
      %v1396 = vshrl.u32 %v1338, 16
      %v1398 = vrot.slane %v1396, 7
      %v1399 = vshll.u32 %v1338, 16
      %v1401 = vor.u32 %v1398, %v1399
      %v1402 = vrot.slane %v1398, 4
      %vm1419 = vcmask 60416
      %vm1420 = vmand %vm1419, %vm1281
      %v1421 = vld [vmem:[%s1253] sm:$0xf]
      %v1422 = vsel %vm1420, %v1345, %v1421
      %1423 = vst [vmem:[%s1253] sm:$0xf] %v1422
      %v1424 = vld [vmem:[%s1253 + $0x4] sm:$0x1]
      %v1425 = vsel %vm1256, %v1346, %v1424
      %1426 = vst [vmem:[%s1253 + $0x4] sm:$0x1] %v1425
      %v1427 = vld [vmem:[%s1253 + $0x8] sm:$0xf]
      %v1428 = vsel %vm1420, %v1353, %v1427
      %1429 = vst [vmem:[%s1253 + $0x8] sm:$0xf] %v1428
      %v1430 = vld [vmem:[%s1253 + $0xc] sm:$0x1]
      %v1431 = vsel %vm1256, %v1354, %v1430
      %1432 = vst [vmem:[%s1253 + $0xc] sm:$0x1] %v1431
      %v1433 = vld [vmem:[%s1253 + $0x10] sm:$0xf]
      %v1434 = vsel %vm1420, %v1361, %v1433
      %1435 = vst [vmem:[%s1253 + $0x10] sm:$0xf] %v1434
      %v1436 = vld [vmem:[%s1253 + $0x14] sm:$0x1]
      %v1437 = vsel %vm1256, %v1362, %v1436
      %1438 = vst [vmem:[%s1253 + $0x14] sm:$0x1] %v1437
      %v1439 = vld [vmem:[%s1253 + $0x18] sm:$0xf]
      %v1440 = vsel %vm1420, %v1369, %v1439
      %1441 = vst [vmem:[%s1253 + $0x18] sm:$0xf] %v1440
      %v1442 = vld [vmem:[%s1253 + $0x1c] sm:$0x1]
      %v1443 = vsel %vm1256, %v1370, %v1442
      %1444 = vst [vmem:[%s1253 + $0x1c] sm:$0x1] %v1443
      %v1445 = vld [vmem:[%s1253 + $0x20] sm:$0xf]
      %v1446 = vsel %vm1420, %v1377, %v1445
      %1447 = vst [vmem:[%s1253 + $0x20] sm:$0xf] %v1446
      %v1448 = vld [vmem:[%s1253 + $0x24] sm:$0x1]
      %v1449 = vsel %vm1256, %v1378, %v1448
      %1450 = vst [vmem:[%s1253 + $0x24] sm:$0x1] %v1449
      %v1451 = vld [vmem:[%s1253 + $0x28] sm:$0xf]
      %v1452 = vsel %vm1420, %v1385, %v1451
      %1453 = vst [vmem:[%s1253 + $0x28] sm:$0xf] %v1452
      %v1454 = vld [vmem:[%s1253 + $0x2c] sm:$0x1]
      %v1455 = vsel %vm1256, %v1386, %v1454
      %1456 = vst [vmem:[%s1253 + $0x2c] sm:$0x1] %v1455
      %v1457 = vld [vmem:[%s1253 + $0x30] sm:$0xf]
      %v1458 = vsel %vm1420, %v1393, %v1457
      %1459 = vst [vmem:[%s1253 + $0x30] sm:$0xf] %v1458
      %v1460 = vld [vmem:[%s1253 + $0x34] sm:$0x1]
      %v1461 = vsel %vm1256, %v1394, %v1460
      %1462 = vst [vmem:[%s1253 + $0x34] sm:$0x1] %v1461
      %v1463 = vld [vmem:[%s1253 + $0x38] sm:$0xf]
      %v1464 = vsel %vm1420, %v1401, %v1463
      %1465 = vst [vmem:[%s1253 + $0x38] sm:$0xf] %v1464
      %v1466 = vld [vmem:[%s1253 + $0x3c] sm:$0x1]
      %v1467 = vsel %vm1256, %v1402, %v1466
      %1468 = vst [vmem:[%s1253 + $0x3c] sm:$0x1] %v1467
      %p1469 = scmp.lt.s32.totalorder %s14, 1
      %s1470 = scalar_select %p1469, %s14, 1
      %s1471 = smul.addr %s1470, 20
      %s1472 = smul.addr %s1471, 4
      %s1473 = scalar_lea.vmem %s3, %s1472
      // Predicated region
      $region33: #{discriminator_forward.6} parent=31 // pred_check
        %p1474 = pneg %p100
      $region34: #{discriminator_forward.6} parent=31 // pred_check_branch
        %1476 = sbr.rel (%p1474) target = $region36
      $region35: #{discriminator_forward.6} parent=31 // pred_region
        _
      $region36: #{discriminator_forward.6} parent=31 // pred_fallthru
        _
    $region32: #{discriminator_forward.6} parent=5 // pred_fallthru
      _
    %p1477 = scmp.le.s32.totalorder 2, %s9
    // Predicated region
    $region37: #{discriminator_forward.6} parent=5 // pred_check
      %p1478 = pneg %p1477
    $region38: #{discriminator_forward.6} parent=5 // pred_check_branch
      %1480 = sbr.rel (%p1478) target = $region40
    $region39: #{discriminator_forward.6} parent=5 // pred_region
      %s1481 = ssub.s32 %s9, 2
      // Predicated region
      $region41: #{discriminator_forward.6} parent=39 // pred_check
        %p1482 = pneg %p106
      $region42: #{discriminator_forward.6} parent=39 // pred_check_branch
        %1484 = sbr.rel (%p1482) target = $region44
      $region43: #{discriminator_forward.6} parent=39 // pred_region
        %p1485 = scmp.lt.s32.totalorder %s15, 1
        %s1486 = scalar_select %p1485, %s15, 1
        %s1487 = smul.addr %s1486, 20
        %s1488 = smul.addr %s1487, 4
        %s1489 = scalar_lea.vmem %s3, %s1488
      $region44: #{discriminator_forward.6} parent=39 // pred_fallthru
        _
    $region40: #{discriminator_forward.6} parent=5 // pred_fallthru
      _
  $region6: #{discriminator_forward.6} parent=0 // loop_footer
    %s13 = sadd.s32 1, %s9
  $region7: #{discriminator_forward.6} parent=0 // loop_footer_branch
    %8 = sbr.rel target = $region3
  $region8: #{discriminator_forward.6} parent=0 // loop_exit
    _

// kernel: discriminator_forward.7
$region0: #{discriminator_forward.7}
  #allocation0 [shape = 'u32[]', space=smem, size = 0x4, offset = 0x4, fixed_abs, tag = 'smem constant byte address 0x4 - core index']
  #allocation1 [shape = 'u32[144,128]{1,0:T(1,128)}', space=vmem, size = 0x12000, scoped, tag = 'internal scratch']
  %s0 = inlined_call_operand.vmem [shape: bf16[2,10,10,8], index: 0, kind: input, shape index: {}]
  %s1 = inlined_call_operand.vmem [shape: bf16[9,8,4], index: 1, kind: input, shape index: {}]
  %s2 = inlined_call_operand.vmem [shape: f32[1,4], index: 2, kind: input, shape index: {}]
  %s3 = inlined_call_operand.vmem [shape: f32[4,3], index: 3, kind: input, shape index: {}]
  %s4 = inlined_call_operand.vmem [shape: f32[1,3], index: 4, kind: input, shape index: {}]
  %s5 = inlined_call_operand.hbm [shape: f32[2,1,3], index: 5, kind: output, shape index: {}]
  %s6 = sld [smem:[#allocation0]]
  $region53: #{discriminator_forward.7} parent=0
    _
  %s8 = ssub.s32 1, %s6
  %s9 = scalar_select 0, %s8, %s6
  $region1: #{discriminator_forward.7} parent=0
    #allocation2 [shape = 'u8[1024]{0}', space=vmem, size = 0x400, scoped, tag = 'output window, operand 0']
    #allocation3 [shape = 's32[2]{0}', space=sflag, size = 0x8, scoped, tag = 'scoped memory for discriminator_forward.7']
    %10 = vsyncpa [#allocation3], 0
    %s11 = scalar_lea.sflag [#allocation3], 1
    %12 = vsyncpa %s11, 0
    loop: start=0, step=1, limit=4
    $region2: #{discriminator_forward.7} parent=1 // loop_pre_header
      _
    $region3: #{discriminator_forward.7} parent=1 // loop_header
      %s14 = sphi 0, %s18
      %p15 = scmp.ge.s32.totalorder %s14, 4
      %s24 = sphi 0, %s26
      %s27 = sphi 0, %s24
      %s28 = sphi 0, %s27
      %s44 = sphi 0, %s28
      %s48 = sphi 0, %s48
      %s50 = sphi 0, %s48
      %s51 = sphi 0, %s50
      %s65 = sphi 0, %s51
      %s69 = sphi 0, %s69
      %s71 = sphi 0, %s69
      %s72 = sphi 0, %s71
      %s86 = sphi 0, %s72
      %s90 = sphi 0, %s90
      %s92 = sphi 0, %s90
      %s93 = sphi 0, %s92
      %s107 = sphi 0, %s93
      %s111 = sphi 0, %s111
      %s113 = sphi 0, %s111
      %s114 = sphi 0, %s113
      %s128 = sphi 0, %s114
      %s134 = sphi 0, %s136
      %s137 = sphi 0, %s134
      %s138 = sphi 0, %s137
      %s154 = sphi 0, %s138
    $region4: #{discriminator_forward.7} parent=1 // loop_header_branch
      %17 = sbr.rel (%p15) target = $region8
    $region5: #{discriminator_forward.7} parent=1 // loop_body
      %s19 = ssub.s32 %s14, 1
      %s20 = ssub.s32 %s14, 2
      %s21 = sadd.s32 %s14, 1
      %s22 = ssub.s32 %s14, %s21
      %p23 = scmp.eq.s32.totalorder %s22, 0
      %s25 = sadd.s32 %s24, 1
      %s26 = scalar_select %p23, %s24, %s25
      %p29 = pneg %p23
      %p30 = scmp.eq.s32.totalorder %s14, 1
      %p31 = por %p29, %p30
      %p32 = scmp.ne.s32.totalorder %s24, %s27
      %p33 = scmp.eq.s32.totalorder %s14, 0
      %p34 = por %p32, %p33
      %p35 = scmp.ne.s32.totalorder %s24, %s27
      %p36 = scmp.eq.s32.totalorder %s19, 1
      %p37 = por %p35, %p36
      %p38 = scmp.ne.s32.totalorder %s27, %s28
      %p39 = scmp.eq.s32.totalorder %s19, 0
      %p40 = por %p38, %p39
      %p41 = scmp.ne.s32.totalorder %s27, %s28
      %p42 = scmp.eq.s32.totalorder %s20, 1
      %p43 = por %p41, %p42
      %p45 = scmp.ne.s32.totalorder %s28, %s44
      %p46 = scmp.eq.s32.totalorder %s20, 0
      %p47 = por %p45, %p46
      %s49 = sadd.s32 %s48, 1
      %p52 = scmp.eq.s32.totalorder %s14, 1
      %p53 = scmp.ne.s32.totalorder %s48, %s50
      %p54 = scmp.eq.s32.totalorder %s14, 0
      %p55 = por %p53, %p54
      %p56 = scmp.ne.s32.totalorder %s48, %s50
      %p57 = scmp.eq.s32.totalorder %s19, 1
      %p58 = por %p56, %p57
      %p59 = scmp.ne.s32.totalorder %s50, %s51
      %p60 = scmp.eq.s32.totalorder %s19, 0
      %p61 = por %p59, %p60
      %p62 = scmp.ne.s32.totalorder %s50, %s51
      %p63 = scmp.eq.s32.totalorder %s20, 1
      %p64 = por %p62, %p63
      %p66 = scmp.ne.s32.totalorder %s51, %s65
      %p67 = scmp.eq.s32.totalorder %s20, 0
      %p68 = por %p66, %p67
      %s70 = sadd.s32 %s69, 1
      %p73 = scmp.eq.s32.totalorder %s14, 1
      %p74 = scmp.ne.s32.totalorder %s69, %s71
      %p75 = scmp.eq.s32.totalorder %s14, 0
      %p76 = por %p74, %p75
      %p77 = scmp.ne.s32.totalorder %s69, %s71
      %p78 = scmp.eq.s32.totalorder %s19, 1
      %p79 = por %p77, %p78
      %p80 = scmp.ne.s32.totalorder %s71, %s72
      %p81 = scmp.eq.s32.totalorder %s19, 0
      %p82 = por %p80, %p81
      %p83 = scmp.ne.s32.totalorder %s71, %s72
      %p84 = scmp.eq.s32.totalorder %s20, 1
      %p85 = por %p83, %p84
      %p87 = scmp.ne.s32.totalorder %s72, %s86
      %p88 = scmp.eq.s32.totalorder %s20, 0
      %p89 = por %p87, %p88
      %s91 = sadd.s32 %s90, 1
      %p94 = scmp.eq.s32.totalorder %s14, 1
      %p95 = scmp.ne.s32.totalorder %s90, %s92
      %p96 = scmp.eq.s32.totalorder %s14, 0
      %p97 = por %p95, %p96
      %p98 = scmp.ne.s32.totalorder %s90, %s92
      %p99 = scmp.eq.s32.totalorder %s19, 1
      %p100 = por %p98, %p99
      %p101 = scmp.ne.s32.totalorder %s92, %s93
      %p102 = scmp.eq.s32.totalorder %s19, 0
      %p103 = por %p101, %p102
      %p104 = scmp.ne.s32.totalorder %s92, %s93
      %p105 = scmp.eq.s32.totalorder %s20, 1
      %p106 = por %p104, %p105
      %p108 = scmp.ne.s32.totalorder %s93, %s107
      %p109 = scmp.eq.s32.totalorder %s20, 0
      %p110 = por %p108, %p109
      %s112 = sadd.s32 %s111, 1
      %p115 = scmp.eq.s32.totalorder %s14, 1
      %p116 = scmp.ne.s32.totalorder %s111, %s113
      %p117 = scmp.eq.s32.totalorder %s14, 0
      %p118 = por %p116, %p117
      %p119 = scmp.ne.s32.totalorder %s111, %s113
      %p120 = scmp.eq.s32.totalorder %s19, 1
      %p121 = por %p119, %p120
      %p122 = scmp.ne.s32.totalorder %s113, %s114
      %p123 = scmp.eq.s32.totalorder %s19, 0
      %p124 = por %p122, %p123
      %p125 = scmp.ne.s32.totalorder %s113, %s114
      %p126 = scmp.eq.s32.totalorder %s20, 1
      %p127 = por %p125, %p126
      %p129 = scmp.ne.s32.totalorder %s114, %s128
      %p130 = scmp.eq.s32.totalorder %s20, 0
      %p131 = por %p129, %p130
      %s132 = ssub.s32 %s14, %s21
      %p133 = scmp.eq.s32.totalorder %s132, 0
      %s135 = sadd.s32 %s134, 1
      %s136 = scalar_select %p133, %s134, %s135
      %p139 = pneg %p133
      %p140 = scmp.eq.s32.totalorder %s14, 1
      %p141 = por %p139, %p140
      %p142 = scmp.ne.s32.totalorder %s134, %s137
      %p143 = scmp.eq.s32.totalorder %s14, 0
      %p144 = por %p142, %p143
      %p145 = scmp.ne.s32.totalorder %s134, %s137
      %p146 = scmp.eq.s32.totalorder %s19, 1
      %p147 = por %p145, %p146
      %p148 = scmp.ne.s32.totalorder %s137, %s138
      %p149 = scmp.eq.s32.totalorder %s19, 0
      %p150 = por %p148, %p149
      %p151 = scmp.ne.s32.totalorder %s137, %s138
      %p152 = scmp.eq.s32.totalorder %s20, 1
      %p153 = por %p151, %p152
      %p155 = scmp.ne.s32.totalorder %s138, %s154
      %p156 = scmp.eq.s32.totalorder %s20, 0
      %p157 = por %p155, %p156
      %p158 = scmp.le.s32.totalorder 1, %s14
      %p159 = scmp.lt.s32.totalorder %s14, 3
      %p160 = pnand %p158, %p159
      %p161 = pneg %p160
      // Predicated region
      $region9: #{discriminator_forward.7} parent=5 // pred_check
        _
      $region10: #{discriminator_forward.7} parent=5 // pred_check_branch
        %163 = sbr.rel (%p160) target = $region12
      $region11: #{discriminator_forward.7} parent=5 // pred_region
        %s164 = ssub.s32 %s14, 1
        // Predicated region
        $region13: #{discriminator_forward.7} parent=11 // pred_check
          %p165 = pneg %p61
        $region14: #{discriminator_forward.7} parent=11 // pred_check_branch
          %167 = sbr.rel (%p165) target = $region16
        $region15: #{discriminator_forward.7} parent=11 // pred_region
          _
        $region16: #{discriminator_forward.7} parent=11 // pred_fallthru
          _
        // Predicated region
        $region17: #{discriminator_forward.7} parent=11 // pred_check
          %p168 = pneg %p82
        $region18: #{discriminator_forward.7} parent=11 // pred_check_branch
          %170 = sbr.rel (%p168) target = $region20
        $region19: #{discriminator_forward.7} parent=11 // pred_region
          _
        $region20: #{discriminator_forward.7} parent=11 // pred_fallthru
          _
        // Predicated region
        $region21: #{discriminator_forward.7} parent=11 // pred_check
          %p171 = pneg %p103
        $region22: #{discriminator_forward.7} parent=11 // pred_check_branch
          %173 = sbr.rel (%p171) target = $region24
        $region23: #{discriminator_forward.7} parent=11 // pred_region
          _
        $region24: #{discriminator_forward.7} parent=11 // pred_fallthru
          _
        // Predicated region
        $region25: #{discriminator_forward.7} parent=11 // pred_check
          %p174 = pneg %p124
        $region26: #{discriminator_forward.7} parent=11 // pred_check_branch
          %176 = sbr.rel (%p174) target = $region28
        $region27: #{discriminator_forward.7} parent=11 // pred_region
          _
        $region28: #{discriminator_forward.7} parent=11 // pred_fallthru
          _
      $region12: #{discriminator_forward.7} parent=5 // pred_fallthru
        _
      %p177 = scmp.lt.s32.totalorder %s14, 2
      // Predicated region
      $region29: #{discriminator_forward.7} parent=5 // pred_check
        %p178 = pneg %p177
      $region30: #{discriminator_forward.7} parent=5 // pred_check_branch
        %180 = sbr.rel (%p178) target = $region32
      $region31: #{discriminator_forward.7} parent=5 // pred_region
        // Predicated region
        $region33: #{discriminator_forward.7} parent=31 // pred_check
          %p181 = pneg %p34
        $region34: #{discriminator_forward.7} parent=31 // pred_check_branch
          %183 = sbr.rel (%p181) target = $region36
        $region35: #{discriminator_forward.7} parent=31 // pred_region
          %p184 = scmp.lt.s32.totalorder %s14, 1
          %s185 = scalar_select %p184, %s14, 1
          %s186 = smul.addr %s185, 20
          %s187 = smul.addr %s186, 4
          %s188 = scalar_lea.vmem %s0, %s187
        $region36: #{discriminator_forward.7} parent=31 // pred_fallthru
          _
      $region32: #{discriminator_forward.7} parent=5 // pred_fallthru
        _
      %p189 = scmp.le.s32.totalorder 1, %s14
      %p190 = scmp.lt.s32.totalorder %s14, 3
      %p191 = pnand %p189, %p190
      %p192 = pneg %p191
      // Predicated region
      $region37: #{discriminator_forward.7} parent=5 // pred_check
        _
      $region38: #{discriminator_forward.7} parent=5 // pred_check_branch
        %194 = sbr.rel (%p191) target = $region40
      $region39: #{discriminator_forward.7} parent=5 // pred_region
        %s195 = ssub.s32 %s14, 1
        %p196 = scmp.lt.s32.totalorder %s19, 1
        %s197 = scalar_select %p196, %s19, 1
        %s198 = smul.addr %s197, 20
        %s199 = smul.addr %s198, 4
        %s200 = scalar_lea.vmem %s0, %s199
        %p201 = pneg %p40
        %p202 = pneg %p37
        %p203 = pneg %p61
        %p204 = pneg %p58
        %p205 = pneg %p82
        %p206 = pneg %p79
        %p207 = pneg %p103
        %p208 = pneg %p100
        %p209 = pneg %p124
        %p210 = pneg %p121
        %p211 = pneg %p150
        %p212 = pneg %p147
        %s213 = sand.u32 %s137, 1
        %s214 = scalar_lea.sflag [#allocation3], %s213
        %s215 = sand.u32 %s137, 1
        %s216 = scalar_lea.vmem [#allocation2], %s215
        %p217 = scmp.lt.s32.totalorder %s19, 1
        %s218 = scalar_select %p217, %s19, 1
        %s219 = smul.addr %s218, 20
        %s220 = smul.addr %s219, 4
        %s221 = scalar_lea.vmem %s0, %s220
        %v223 = vld [vmem:[%s221] sm:$0xf]
        %v224 = vld [vmem:[%s221 + $0x4] sm:$0x1]
        %v225 = vld [vmem:[%s221 + $0x8] sm:$0xf]
        %v226 = vld [vmem:[%s221 + $0xc] sm:$0x1]
        %v227 = vld [vmem:[%s221 + $0x10] sm:$0xf]
        %v228 = vld [vmem:[%s221 + $0x14] sm:$0x1]
        %v229 = vld [vmem:[%s221 + $0x18] sm:$0xf]
        %v230 = vld [vmem:[%s221 + $0x1c] sm:$0x1]
        %v231 = vld [vmem:[%s221 + $0x20] sm:$0xf]
        %v232 = vld [vmem:[%s221 + $0x24] sm:$0x1]
        %v233 = vld [vmem:[%s221 + $0x28] sm:$0xf]
        %v234 = vld [vmem:[%s221 + $0x2c] sm:$0x1]
        %v235 = vld [vmem:[%s221 + $0x30] sm:$0xf]
        %v236 = vld [vmem:[%s221 + $0x34] sm:$0x1]
        %v237 = vld [vmem:[%s221 + $0x38] sm:$0xf]
        %v238 = vld [vmem:[%s221 + $0x3c] sm:$0x1]
        %v239 = vld [vmem:[%s221 + $0x40] sm:$0xf]
        %v240 = vld [vmem:[%s221 + $0x44] sm:$0x1]
        %v241 = vld [vmem:[%s221 + $0x48] sm:$0xf]
        %v242 = vld [vmem:[%s221 + $0x4c] sm:$0x1]
        %v243 = vld [vmem:[%s1] sm:$0xf]
        %vm244 = vsmask.f32 3328
        %vm245 = vsmask.f32 7440
        %vm246 = vmor %vm244, %vm245
        %v248 = vshrl.u32 %v223, 16
        %v250 = vrot.slane %v248, 4
        %v251 = vshll.u32 %v223, 16
        %v253 = vrot.slane %v251, 5
        %v254 = vor.u32 %v250, %v253
        %v255 = vrot.slane %v254, 4
        %v257 = vshll.u32 %v224, 16
        %v259 = vrot.slane %v257, 5
        %v260 = vsel %vm246, %v255, %v259
        %v262 = vshrl.u32 %v225, 16
        %v264 = vrot.slane %v262, 4
        %v265 = vshll.u32 %v225, 16
        %v267 = vrot.slane %v265, 5
        %v268 = vor.u32 %v264, %v267
        %v269 = vrot.slane %v268, 4
        %v271 = vshll.u32 %v226, 16
        %v273 = vrot.slane %v271, 5
        %v274 = vsel %vm246, %v269, %v273
        %v276 = vshrl.u32 %v227, 16
        %v278 = vrot.slane %v276, 4
        %v279 = vshll.u32 %v227, 16
        %v281 = vrot.slane %v279, 5
        %v282 = vor.u32 %v278, %v281
        %v283 = vrot.slane %v282, 4
        %v285 = vshll.u32 %v228, 16
        %v287 = vrot.slane %v285, 5
        %v288 = vsel %vm246, %v283, %v287
        %v290 = vshrl.u32 %v229, 16
        %v292 = vrot.slane %v290, 4
        %v293 = vshll.u32 %v229, 16
        %v295 = vrot.slane %v293, 5
        %v296 = vor.u32 %v292, %v295
        %v297 = vrot.slane %v296, 4
        %v299 = vshll.u32 %v230, 16
        %v301 = vrot.slane %v299, 5
        %v302 = vsel %vm246, %v297, %v301
        %v304 = vshrl.u32 %v231, 16
        %v306 = vrot.slane %v304, 4
        %v307 = vshll.u32 %v231, 16
        %v309 = vrot.slane %v307, 5
        %v310 = vor.u32 %v306, %v309
        %v311 = vrot.slane %v310, 4
        %v313 = vshll.u32 %v232, 16
        %v315 = vrot.slane %v313, 5
        %v316 = vsel %vm246, %v311, %v315
        %v318 = vshrl.u32 %v233, 16
        %v320 = vrot.slane %v318, 4
        %v321 = vshll.u32 %v233, 16
        %v323 = vrot.slane %v321, 5
        %v324 = vor.u32 %v320, %v323
        %v325 = vrot.slane %v324, 4
        %v327 = vshll.u32 %v234, 16
        %v329 = vrot.slane %v327, 5
        %v330 = vsel %vm246, %v325, %v329
        %v332 = vshrl.u32 %v235, 16
        %v334 = vrot.slane %v332, 4
        %v335 = vshll.u32 %v235, 16
        %v337 = vrot.slane %v335, 5
        %v338 = vor.u32 %v334, %v337
        %v339 = vrot.slane %v338, 4
        %v341 = vshll.u32 %v236, 16
        %v343 = vrot.slane %v341, 5
        %v344 = vsel %vm246, %v339, %v343
        %v346 = vshrl.u32 %v237, 16
        %v348 = vrot.slane %v346, 4
        %v349 = vshll.u32 %v237, 16
        %v351 = vrot.slane %v349, 5
        %v352 = vor.u32 %v348, %v351
        %v353 = vrot.slane %v352, 4
        %v355 = vshll.u32 %v238, 16
        %v357 = vrot.slane %v355, 5
        %v358 = vsel %vm246, %v353, %v357
        %s359 = scalar_lea.vmem %s1, 4
        %v360 = vld [vmem:[%s359] sm:$0xf]
        %v361 = vunpack.c.l.b16 %v260
        %v362 = vunpack.c.l.b16 %v274
        %v363 = vunpack.c.l.b16 %v288
        %v364 = vunpack.c.l.b16 %v302
        %v365 = vunpack.c.l.b16 %v316
        %v366 = vunpack.c.l.b16 %v330
        %v367 = vunpack.c.l.b16 %v344
        %v368 = vunpack.c.l.b16 %v358
        %v369 = vpack.c.b16 %v362, %v361
        %v370 = vpack.c.b16 %v364, %v363
        %v371 = vpack.c.b16 %v366, %v365
        %v372 = vpack.c.b16 %v368, %v367
        %vm373 = vcmask 64512
        %v375 = vsel %vm373, %v369, 0
        %v378 = vsel %vm373, %v370, 0
        %v381 = vsel %vm373, %v371, 0
        %v384 = vsel %vm373, %v372, 0
        %vm386 = vcmask 1043456
        %v388 = vsel %vm386, %v360, 0
        %390 = vmatprep.subr.bf16.mxu0 0
        %391 = vmatpush1.bf16.msra.mxu0 0
        %392 = vmatprep.subr.bf16.mxu0 0
        %393 = vmatpush1.bf16.msra.mxu0 0
        %394 = vmatprep.subr.bf16.mxu0 0
        %395 = vmatpush1.bf16.msra.mxu0 0
        %396 = vmatprep.subr.bf16.mxu0 0
        %397 = vmatpush1.bf16.msra.mxu0 0
        %398 = vmatprep.subr.bf16.mxu0 0
        %399 = vmatpush1.bf16.msra.mxu0 0
        %400 = vmatprep.subr.bf16.mxu0 0
        %401 = vmatpush1.bf16.msra.mxu0 0
        %402 = vmatprep.subr.bf16.mxu0 0
        %403 = vmatpush1.bf16.msra.mxu0 0
        %404 = vmatprep.subr.bf16.mxu0 0
        %405 = vmatpush1.bf16.msra.mxu0 %v388
        %406 = vmatprep.subr.bf16.mxu0 0
        %407 = vmatpush2.bf16.msra.mxu0 0
        %408 = vmatprep.subr.bf16.mxu0 0
        %409 = vmatpush2.bf16.msra.mxu0 0
        %410 = vmatprep.subr.bf16.mxu0 0
        %411 = vmatpush2.bf16.msra.mxu0 0
        %412 = vmatprep.subr.bf16.mxu0 0
        %413 = vmatpush2.bf16.msra.mxu0 0
        %414 = vmatprep.subr.bf16.mxu0 0
        %415 = vmatpush2.bf16.msra.mxu0 0
        %416 = vmatprep.subr.bf16.mxu0 0
        %417 = vmatpush2.bf16.msra.mxu0 0
        %418 = vmatprep.subr.bf16.mxu0 0
        %419 = vmatpush2.bf16.msra.mxu0 0
        %420 = vmatprep.subr.bf16.mxu0 0
        %421 = vmatpush2.bf16.msra.mxu0 0
        %422 = vmatprep.mubr.bf16.mxu0 0
        %423 = vmatmul.mubr.bf16.gmra.mxu0 %v375
        %v424 = vpop.f32.mrf.mxu0
        %v425 = vadd.f32 0.0, %v424
        %v426 = vpop.f32.mrf.mxu0
        %v427 = vpop.f32.mrf.mxu0
        %v428 = vadd.f32 0.0, %v427
        %v429 = vpop.f32.mrf.mxu0
        %430 = vmatprep.mubr.bf16.mxu0 0
        %431 = vmatmul.mubr.bf16.gmra.mxu0 %v378
        %v432 = vpop.f32.mrf.mxu0
        %v433 = vadd.f32 0.0, %v432
        %v434 = vpop.f32.mrf.mxu0
        %v435 = vpop.f32.mrf.mxu0
        %v436 = vadd.f32 0.0, %v435
        %v437 = vpop.f32.mrf.mxu0
        %438 = vmatprep.mubr.bf16.mxu0 0
        %439 = vmatmul.mubr.bf16.gmra.mxu0 %v381
        %v440 = vpop.f32.mrf.mxu0
        %v441 = vadd.f32 0.0, %v440
        %v442 = vpop.f32.mrf.mxu0
        %v443 = vpop.f32.mrf.mxu0
        %v444 = vadd.f32 0.0, %v443
        %v445 = vpop.f32.mrf.mxu0
        %446 = vmatprep.mubr.bf16.mxu0 0
        %447 = vmatmul.mubr.bf16.gmra.mxu0 %v384
        %v448 = vpop.f32.mrf.mxu0
        %v449 = vadd.f32 0.0, %v448
        %v450 = vpop.f32.mrf.mxu0
        %v451 = vpop.f32.mrf.mxu0
        %v452 = vadd.f32 0.0, %v451
        %v453 = vpop.f32.mrf.mxu0
        %454 = vdwg.mxu0
        %v463 = vunpack.c.l.b16 %v223
        %v464 = vunpack.c.l.b16 %v225
        %v465 = vunpack.c.l.b16 %v227
        %v466 = vunpack.c.l.b16 %v229
        %v467 = vunpack.c.l.b16 %v231
        %v468 = vunpack.c.l.b16 %v233
        %v469 = vunpack.c.l.b16 %v235
        %v470 = vunpack.c.l.b16 %v237
        %v471 = vpack.c.b16 %v464, %v463
        %v472 = vpack.c.b16 %v466, %v465
        %v473 = vpack.c.b16 %v468, %v467
        %v474 = vpack.c.b16 %v470, %v469
        %v476 = vsel %vm373, %v471, 0
        %v479 = vsel %vm373, %v472, 0
        %v482 = vsel %vm373, %v473, 0
        %v485 = vsel %vm373, %v474, 0
        %v488 = vsel %vm386, %v243, 0
        %490 = vmatprep.subr.bf16.mxu0 0
        %491 = vmatpush1.bf16.msra.mxu0 0
        %492 = vmatprep.subr.bf16.mxu0 0
        %493 = vmatpush1.bf16.msra.mxu0 0
        %494 = vmatprep.subr.bf16.mxu0 0
        %495 = vmatpush1.bf16.msra.mxu0 0
        %496 = vmatprep.subr.bf16.mxu0 0
        %497 = vmatpush1.bf16.msra.mxu0 0
        %498 = vmatprep.subr.bf16.mxu0 0
        %499 = vmatpush1.bf16.msra.mxu0 0
        %500 = vmatprep.subr.bf16.mxu0 0
        %501 = vmatpush1.bf16.msra.mxu0 0
        %502 = vmatprep.subr.bf16.mxu0 0
        %503 = vmatpush1.bf16.msra.mxu0 0
        %504 = vmatprep.subr.bf16.mxu0 0
        %505 = vmatpush1.bf16.msra.mxu0 %v488
        %506 = vmatprep.subr.bf16.mxu0 0
        %507 = vmatpush2.bf16.msra.mxu0 0
        %508 = vmatprep.subr.bf16.mxu0 0
        %509 = vmatpush2.bf16.msra.mxu0 0
        %510 = vmatprep.subr.bf16.mxu0 0
        %511 = vmatpush2.bf16.msra.mxu0 0
        %512 = vmatprep.subr.bf16.mxu0 0
        %513 = vmatpush2.bf16.msra.mxu0 0
        %514 = vmatprep.subr.bf16.mxu0 0
        %515 = vmatpush2.bf16.msra.mxu0 0
        %516 = vmatprep.subr.bf16.mxu0 0
        %517 = vmatpush2.bf16.msra.mxu0 0
        %518 = vmatprep.subr.bf16.mxu0 0
        %519 = vmatpush2.bf16.msra.mxu0 0
        %520 = vmatprep.subr.bf16.mxu0 0
        %521 = vmatpush2.bf16.msra.mxu0 0
        %522 = vmatprep.mubr.bf16.mxu0 0
        %523 = vmatmul.mubr.bf16.gmra.mxu0 %v476
        %v524 = vpop.f32.mrf.mxu0
        %v525 = vadd.f32 %v425, %v524
        %v526 = vpop.f32.mrf.mxu0
        %v527 = vpop.f32.mrf.mxu0
        %v528 = vadd.f32 %v428, %v527
        %v529 = vpop.f32.mrf.mxu0
        %530 = vmatprep.mubr.bf16.mxu0 0
        %531 = vmatmul.mubr.bf16.gmra.mxu0 %v479
        %v532 = vpop.f32.mrf.mxu0
        %v533 = vadd.f32 %v433, %v532
        %v534 = vpop.f32.mrf.mxu0
        %v535 = vpop.f32.mrf.mxu0
        %v536 = vadd.f32 %v436, %v535
        %v537 = vpop.f32.mrf.mxu0
        %538 = vmatprep.mubr.bf16.mxu0 0
        %539 = vmatmul.mubr.bf16.gmra.mxu0 %v482
        %v540 = vpop.f32.mrf.mxu0
        %v541 = vadd.f32 %v441, %v540
        %v542 = vpop.f32.mrf.mxu0
        %v543 = vpop.f32.mrf.mxu0
        %v544 = vadd.f32 %v444, %v543
        %v545 = vpop.f32.mrf.mxu0
        %546 = vmatprep.mubr.bf16.mxu0 0
        %547 = vmatmul.mubr.bf16.gmra.mxu0 %v485
        %v548 = vpop.f32.mrf.mxu0
        %v549 = vadd.f32 %v449, %v548
        %v550 = vpop.f32.mrf.mxu0
        %v551 = vpop.f32.mrf.mxu0
        %v552 = vadd.f32 %v452, %v551
        %v553 = vpop.f32.mrf.mxu0
        %554 = vdwg.mxu0
        %vm563 = vcmask 1042432
        %vm564 = vcmask 1046532
        %vm565 = vmor %vm563, %vm564
        %v566 = vrot.slane %v223, 5
        %v567 = vrot.slane %v566, 4
        %v568 = vrot.slane %v224, 5
        %v569 = vsel %vm565, %v567, %v568
        %v570 = vrot.slane %v225, 5
        %v571 = vrot.slane %v570, 4
        %v572 = vrot.slane %v226, 5
        %v573 = vsel %vm565, %v571, %v572
        %v574 = vrot.slane %v227, 5
        %v575 = vrot.slane %v574, 4
        %v576 = vrot.slane %v228, 5
        %v577 = vsel %vm565, %v575, %v576
        %v578 = vrot.slane %v229, 5
        %v579 = vrot.slane %v578, 4
        %v580 = vrot.slane %v230, 5
        %v581 = vsel %vm565, %v579, %v580
        %v582 = vrot.slane %v231, 5
        %v583 = vrot.slane %v582, 4
        %v584 = vrot.slane %v232, 5
        %v585 = vsel %vm565, %v583, %v584
        %v586 = vrot.slane %v233, 5
        %v587 = vrot.slane %v586, 4
        %v588 = vrot.slane %v234, 5
        %v589 = vsel %vm565, %v587, %v588
        %v590 = vrot.slane %v235, 5
        %v591 = vrot.slane %v590, 4
        %v592 = vrot.slane %v236, 5
        %v593 = vsel %vm565, %v591, %v592
        %v594 = vrot.slane %v237, 5
        %v595 = vrot.slane %v594, 4
        %v596 = vrot.slane %v238, 5
        %v597 = vsel %vm565, %v595, %v596
        %s598 = scalar_lea.vmem %s1, 8
        %v599 = vld [vmem:[%s598] sm:$0xf]
        %v600 = vunpack.c.l.b16 %v569
        %v601 = vunpack.c.l.b16 %v573
        %v602 = vunpack.c.l.b16 %v577
        %v603 = vunpack.c.l.b16 %v581
        %v604 = vunpack.c.l.b16 %v585
        %v605 = vunpack.c.l.b16 %v589
        %v606 = vunpack.c.l.b16 %v593
        %v607 = vunpack.c.l.b16 %v597
        %v608 = vpack.c.b16 %v601, %v600
        %v609 = vpack.c.b16 %v603, %v602
        %v610 = vpack.c.b16 %v605, %v604
        %v611 = vpack.c.b16 %v607, %v606
        %v613 = vsel %vm373, %v608, 0
        %v616 = vsel %vm373, %v609, 0
        %v619 = vsel %vm373, %v610, 0
        %v622 = vsel %vm373, %v611, 0
        %v625 = vsel %vm386, %v599, 0
        %627 = vmatprep.subr.bf16.mxu0 0
        %628 = vmatpush1.bf16.msra.mxu0 0
        %629 = vmatprep.subr.bf16.mxu0 0
        %630 = vmatpush1.bf16.msra.mxu0 0
        %631 = vmatprep.subr.bf16.mxu0 0
        %632 = vmatpush1.bf16.msra.mxu0 0
        %633 = vmatprep.subr.bf16.mxu0 0
        %634 = vmatpush1.bf16.msra.mxu0 0
        %635 = vmatprep.subr.bf16.mxu0 0
        %636 = vmatpush1.bf16.msra.mxu0 0
        %637 = vmatprep.subr.bf16.mxu0 0
        %638 = vmatpush1.bf16.msra.mxu0 0
        %639 = vmatprep.subr.bf16.mxu0 0
        %640 = vmatpush1.bf16.msra.mxu0 0
        %641 = vmatprep.subr.bf16.mxu0 0
        %642 = vmatpush1.bf16.msra.mxu0 %v625
        %643 = vmatprep.subr.bf16.mxu0 0
        %644 = vmatpush2.bf16.msra.mxu0 0
        %645 = vmatprep.subr.bf16.mxu0 0
        %646 = vmatpush2.bf16.msra.mxu0 0
        %647 = vmatprep.subr.bf16.mxu0 0
        %648 = vmatpush2.bf16.msra.mxu0 0
        %649 = vmatprep.subr.bf16.mxu0 0
        %650 = vmatpush2.bf16.msra.mxu0 0
        %651 = vmatprep.subr.bf16.mxu0 0
        %652 = vmatpush2.bf16.msra.mxu0 0
        %653 = vmatprep.subr.bf16.mxu0 0
        %654 = vmatpush2.bf16.msra.mxu0 0
        %655 = vmatprep.subr.bf16.mxu0 0
        %656 = vmatpush2.bf16.msra.mxu0 0
        %657 = vmatprep.subr.bf16.mxu0 0
        %658 = vmatpush2.bf16.msra.mxu0 0
        %659 = vmatprep.mubr.bf16.mxu0 0
        %660 = vmatmul.mubr.bf16.gmra.mxu0 %v613
        %v661 = vpop.f32.mrf.mxu0
        %v662 = vadd.f32 0.0, %v661
        %v663 = vpop.f32.mrf.mxu0
        %v664 = vpop.f32.mrf.mxu0
        %v665 = vadd.f32 0.0, %v664
        %v666 = vpop.f32.mrf.mxu0
        %667 = vmatprep.mubr.bf16.mxu0 0
        %668 = vmatmul.mubr.bf16.gmra.mxu0 %v616
        %v669 = vpop.f32.mrf.mxu0
        %v670 = vadd.f32 0.0, %v669
        %v671 = vpop.f32.mrf.mxu0
        %v672 = vpop.f32.mrf.mxu0
        %v673 = vadd.f32 0.0, %v672
        %v674 = vpop.f32.mrf.mxu0
        %675 = vmatprep.mubr.bf16.mxu0 0
        %676 = vmatmul.mubr.bf16.gmra.mxu0 %v619
        %v677 = vpop.f32.mrf.mxu0
        %v678 = vadd.f32 0.0, %v677
        %v679 = vpop.f32.mrf.mxu0
        %v680 = vpop.f32.mrf.mxu0
        %v681 = vadd.f32 0.0, %v680
        %v682 = vpop.f32.mrf.mxu0
        %683 = vmatprep.mubr.bf16.mxu0 0
        %684 = vmatmul.mubr.bf16.gmra.mxu0 %v622
        %v685 = vpop.f32.mrf.mxu0
        %v686 = vadd.f32 0.0, %v685
        %v687 = vpop.f32.mrf.mxu0
        %v688 = vpop.f32.mrf.mxu0
        %v689 = vadd.f32 0.0, %v688
        %v690 = vpop.f32.mrf.mxu0
        %691 = vdwg.mxu0
        %v692 = vadd.f32 %v525, %v662
        %v693 = vadd.f32 %v528, %v665
        %v694 = vadd.f32 %v533, %v670
        %v695 = vadd.f32 %v536, %v673
        %v696 = vadd.f32 %v541, %v678
        %v697 = vadd.f32 %v544, %v681
        %v698 = vadd.f32 %v549, %v686
        %v699 = vadd.f32 %v552, %v689
        %s700 = scalar_lea.vmem %s1, 12
        %v701 = vld [vmem:[%s700] sm:$0xf]
        %v703 = vunpack.c.l.b16 %v239
        %v704 = vpack.c.b16 %v465, %v464
        %v705 = vpack.c.b16 %v467, %v466
        %v706 = vpack.c.b16 %v469, %v468
        %v707 = vpack.c.b16 %v703, %v470
        %v709 = vsel %vm373, %v704, 0
        %v712 = vsel %vm373, %v705, 0
        %v715 = vsel %vm373, %v706, 0
        %v718 = vsel %vm373, %v707, 0
        %v721 = vsel %vm386, %v701, 0
        %723 = vmatprep.subr.bf16.mxu0 0
        %724 = vmatpush1.bf16.msra.mxu0 0
        %725 = vmatprep.subr.bf16.mxu0 0
        %726 = vmatpush1.bf16.msra.mxu0 0
        %727 = vmatprep.subr.bf16.mxu0 0
        %728 = vmatpush1.bf16.msra.mxu0 0
        %729 = vmatprep.subr.bf16.mxu0 0
        %730 = vmatpush1.bf16.msra.mxu0 0
        %731 = vmatprep.subr.bf16.mxu0 0
        %732 = vmatpush1.bf16.msra.mxu0 0
        %733 = vmatprep.subr.bf16.mxu0 0
        %734 = vmatpush1.bf16.msra.mxu0 0
        %735 = vmatprep.subr.bf16.mxu0 0
        %736 = vmatpush1.bf16.msra.mxu0 0
        %737 = vmatprep.subr.bf16.mxu0 0
        %738 = vmatpush1.bf16.msra.mxu0 %v721
        %739 = vmatprep.subr.bf16.mxu0 0
        %740 = vmatpush2.bf16.msra.mxu0 0
        %741 = vmatprep.subr.bf16.mxu0 0
        %742 = vmatpush2.bf16.msra.mxu0 0
        %743 = vmatprep.subr.bf16.mxu0 0
        %744 = vmatpush2.bf16.msra.mxu0 0
        %745 = vmatprep.subr.bf16.mxu0 0
        %746 = vmatpush2.bf16.msra.mxu0 0
        %747 = vmatprep.subr.bf16.mxu0 0
        %748 = vmatpush2.bf16.msra.mxu0 0
        %749 = vmatprep.subr.bf16.mxu0 0
        %750 = vmatpush2.bf16.msra.mxu0 0
        %751 = vmatprep.subr.bf16.mxu0 0
        %752 = vmatpush2.bf16.msra.mxu0 0
        %753 = vmatprep.subr.bf16.mxu0 0
        %754 = vmatpush2.bf16.msra.mxu0 0
        %755 = vmatprep.mubr.bf16.mxu0 0
        %756 = vmatmul.mubr.bf16.gmra.mxu0 %v709
        %v757 = vpop.f32.mrf.mxu0
        %v758 = vadd.f32 0.0, %v757
        %v759 = vpop.f32.mrf.mxu0
        %v760 = vpop.f32.mrf.mxu0
        %v761 = vadd.f32 0.0, %v760
        %v762 = vpop.f32.mrf.mxu0
        %763 = vmatprep.mubr.bf16.mxu0 0
        %764 = vmatmul.mubr.bf16.gmra.mxu0 %v712
        %v765 = vpop.f32.mrf.mxu0
        %v766 = vadd.f32 0.0, %v765
        %v767 = vpop.f32.mrf.mxu0
        %v768 = vpop.f32.mrf.mxu0
        %v769 = vadd.f32 0.0, %v768
        %v770 = vpop.f32.mrf.mxu0
        %771 = vmatprep.mubr.bf16.mxu0 0
        %772 = vmatmul.mubr.bf16.gmra.mxu0 %v715
        %v773 = vpop.f32.mrf.mxu0
        %v774 = vadd.f32 0.0, %v773
        %v775 = vpop.f32.mrf.mxu0
        %v776 = vpop.f32.mrf.mxu0
        %v777 = vadd.f32 0.0, %v776
        %v778 = vpop.f32.mrf.mxu0
        %779 = vmatprep.mubr.bf16.mxu0 0
        %780 = vmatmul.mubr.bf16.gmra.mxu0 %v718
        %v781 = vpop.f32.mrf.mxu0
        %v782 = vadd.f32 0.0, %v781
        %v783 = vpop.f32.mrf.mxu0
        %v784 = vpop.f32.mrf.mxu0
        %v785 = vadd.f32 0.0, %v784
        %v786 = vpop.f32.mrf.mxu0
        %787 = vdwg.mxu0
        %v788 = vadd.f32 %v692, %v758
        %v789 = vadd.f32 %v693, %v761
        %v790 = vadd.f32 %v694, %v766
        %v791 = vadd.f32 %v695, %v769
        %v792 = vadd.f32 %v696, %v774
        %v793 = vadd.f32 %v697, %v777
        %v794 = vadd.f32 %v698, %v782
        %v795 = vadd.f32 %v699, %v785
        %v797 = vshrl.u32 %v239, 16
        %v799 = vrot.slane %v797, 4
        %v800 = vshll.u32 %v239, 16
        %v802 = vrot.slane %v800, 5
        %v803 = vor.u32 %v799, %v802
        %v804 = vrot.slane %v803, 4
        %v806 = vshll.u32 %v240, 16
        %v808 = vrot.slane %v806, 5
        %v809 = vsel %vm246, %v804, %v808
        %s810 = scalar_lea.vmem %s1, 16
        %v811 = vld [vmem:[%s810] sm:$0xf]
        %v812 = vunpack.c.l.b16 %v809
        %v813 = vpack.c.b16 %v363, %v362
        %v814 = vpack.c.b16 %v365, %v364
        %v815 = vpack.c.b16 %v367, %v366
        %v816 = vpack.c.b16 %v812, %v368
        %v818 = vsel %vm373, %v813, 0
        %v821 = vsel %vm373, %v814, 0
        %v824 = vsel %vm373, %v815, 0
        %v827 = vsel %vm373, %v816, 0
        %v830 = vsel %vm386, %v811, 0
        %832 = vmatprep.subr.bf16.mxu0 0
        %833 = vmatpush1.bf16.msra.mxu0 0
        %834 = vmatprep.subr.bf16.mxu0 0
        %835 = vmatpush1.bf16.msra.mxu0 0
        %836 = vmatprep.subr.bf16.mxu0 0
        %837 = vmatpush1.bf16.msra.mxu0 0
        %838 = vmatprep.subr.bf16.mxu0 0
        %839 = vmatpush1.bf16.msra.mxu0 0
        %840 = vmatprep.subr.bf16.mxu0 0
        %841 = vmatpush1.bf16.msra.mxu0 0
        %842 = vmatprep.subr.bf16.mxu0 0
        %843 = vmatpush1.bf16.msra.mxu0 0
        %844 = vmatprep.subr.bf16.mxu0 0
        %845 = vmatpush1.bf16.msra.mxu0 0
        %846 = vmatprep.subr.bf16.mxu0 0
        %847 = vmatpush1.bf16.msra.mxu0 %v830
        %848 = vmatprep.subr.bf16.mxu0 0
        %849 = vmatpush2.bf16.msra.mxu0 0
        %850 = vmatprep.subr.bf16.mxu0 0
        %851 = vmatpush2.bf16.msra.mxu0 0
        %852 = vmatprep.subr.bf16.mxu0 0
        %853 = vmatpush2.bf16.msra.mxu0 0
        %854 = vmatprep.subr.bf16.mxu0 0
        %855 = vmatpush2.bf16.msra.mxu0 0
        %856 = vmatprep.subr.bf16.mxu0 0
        %857 = vmatpush2.bf16.msra.mxu0 0
        %858 = vmatprep.subr.bf16.mxu0 0
        %859 = vmatpush2.bf16.msra.mxu0 0
        %860 = vmatprep.subr.bf16.mxu0 0
        %861 = vmatpush2.bf16.msra.mxu0 0
        %862 = vmatprep.subr.bf16.mxu0 0
        %863 = vmatpush2.bf16.msra.mxu0 0
        %864 = vmatprep.mubr.bf16.mxu0 0
        %865 = vmatmul.mubr.bf16.gmra.mxu0 %v818
        %v866 = vpop.f32.mrf.mxu0
        %v867 = vadd.f32 0.0, %v866
        %v868 = vpop.f32.mrf.mxu0
        %v869 = vpop.f32.mrf.mxu0
        %v870 = vadd.f32 0.0, %v869
        %v871 = vpop.f32.mrf.mxu0
        %872 = vmatprep.mubr.bf16.mxu0 0
        %873 = vmatmul.mubr.bf16.gmra.mxu0 %v821
        %v874 = vpop.f32.mrf.mxu0
        %v875 = vadd.f32 0.0, %v874
        %v876 = vpop.f32.mrf.mxu0
        %v877 = vpop.f32.mrf.mxu0
        %v878 = vadd.f32 0.0, %v877
        %v879 = vpop.f32.mrf.mxu0
        %880 = vmatprep.mubr.bf16.mxu0 0
        %881 = vmatmul.mubr.bf16.gmra.mxu0 %v824
        %v882 = vpop.f32.mrf.mxu0
        %v883 = vadd.f32 0.0, %v882
        %v884 = vpop.f32.mrf.mxu0
        %v885 = vpop.f32.mrf.mxu0
        %v886 = vadd.f32 0.0, %v885
        %v887 = vpop.f32.mrf.mxu0
        %888 = vmatprep.mubr.bf16.mxu0 0
        %889 = vmatmul.mubr.bf16.gmra.mxu0 %v827
        %v890 = vpop.f32.mrf.mxu0
        %v891 = vadd.f32 0.0, %v890
        %v892 = vpop.f32.mrf.mxu0
        %v893 = vpop.f32.mrf.mxu0
        %v894 = vadd.f32 0.0, %v893
        %v895 = vpop.f32.mrf.mxu0
        %896 = vdwg.mxu0
        %v897 = vadd.f32 %v788, %v867
        %v898 = vadd.f32 %v789, %v870
        %v899 = vadd.f32 %v790, %v875
        %v900 = vadd.f32 %v791, %v878
        %v901 = vadd.f32 %v792, %v883
        %v902 = vadd.f32 %v793, %v886
        %v903 = vadd.f32 %v794, %v891
        %v904 = vadd.f32 %v795, %v894
        %v906 = vrot.slane %v239, 5
        %v907 = vrot.slane %v906, 4
        %v908 = vrot.slane %v240, 5
        %v909 = vsel %vm565, %v907, %v908
        %s910 = scalar_lea.vmem %s1, 20
        %v911 = vld [vmem:[%s910] sm:$0xf]
        %v912 = vunpack.c.l.b16 %v909
        %v913 = vpack.c.b16 %v602, %v601
        %v914 = vpack.c.b16 %v604, %v603
        %v915 = vpack.c.b16 %v606, %v605
        %v916 = vpack.c.b16 %v912, %v607
        %v918 = vsel %vm373, %v913, 0
        %v921 = vsel %vm373, %v914, 0
        %v924 = vsel %vm373, %v915, 0
        %v927 = vsel %vm373, %v916, 0
        %v930 = vsel %vm386, %v911, 0
        %932 = vmatprep.subr.bf16.mxu0 0
        %933 = vmatpush1.bf16.msra.mxu0 0
        %934 = vmatprep.subr.bf16.mxu0 0
        %935 = vmatpush1.bf16.msra.mxu0 0
        %936 = vmatprep.subr.bf16.mxu0 0
        %937 = vmatpush1.bf16.msra.mxu0 0
        %938 = vmatprep.subr.bf16.mxu0 0
        %939 = vmatpush1.bf16.msra.mxu0 0
        %940 = vmatprep.subr.bf16.mxu0 0
        %941 = vmatpush1.bf16.msra.mxu0 0
        %942 = vmatprep.subr.bf16.mxu0 0
        %943 = vmatpush1.bf16.msra.mxu0 0
        %944 = vmatprep.subr.bf16.mxu0 0
        %945 = vmatpush1.bf16.msra.mxu0 0
        %946 = vmatprep.subr.bf16.mxu0 0
        %947 = vmatpush1.bf16.msra.mxu0 %v930
        %948 = vmatprep.subr.bf16.mxu0 0
        %949 = vmatpush2.bf16.msra.mxu0 0
        %950 = vmatprep.subr.bf16.mxu0 0
        %951 = vmatpush2.bf16.msra.mxu0 0
        %952 = vmatprep.subr.bf16.mxu0 0
        %953 = vmatpush2.bf16.msra.mxu0 0
        %954 = vmatprep.subr.bf16.mxu0 0
        %955 = vmatpush2.bf16.msra.mxu0 0
        %956 = vmatprep.subr.bf16.mxu0 0
        %957 = vmatpush2.bf16.msra.mxu0 0
        %958 = vmatprep.subr.bf16.mxu0 0
        %959 = vmatpush2.bf16.msra.mxu0 0
        %960 = vmatprep.subr.bf16.mxu0 0
        %961 = vmatpush2.bf16.msra.mxu0 0
        %962 = vmatprep.subr.bf16.mxu0 0
        %963 = vmatpush2.bf16.msra.mxu0 0
        %964 = vmatprep.mubr.bf16.mxu0 0
        %965 = vmatmul.mubr.bf16.gmra.mxu0 %v918
        %v966 = vpop.f32.mrf.mxu0
        %v967 = vadd.f32 0.0, %v966
        %v968 = vpop.f32.mrf.mxu0
        %v969 = vpop.f32.mrf.mxu0
        %v970 = vadd.f32 0.0, %v969
        %v971 = vpop.f32.mrf.mxu0
        %972 = vmatprep.mubr.bf16.mxu0 0
        %973 = vmatmul.mubr.bf16.gmra.mxu0 %v921
        %v974 = vpop.f32.mrf.mxu0
        %v975 = vadd.f32 0.0, %v974
        %v976 = vpop.f32.mrf.mxu0
        %v977 = vpop.f32.mrf.mxu0
        %v978 = vadd.f32 0.0, %v977
        %v979 = vpop.f32.mrf.mxu0
        %980 = vmatprep.mubr.bf16.mxu0 0
        %981 = vmatmul.mubr.bf16.gmra.mxu0 %v924
        %v982 = vpop.f32.mrf.mxu0
        %v983 = vadd.f32 0.0, %v982
        %v984 = vpop.f32.mrf.mxu0
        %v985 = vpop.f32.mrf.mxu0
        %v986 = vadd.f32 0.0, %v985
        %v987 = vpop.f32.mrf.mxu0
        %988 = vmatprep.mubr.bf16.mxu0 0
        %989 = vmatmul.mubr.bf16.gmra.mxu0 %v927
        %v990 = vpop.f32.mrf.mxu0
        %v991 = vadd.f32 0.0, %v990
        %v992 = vpop.f32.mrf.mxu0
        %v993 = vpop.f32.mrf.mxu0
        %v994 = vadd.f32 0.0, %v993
        %v995 = vpop.f32.mrf.mxu0
        %996 = vdwg.mxu0
        %v997 = vadd.f32 %v897, %v967
        %v998 = vadd.f32 %v898, %v970
        %v999 = vadd.f32 %v899, %v975
        %v1000 = vadd.f32 %v900, %v978
        %v1001 = vadd.f32 %v901, %v983
        %v1002 = vadd.f32 %v902, %v986
        %v1003 = vadd.f32 %v903, %v991
        %v1004 = vadd.f32 %v904, %v994
        %s1005 = scalar_lea.vmem %s1, 24
        %v1006 = vld [vmem:[%s1005] sm:$0xf]
        %v1008 = vunpack.c.l.b16 %v241
        %v1009 = vpack.c.b16 %v1008, %v703
        %v1011 = vsel %vm373, %v1009, 0
        %v1014 = vsel %vm386, %v1006, 0
        %1016 = vmatprep.subr.bf16.mxu0 0
        %1017 = vmatpush1.bf16.msra.mxu0 0
        %1018 = vmatprep.subr.bf16.mxu0 0
        %1019 = vmatpush1.bf16.msra.mxu0 0
        %1020 = vmatprep.subr.bf16.mxu0 0
        %1021 = vmatpush1.bf16.msra.mxu0 0
        %1022 = vmatprep.subr.bf16.mxu0 0
        %1023 = vmatpush1.bf16.msra.mxu0 0
        %1024 = vmatprep.subr.bf16.mxu0 0
        %1025 = vmatpush1.bf16.msra.mxu0 0
        %1026 = vmatprep.subr.bf16.mxu0 0
        %1027 = vmatpush1.bf16.msra.mxu0 0
        %1028 = vmatprep.subr.bf16.mxu0 0
        %1029 = vmatpush1.bf16.msra.mxu0 0
        %1030 = vmatprep.subr.bf16.mxu0 0
        %1031 = vmatpush1.bf16.msra.mxu0 %v1014
        %1032 = vmatprep.subr.bf16.mxu0 0
        %1033 = vmatpush2.bf16.msra.mxu0 0
        %1034 = vmatprep.subr.bf16.mxu0 0
        %1035 = vmatpush2.bf16.msra.mxu0 0
        %1036 = vmatprep.subr.bf16.mxu0 0
        %1037 = vmatpush2.bf16.msra.mxu0 0
        %1038 = vmatprep.subr.bf16.mxu0 0
        %1039 = vmatpush2.bf16.msra.mxu0 0
        %1040 = vmatprep.subr.bf16.mxu0 0
        %1041 = vmatpush2.bf16.msra.mxu0 0
        %1042 = vmatprep.subr.bf16.mxu0 0
        %1043 = vmatpush2.bf16.msra.mxu0 0
        %1044 = vmatprep.subr.bf16.mxu0 0
        %1045 = vmatpush2.bf16.msra.mxu0 0
        %1046 = vmatprep.subr.bf16.mxu0 0
        %1047 = vmatpush2.bf16.msra.mxu0 0
        %1048 = vmatprep.mubr.bf16.mxu0 0
        %1049 = vmatmul.mubr.bf16.gmra.mxu0 %v479
        %v1050 = vpop.f32.mrf.mxu0
        %v1051 = vadd.f32 0.0, %v1050
        %v1052 = vpop.f32.mrf.mxu0
        %v1053 = vpop.f32.mrf.mxu0
        %v1054 = vadd.f32 0.0, %v1053
        %v1055 = vpop.f32.mrf.mxu0
        %1056 = vmatprep.mubr.bf16.mxu0 0
        %1057 = vmatmul.mubr.bf16.gmra.mxu0 %v482
        %v1058 = vpop.f32.mrf.mxu0
        %v1059 = vadd.f32 0.0, %v1058
        %v1060 = vpop.f32.mrf.mxu0
        %v1061 = vpop.f32.mrf.mxu0
        %v1062 = vadd.f32 0.0, %v1061
        %v1063 = vpop.f32.mrf.mxu0
        %1064 = vmatprep.mubr.bf16.mxu0 0
        %1065 = vmatmul.mubr.bf16.gmra.mxu0 %v485
        %v1066 = vpop.f32.mrf.mxu0
        %v1067 = vadd.f32 0.0, %v1066
        %v1068 = vpop.f32.mrf.mxu0
        %v1069 = vpop.f32.mrf.mxu0
        %v1070 = vadd.f32 0.0, %v1069
        %v1071 = vpop.f32.mrf.mxu0
        %1072 = vmatprep.mubr.bf16.mxu0 0
        %1073 = vmatmul.mubr.bf16.gmra.mxu0 %v1011
        %v1074 = vpop.f32.mrf.mxu0
        %v1075 = vadd.f32 0.0, %v1074
        %v1076 = vpop.f32.mrf.mxu0
        %v1077 = vpop.f32.mrf.mxu0
        %v1078 = vadd.f32 0.0, %v1077
        %v1079 = vpop.f32.mrf.mxu0
        %1080 = vdwg.mxu0
        %v1081 = vadd.f32 %v997, %v1051
        %v1082 = vadd.f32 %v998, %v1054
        %v1083 = vadd.f32 %v999, %v1059
        %v1084 = vadd.f32 %v1000, %v1062
        %v1085 = vadd.f32 %v1001, %v1067
        %v1086 = vadd.f32 %v1002, %v1070
        %v1087 = vadd.f32 %v1003, %v1075
        %v1088 = vadd.f32 %v1004, %v1078
        %v1090 = vshrl.u32 %v241, 16
        %v1092 = vrot.slane %v1090, 4
        %v1093 = vshll.u32 %v241, 16
        %v1095 = vrot.slane %v1093, 5
        %v1096 = vor.u32 %v1092, %v1095
        %v1097 = vrot.slane %v1096, 4
        %v1099 = vshll.u32 %v242, 16
        %v1101 = vrot.slane %v1099, 5
        %v1102 = vsel %vm246, %v1097, %v1101
        %s1103 = scalar_lea.vmem %s1, 28
        %v1104 = vld [vmem:[%s1103] sm:$0xf]
        %v1105 = vunpack.c.l.b16 %v1102
        %v1106 = vpack.c.b16 %v1105, %v812
        %v1108 = vsel %vm373, %v1106, 0
        %v1111 = vsel %vm386, %v1104, 0
        %1113 = vmatprep.subr.bf16.mxu0 0
        %1114 = vmatpush1.bf16.msra.mxu0 0
        %1115 = vmatprep.subr.bf16.mxu0 0
        %1116 = vmatpush1.bf16.msra.mxu0 0
        %1117 = vmatprep.subr.bf16.mxu0 0
        %1118 = vmatpush1.bf16.msra.mxu0 0
        %1119 = vmatprep.subr.bf16.mxu0 0
        %1120 = vmatpush1.bf16.msra.mxu0 0
        %1121 = vmatprep.subr.bf16.mxu0 0
        %1122 = vmatpush1.bf16.msra.mxu0 0
        %1123 = vmatprep.subr.bf16.mxu0 0
        %1124 = vmatpush1.bf16.msra.mxu0 0
        %1125 = vmatprep.subr.bf16.mxu0 0
        %1126 = vmatpush1.bf16.msra.mxu0 0
        %1127 = vmatprep.subr.bf16.mxu0 0
        %1128 = vmatpush1.bf16.msra.mxu0 %v1111
        %1129 = vmatprep.subr.bf16.mxu0 0
        %1130 = vmatpush2.bf16.msra.mxu0 0
        %1131 = vmatprep.subr.bf16.mxu0 0
        %1132 = vmatpush2.bf16.msra.mxu0 0
        %1133 = vmatprep.subr.bf16.mxu0 0
        %1134 = vmatpush2.bf16.msra.mxu0 0
        %1135 = vmatprep.subr.bf16.mxu0 0
        %1136 = vmatpush2.bf16.msra.mxu0 0
        %1137 = vmatprep.subr.bf16.mxu0 0
        %1138 = vmatpush2.bf16.msra.mxu0 0
        %1139 = vmatprep.subr.bf16.mxu0 0
        %1140 = vmatpush2.bf16.msra.mxu0 0
        %1141 = vmatprep.subr.bf16.mxu0 0
        %1142 = vmatpush2.bf16.msra.mxu0 0
        %1143 = vmatprep.subr.bf16.mxu0 0
        %1144 = vmatpush2.bf16.msra.mxu0 0
        %1145 = vmatprep.mubr.bf16.mxu0 0
        %1146 = vmatmul.mubr.bf16.gmra.mxu0 %v378
        %v1147 = vpop.f32.mrf.mxu0
        %v1148 = vadd.f32 0.0, %v1147
        %v1149 = vpop.f32.mrf.mxu0
        %v1150 = vpop.f32.mrf.mxu0
        %v1151 = vadd.f32 0.0, %v1150
        %v1152 = vpop.f32.mrf.mxu0
        %1153 = vmatprep.mubr.bf16.mxu0 0
        %1154 = vmatmul.mubr.bf16.gmra.mxu0 %v381
        %v1155 = vpop.f32.mrf.mxu0
        %v1156 = vadd.f32 0.0, %v1155
        %v1157 = vpop.f32.mrf.mxu0
        %v1158 = vpop.f32.mrf.mxu0
        %v1159 = vadd.f32 0.0, %v1158
        %v1160 = vpop.f32.mrf.mxu0
        %1161 = vmatprep.mubr.bf16.mxu0 0
        %1162 = vmatmul.mubr.bf16.gmra.mxu0 %v384
        %v1163 = vpop.f32.mrf.mxu0
        %v1164 = vadd.f32 0.0, %v1163
        %v1165 = vpop.f32.mrf.mxu0
        %v1166 = vpop.f32.mrf.mxu0
        %v1167 = vadd.f32 0.0, %v1166
        %v1168 = vpop.f32.mrf.mxu0
        %1169 = vmatprep.mubr.bf16.mxu0 0
        %1170 = vmatmul.mubr.bf16.gmra.mxu0 %v1108
        %v1171 = vpop.f32.mrf.mxu0
        %v1172 = vadd.f32 0.0, %v1171
        %v1173 = vpop.f32.mrf.mxu0
        %v1174 = vpop.f32.mrf.mxu0
        %v1175 = vadd.f32 0.0, %v1174
        %v1176 = vpop.f32.mrf.mxu0
        %1177 = vdwg.mxu0
        %v1178 = vadd.f32 %v1081, %v1148
        %v1179 = vadd.f32 %v1082, %v1151
        %v1180 = vadd.f32 %v1083, %v1156
        %v1181 = vadd.f32 %v1084, %v1159
        %v1182 = vadd.f32 %v1085, %v1164
        %v1183 = vadd.f32 %v1086, %v1167
        %v1184 = vadd.f32 %v1087, %v1172
        %v1185 = vadd.f32 %v1088, %v1175
        %v1187 = vrot.slane %v241, 5
        %v1188 = vrot.slane %v1187, 4
        %v1189 = vrot.slane %v242, 5
        %v1190 = vsel %vm565, %v1188, %v1189
        %s1191 = scalar_lea.vmem %s1, 32
        %v1192 = vld [vmem:[%s1191] sm:$0xf]
        %v1193 = vunpack.c.l.b16 %v1190
        %v1194 = vpack.c.b16 %v1193, %v912
        %v1196 = vsel %vm373, %v1194, 0
        %v1199 = vsel %vm386, %v1192, 0
        %1201 = vmatprep.subr.bf16.mxu0 0
        %1202 = vmatpush1.bf16.msra.mxu0 0
        %1203 = vmatprep.subr.bf16.mxu0 0
        %1204 = vmatpush1.bf16.msra.mxu0 0
        %1205 = vmatprep.subr.bf16.mxu0 0
        %1206 = vmatpush1.bf16.msra.mxu0 0
        %1207 = vmatprep.subr.bf16.mxu0 0
        %1208 = vmatpush1.bf16.msra.mxu0 0
        %1209 = vmatprep.subr.bf16.mxu0 0
        %1210 = vmatpush1.bf16.msra.mxu0 0
        %1211 = vmatprep.subr.bf16.mxu0 0
        %1212 = vmatpush1.bf16.msra.mxu0 0
        %1213 = vmatprep.subr.bf16.mxu0 0
        %1214 = vmatpush1.bf16.msra.mxu0 0
        %1215 = vmatprep.subr.bf16.mxu0 0
        %1216 = vmatpush1.bf16.msra.mxu0 %v1199
        %1217 = vmatprep.subr.bf16.mxu0 0
        %1218 = vmatpush2.bf16.msra.mxu0 0
        %1219 = vmatprep.subr.bf16.mxu0 0
        %1220 = vmatpush2.bf16.msra.mxu0 0
        %1221 = vmatprep.subr.bf16.mxu0 0
        %1222 = vmatpush2.bf16.msra.mxu0 0
        %1223 = vmatprep.subr.bf16.mxu0 0
        %1224 = vmatpush2.bf16.msra.mxu0 0
        %1225 = vmatprep.subr.bf16.mxu0 0
        %1226 = vmatpush2.bf16.msra.mxu0 0
        %1227 = vmatprep.subr.bf16.mxu0 0
        %1228 = vmatpush2.bf16.msra.mxu0 0
        %1229 = vmatprep.subr.bf16.mxu0 0
        %1230 = vmatpush2.bf16.msra.mxu0 0
        %1231 = vmatprep.subr.bf16.mxu0 0
        %1232 = vmatpush2.bf16.msra.mxu0 0
        %1233 = vmatprep.mubr.bf16.mxu0 0
        %1234 = vmatmul.mubr.bf16.gmra.mxu0 %v616
        %v1235 = vpop.f32.mrf.mxu0
        %v1236 = vadd.f32 0.0, %v1235
        %v1237 = vpop.f32.mrf.mxu0
        %v1238 = vpop.f32.mrf.mxu0
        %v1239 = vadd.f32 0.0, %v1238
        %v1240 = vpop.f32.mrf.mxu0
        %1241 = vmatprep.mubr.bf16.mxu0 0
        %1242 = vmatmul.mubr.bf16.gmra.mxu0 %v619
        %v1243 = vpop.f32.mrf.mxu0
        %v1244 = vadd.f32 0.0, %v1243
        %v1245 = vpop.f32.mrf.mxu0
        %v1246 = vpop.f32.mrf.mxu0
        %v1247 = vadd.f32 0.0, %v1246
        %v1248 = vpop.f32.mrf.mxu0
        %1249 = vmatprep.mubr.bf16.mxu0 0
        %1250 = vmatmul.mubr.bf16.gmra.mxu0 %v622
        %v1251 = vpop.f32.mrf.mxu0
        %v1252 = vadd.f32 0.0, %v1251
        %v1253 = vpop.f32.mrf.mxu0
        %v1254 = vpop.f32.mrf.mxu0
        %v1255 = vadd.f32 0.0, %v1254
        %v1256 = vpop.f32.mrf.mxu0
        %1257 = vmatprep.mubr.bf16.mxu0 0
        %1258 = vmatmul.mubr.bf16.gmra.mxu0 %v1196
        %v1259 = vpop.f32.mrf.mxu0
        %v1260 = vadd.f32 0.0, %v1259
        %v1261 = vpop.f32.mrf.mxu0
        %v1262 = vpop.f32.mrf.mxu0
        %v1263 = vadd.f32 0.0, %v1262
        %v1264 = vpop.f32.mrf.mxu0
        %1265 = vdwg.mxu0
        %v1266 = vadd.f32 %v1178, %v1236
        %v1267 = vadd.f32 %v1179, %v1239
        %v1268 = vadd.f32 %v1180, %v1244
        %v1269 = vadd.f32 %v1181, %v1247
        %v1270 = vadd.f32 %v1182, %v1252
        %v1271 = vadd.f32 %v1183, %v1255
        %v1272 = vadd.f32 %v1184, %v1260
        %v1273 = vadd.f32 %v1185, %v1263
        %v1274 = vld [vmem:[%s2] sm:$0x1]
        %v1276 = vlaneseq
        %v1277 = vshrl.u32 %v1276, 7
        %v1278 = vsub.s32 0, %v1277
        %v1279 = vrot.slane %v1274, %v1278
        %v1281 = vadd.f32 %v1266, %v1279
        %v1282 = vadd.f32 %v1267, %v1279
        %v1283 = vadd.f32 %v1268, %v1279
        %v1284 = vadd.f32 %v1269, %v1279
        %v1285 = vadd.f32 %v1270, %v1279
        %v1286 = vadd.f32 %v1271, %v1279
        %v1287 = vadd.f32 %v1272, %v1279
        %v1288 = vadd.f32 %v1273, %v1279
        %v1289 = vmax.f32 %v1281, 0.0
        %v1290 = vmax.f32 %v1282, 0.0
        %v1291 = vmax.f32 %v1283, 0.0
        %v1292 = vmax.f32 %v1284, 0.0
        %v1293 = vmax.f32 %v1285, 0.0
        %v1294 = vmax.f32 %v1286, 0.0
        %v1295 = vmax.f32 %v1287, 0.0
        %v1296 = vmax.f32 %v1288, 0.0
        %vm1297 = vcmask 31744
        %v1298 = vsel %vm1297, %v1289, 0.0
        %v1299 = vsel %vm1297, %v1290, 0.0
        %v1300 = vadd.f32 %v1298, %v1299
        %v1301 = vsel %vm1297, %v1291, 0.0
        %v1302 = vadd.f32 %v1300, %v1301
        %v1303 = vsel %vm1297, %v1292, 0.0
        %v1304 = vadd.f32 %v1302, %v1303
        %v1305 = vsel %vm1297, %v1293, 0.0
        %v1306 = vadd.f32 %v1304, %v1305
        %v1307 = vsel %vm1297, %v1294, 0.0
        %v1308 = vadd.f32 %v1306, %v1307
        %v1309 = vsel %vm1297, %v1295, 0.0
        %v1310 = vadd.f32 %v1308, %v1309
        %v1311 = vsel %vm1297, %v1296, 0.0
        %v1312 = vadd.f32 %v1310, %v1311
        %v1313 = vrot.slane %v1312, 4
        %v1314 = vadd.f32 %v1312, %v1313
        %v1315 = vrot.slane %v1314, 2
        %v1316 = vadd.f32 %v1314, %v1315
        %v1317 = vrot.slane %v1316, 1
        %v1318 = vadd.f32 %v1316, %v1317
        %v1319 = vrcp.pop 64.0
        %v1320 = vmul.f32 %v1318, %v1319
        %v1321 = vld [vmem:[%s3] sm:$0xf]
        %v1322 = vld [vmem:[%s4] sm:$0x1]
        %v1324 = vsel %vm1297, %v1320, 0
        %v1327 = vsel %vm386, %v1321, 0
        %1329 = vmatprep.subr.mxu0 0.0
        %1330 = vmatpush1.msra.mxu0 0.0
        %1331 = vmatprep.subr.mxu0 0.0
        %1332 = vmatpush1.msra.mxu0 0.0
        %1333 = vmatprep.subr.mxu0 0.0
        %1334 = vmatpush1.msra.mxu0 0.0
        %1335 = vmatprep.subr.mxu0 0.0
        %1336 = vmatpush1.msra.mxu0 0.0
        %1337 = vmatprep.subr.mxu0 0.0
        %1338 = vmatpush1.msra.mxu0 0.0
        %1339 = vmatprep.subr.mxu0 0.0
        %1340 = vmatpush1.msra.mxu0 0.0
        %1341 = vmatprep.subr.mxu0 0.0
        %1342 = vmatpush1.msra.mxu0 0.0
        %1343 = vmatprep.subr.mxu0 0.0
        %1344 = vmatpush1.msra.mxu0 0.0
        %1345 = vmatprep.subr.mxu0 0.0
        %1346 = vmatpush1.msra.mxu0 0.0
        %1347 = vmatprep.subr.mxu0 0.0
        %1348 = vmatpush1.msra.mxu0 0.0
        %1349 = vmatprep.subr.mxu0 0.0
        %1350 = vmatpush1.msra.mxu0 0.0
        %1351 = vmatprep.subr.mxu0 0.0
        %1352 = vmatpush1.msra.mxu0 0.0
        %1353 = vmatprep.subr.mxu0 0.0
        %1354 = vmatpush1.msra.mxu0 0.0
        %1355 = vmatprep.subr.mxu0 0.0
        %1356 = vmatpush1.msra.mxu0 0.0
        %1357 = vmatprep.subr.mxu0 0.0
        %1358 = vmatpush1.msra.mxu0 0.0
        %1359 = vmatprep.subr.mxu0 0.0
        %1360 = vmatpush1.msra.mxu0 %v1327
        %1361 = vmatprep.subr.mxu0 0.0
        %1362 = vmatpush2.msra.mxu0 0.0
        %1363 = vmatprep.subr.mxu0 0.0
        %1364 = vmatpush2.msra.mxu0 0.0
        %1365 = vmatprep.subr.mxu0 0.0
        %1366 = vmatpush2.msra.mxu0 0.0
        %1367 = vmatprep.subr.mxu0 0.0
        %1368 = vmatpush2.msra.mxu0 0.0
        %1369 = vmatprep.subr.mxu0 0.0
        %1370 = vmatpush2.msra.mxu0 0.0
        %1371 = vmatprep.subr.mxu0 0.0
        %1372 = vmatpush2.msra.mxu0 0.0
        %1373 = vmatprep.subr.mxu0 0.0
        %1374 = vmatpush2.msra.mxu0 0.0
        %1375 = vmatprep.subr.mxu0 0.0
        %1376 = vmatpush2.msra.mxu0 0.0
        %1377 = vmatprep.subr.mxu0 0.0
        %1378 = vmatpush2.msra.mxu0 0.0
        %1379 = vmatprep.subr.mxu0 0.0
        %1380 = vmatpush2.msra.mxu0 0.0
        %1381 = vmatprep.subr.mxu0 0.0
        %1382 = vmatpush2.msra.mxu0 0.0
        %1383 = vmatprep.subr.mxu0 0.0
        %1384 = vmatpush2.msra.mxu0 0.0
        %1385 = vmatprep.subr.mxu0 0.0
        %1386 = vmatpush2.msra.mxu0 0.0
        %1387 = vmatprep.subr.mxu0 0.0
        %1388 = vmatpush2.msra.mxu0 0.0
        %1389 = vmatprep.subr.mxu0 0.0
        %1390 = vmatpush2.msra.mxu0 0.0
        %1391 = vmatprep.subr.mxu0 0.0
        %1392 = vmatpush2.msra.mxu0 0.0
        %1393 = vmatprep.mubr.f32.mxu0 0.0
        %1394 = vmatmul.mubr.f32.gmra.mxu0 %v1324
        %v1395 = vpop.f32.mrf.mxu0
        %v1396 = vadd.f32 %v1322, %v1395
        %v1397 = vpop.f32.mrf.mxu0
        %1398 = vdwg.mxu0
        %vm1399 = vcmask 16384
        %1400 = vst.msk [vmem:[%s216] sm:$0x1] %vm1399, %v1396
        %s1401 = sand.u32 %s137, 1
        %s1402 = scalar_lea.sflag [#allocation3], %s1401
        %s1403 = sand.u32 %s137, 1
        %s1404 = scalar_lea.vmem [#allocation2], %s1403
        // Predicated region
        $region41: #{discriminator_forward.7} parent=39 // pred_check
          %p1405 = pneg %p147
        $region42: #{discriminator_forward.7} parent=39 // pred_check_branch
          %1407 = sbr.rel (%p1405) target = $region44
        $region43: #{discriminator_forward.7} parent=39 // pred_region
          %s1409 = ssub.s32 16, 16
          %1410 = vsyncadd %s1402, %s1409
          %s1411 = smul.addr %s19, 16
          %s1412 = scalar_lea.hbm %s5, %s1411
          %s1414 = sshll.u32 %s1404, 4
          %s1415 = int_to_ptr.vmem [resolvable:$true] %s1414
          %1417 = dma.vmem_to_hbm [thread:$0]  %s1415, 16, %s1412, %s1402
        $region44: #{discriminator_forward.7} parent=39 // pred_fallthru
          _
      $region40: #{discriminator_forward.7} parent=5 // pred_fallthru
        _
      %p1418 = scmp.le.s32.totalorder 2, %s14
      // Predicated region
      $region45: #{discriminator_forward.7} parent=5 // pred_check
        %p1419 = pneg %p1418
      $region46: #{discriminator_forward.7} parent=5 // pred_check_branch
        %1421 = sbr.rel (%p1419) target = $region48
      $region47: #{discriminator_forward.7} parent=5 // pred_region
        %s1422 = ssub.s32 %s14, 2
        // Predicated region
        $region49: #{discriminator_forward.7} parent=47 // pred_check
          %p1423 = pneg %p153
        $region50: #{discriminator_forward.7} parent=47 // pred_check_branch
          %1425 = sbr.rel (%p1423) target = $region52
        $region51: #{discriminator_forward.7} parent=47 // pred_region
          %s1426 = sand.u32 %s138, 1
          %s1427 = scalar_lea.sflag [#allocation3], %s1426
          %s1428 = sand.u32 %s138, 1
          %s1429 = scalar_lea.vmem [#allocation2], %s1428
          %1430 = dma.done %s1427, 16
        $region52: #{discriminator_forward.7} parent=47 // pred_fallthru
          _
      $region48: #{discriminator_forward.7} parent=5 // pred_fallthru
        _
    $region6: #{discriminator_forward.7} parent=1 // loop_footer
      %s18 = sadd.s32 1, %s14
    $region7: #{discriminator_forward.7} parent=1 // loop_footer_branch
      %13 = sbr.rel target = $region3
    $region8: #{discriminator_forward.7} parent=1 // loop_exit
      _
    %1431 = vsyncpa [#allocation3], 1
    %s1432 = scalar_lea.sflag [#allocation3], 1
    %1433 = vsyncpa %s1432, 1

</llo_original>
